<compile_context>
chip_gen: v5e
topology: v5e:2x2
jax: 0.10.0
libtpu: 0.0.40
codegen_flags: <defaults>
</compile_context>

<pallas_src>
import numpy as np
import jax
import jax.numpy as jnp
from jax.experimental import pallas as pl
from jax.experimental.pallas import tpu as pltpu


# ---------------- architecture constants (fixed by the PyTorch module) ----------------

_CFGS = [(4, 1, 0), (4, 2, 1), (4, 2, 1), (4, 2, 1), (5, 1, 0)]   # (kernel, stride, pad)
_FINAL = 28          # the module keeps output[:, :, :28, :28]
_PAD_LANES = 128     # lane-dense width of the final layer's output columns


def _out_size(h, k, s, p):
    return (h - 1) * s - 2 * p + k


# ---------------- in-kernel building blocks ----------------

def _deconv_first(f, b_ref, a_ref, k, owc):
    """Layer 0 (H=W=1): one wide F@B_cat push, then k tiny row-scatter matmuls."""
    u = jnp.dot(f, b_ref[...], preferred_element_type=jnp.float32)        # [N, k*owc]
    out = None
    for ky in range(k):
        a = a_ref[ky].astype(jnp.float32)                                  # [N*OH, N]
        t = jnp.dot(a, u[:, ky * owc:(ky + 1) * owc],
                    preferred_element_type=jnp.float32)
        out = t if out is None else out + t
    return out


def _deconv(f, b_ref, a_ref, stack_ref, k, owc):
    """ConvTranspose2d as A_cat @ stack_ky(F @ B_cat): 2 MXU pushes + one VMEM restack."""
    nh = f.shape[0]
    u = jnp.dot(f, b_ref[...], preferred_element_type=jnp.float32)        # [nh, k*owc]
    for ky in range(k):                                                    # 128-aligned slices
        stack_ref[ky * nh:(ky + 1) * nh, :owc] = u[:, ky * owc:(ky + 1) * owc]
    a = a_ref[...].astype(jnp.float32)                                     # [N*OH, k*nh]
    return jnp.dot(a, stack_ref[:k * nh, :owc], preferred_element_type=jnp.float32)


def _bn_elu(y, gb_ref, cout, inv_nhw):
    """BatchNorm2d (batch stats, eps=1e-5) + ELU on a [(n,h), (w,c)] tile.

    The per-channel pooling over width is a log2(W) XLU roll butterfly on the [2, W*C]
    row-reduced stats; after the butterfly every lane already holds its channel's total,
    i.e. pooling AND broadcast-back happen at once (no pooling matmuls, no K operand).
    """
    wc = y.shape[1]
    rs = jnp.sum(y, axis=0, keepdims=True)
    rs2 = jnp.sum(y * y, axis=0, keepdims=True)
    stats = jnp.concatenate([rs, rs2], axis=0)                             # [2, W*C]
    step = cout
    while step < wc:                                                       # W is a power of two
        stats = stats + pltpu.roll(stats, shift=step, axis=1)
        step *= 2
    mean = stats[0:1] * inv_nhw
    var = jnp.maximum(stats[1:2] * inv_nhw - mean * mean, 0.0)             # one-pass stats
    scale = gb_ref[0:1] * jax.lax.rsqrt(var + 1e-5)                        # gb pre-tiled [2, W*C]
    shift = gb_ref[1:2] - mean * scale
    yh = y * scale + shift
    # TODO(synk): jnp.expm1 would match PyTorch ELU to the ULP; exp(x)-1 kept for
    # guaranteed Mosaic lowering (difference is a few ULPs near 0-).
    return jnp.where(yh > 0.0, yh, jnp.exp(yh) - 1.0)


def _vmem():
    return pl.BlockSpec(memory_space=pltpu.MemorySpace.VMEM)


def _hbm():
    return pl.BlockSpec(memory_space=pl.ANY)


# ---------------- fused forward ----------------

def generator_forward(plan, noise_nchw):
    """plan: tuple from build_plan; noise: [N, noise_dim, 1, 1] -> [N, 1, 28, 28]."""
    a0, b0, gb0, a1, gb1, a2, gb2, a3, gb3, a4, b1, b2, b3, b4 = plan
    n = noise_nchw.shape[0]
    x2d = noise_nchw.reshape(n, -1).astype(jnp.float32)                    # [(n,y=0),(x=0,cin)]

    # Static per-layer geometry (architecture is fixed; batch comes from the input shape).
    ks = [c[0] for c in _CFGS]
    h_ins, ohs, h = [], [], 1
    for li, (k, s, p) in enumerate(_CFGS):
        h_ins.append(h)
        h = _FINAL if li == 4 else _out_size(h, k, s, p)
        ohs.append(h)
    bcats = (b0, b1, b2, b3, b4)
    owcs = [bc.shape[1] // k for bc, k in zip(bcats, ks)]                  # OW*Cout per layer
    couts = [owcs[i] // ohs[i] for i in range(4)]                          # BN layers only
    invs = [1.0 / (n * ohs[i] * ohs[i]) for i in range(4)]                 # 1/(N*OH*OW)
    stack_rows = max(ks[i] * n * h_ins[i] for i in range(1, 5))
    stack_cols = max(owcs[1:])
    out_rows, out_cols = n * _FINAL, owcs[4]

    def kernel(x_ref, a0_ref, b0_ref, gb0_ref,
               a1_ref, gb1_ref, a2_ref, gb2_ref, a3_ref, gb3_ref, a4_ref,
               b1_hbm, b2_hbm, b3_hbm, b4_hbm,
               o_ref,
               stack_ref, w1_ref, w2_ref, w3_ref, w4_ref, sem_ref):
        hbm = (b1_hbm, b2_hbm, b3_hbm, b4_hbm)
        wbuf = (w1_ref, w2_ref, w3_ref, w4_ref)
        # Prefetch all four big weight matrices now; the DMAs overlap layers 0..3 compute.
        cps = []
        for i in range(4):
            cp = pltpu.make_async_copy(hbm[i], wbuf[i], sem_ref.at[i])
            cp.start()
            cps.append(cp)

        # ---- layer 0: deconv + BN + ELU (B_cat0 is tiny and auto-DMA'd to VMEM) ----
        f = x_ref[...]
        f = _bn_elu(_deconv_first(f, b0_ref, a0_ref, ks[0], owcs[0]),
                    gb0_ref, couts[0], invs[0])

        # ---- layers 1..3: deconv + BN + ELU ----
        a_refs = (a1_ref, a2_ref, a3_ref)
        gb_refs = (gb1_ref, gb2_ref, gb3_ref)
        for li in (1, 2, 3):
            cps[li - 1].wait()
            y = _deconv(f, wbuf[li - 1], a_refs[li - 1], stack_ref, ks[li], owcs[li])
            f = _bn_elu(y, gb_refs[li - 1], couts[li], invs[li])

        # ---- layer 4: deconv (28x28 window, lane-padded to 128 cols) + Tanh ----
        cps[3].wait()
        y = _deconv(f, wbuf[3], a4_ref, stack_ref, ks[4], owcs[4])
        o_ref[...] = jnp.tanh(y)

    out2d = pl.pallas_call(
        kernel,
        out_shape=jax.ShapeDtypeStruct((out_rows, out_cols), jnp.float32),
        in_specs=[_vmem() for _ in range(11)] + [_hbm() for _ in range(4)],
        out_specs=_vmem(),
        scratch_shapes=[
            pltpu.VMEM((stack_rows, stack_cols), jnp.float32),   # per-tap restack buffer
            pltpu.VMEM(tuple(b1.shape), jnp.float32),            # prefetched B_cat layer 1
            pltpu.VMEM(tuple(b2.shape), jnp.float32),            # layer 2
            pltpu.VMEM(tuple(b3.shape), jnp.float32),            # layer 3
            pltpu.VMEM(tuple(b4.shape), jnp.float32),            # layer 4
            pltpu.SemaphoreType.DMA((4,)),
        ],
        compiler_params=pltpu.CompilerParams(vmem_limit_bytes=32 * 1024 * 1024),
    )(x2d, a0, b0, gb0, a1, gb1, a2, gb2, a3, gb3, a4, b1, b2, b3, b4)

    out = out2d[:, :_FINAL].reshape(n, _FINAL, _FINAL)
    return out[:, None, :, :]                                              # NCHW [N, 1, 28, 28]


# ---------------- init-time preparation (all layout transforms hoisted here) ----------------

def _build_A_taps(n, h, oh, k, s, p):
    """A[ky, (n, oy), (n, iy)] = 1 iff oy == iy*s - p + ky (block-diagonal over the batch)."""
    a = np.zeros((k, n * oh, n * h), np.float32)
    for ky in range(k):
        for iy in range(h):
            oy = iy * s - p + ky
            if 0 <= oy < oh:
                for b in range(n):
                    a[ky, b * oh + oy, b * h + iy] = 1.0
    return a


def _build_B_cat(w, win, ow, k, s, p, ow_pad):
    """B_cat[(ix, cin), (ky, ox, cout)] = W[cin, cout, ky, ox - ix*s + p] (banded, ky-concat)."""
    w = np.asarray(w, np.float32)                                          # [Cin, Cout, k, k]
    cin, cout = w.shape[0], w.shape[1]
    b = np.zeros((k, win * cin, ow_pad * cout), np.float32)
    for ky in range(k):
        for ix in range(win):
            for ox in range(ow):
                kx = ox - ix * s + p
                if 0 <= kx < k:
                    b[ky, ix * cin:(ix + 1) * cin, ox * cout:(ox + 1) * cout] = w[:, :, ky, kx]
    return np.concatenate(list(b), axis=1)                                 # [W*Cin, k*OWpad*Cout]


def build_plan(params, batch):
    """Precompute all matmul operands; nothing layout-related runs in the forward path."""
    a_list, b_list, gb_list = [], [], []
    h = 1
    for li, (k, s, p) in enumerate(_CFGS):
        oh = _FINAL if li == 4 else _out_size(h, k, s, p)
        ow_pad = _PAD_LANES if li == 4 else oh                             # lane-dense final cols
        w = np.asarray(params[f"w{li}"], np.float32)
        b_list.append(jnp.asarray(_build_B_cat(w, h, oh, k, s, p, ow_pad), jnp.float32))
        a_taps = _build_A_taps(batch, h, oh, k, s, p)
        if li == 0:
            a_list.append(jnp.asarray(a_taps, jnp.bfloat16))               # keep per-tap (3-D)
        else:
            a_list.append(jnp.asarray(np.concatenate(list(a_taps), axis=1), jnp.bfloat16))
        if li < 4:
            gamma = np.tile(np.asarray(params[f"g{li}"], np.float32), oh)
            beta = np.tile(np.asarray(params[f"b{li}"], np.float32), oh)
            gb_list.append(jnp.asarray(np.stack([gamma, beta], axis=0), jnp.float32))
        h = oh
    return (a_list[0], b_list[0], gb_list[0],
            a_list[1], gb_list[1],
            a_list[2], gb_list[2],
            a_list[3], gb_list[3],
            a_list[4],
            b_list[1], b_list[2], b_list[3], b_list[4])


# ---------------- deterministic parameter init (PyTorch layout [Cin, Cout, k, k]) ----------------

def init_params(key, ngf, noise_dim):
    specs = [
        (noise_dim, ngf * 8, 4),
        (ngf * 8, ngf * 4, 4),
        (ngf * 4, ngf * 2, 4),
        (ngf * 2, ngf, 4),
        (ngf, 1, 5),
    ]
    params = {}
    keys = jax.random.split(key, len(specs))
    for i, ((cin, cout, k), ki) in enumerate(zip(specs, keys)):
        params[f"w{i}"] = (0.02 * jax.random.normal(ki, (cin, cout, k, k))).astype(jnp.float32)
        if i < 4:  # BN affine params (PyTorch default init: weight=1, bias=0)
            params[f"g{i}"] = jnp.ones((cout,), jnp.float32)
            params[f"b{i}"] = jnp.zeros((cout,), jnp.float32)
    return params


# ---------------- pure-JAX reference (numerical sanity check) ----------------

def _reference_forward(params, noise):
    x = jnp.transpose(noise, (0, 2, 3, 1)).astype(jnp.float32)             # NHWC
    for li, (k, s, p) in enumerate(_CFGS):
        w = params[f"w{li}"]
        wc = jnp.transpose(w[:, :, ::-1, ::-1], (2, 3, 0, 1))              # flipped, HWIO
        x = jax.lax.conv_general_dilated(
            x, wc, window_strides=(1, 1),
            padding=[(k - 1 - p,) * 2, (k - 1 - p,) * 2],
            lhs_dilation=(s, s),
            dimension_numbers=("NHWC", "HWIO", "NHWC"),
            precision=jax.lax.Precision.HIGHEST)
        if li < 4:
            mean = jnp.mean(x, axis=(0, 1, 2), keepdims=True)
            var = jnp.mean((x - mean) ** 2, axis=(0, 1, 2), keepdims=True)
            x = (x - mean) * jax.lax.rsqrt(var + 1e-5)
            x = x * params[f"g{li}"] + params[f"b{li}"]
            x = jnp.where(x > 0, x, jnp.exp(x) - 1.0)
        else:
            x = jnp.tanh(x)
    x = x[:, :28, :28, :]
    return jnp.transpose(x, (0, 3, 1, 2))


if __name__ == "__main__":
    ngf, noise_dim, batch = 8, 16, 2
    root = jax.random.PRNGKey(0)
    k_params, k_noise = jax.random.split(root)
    params = init_params(k_params, ngf, noise_dim)
    noise = jax.random.normal(k_noise, (batch, noise_dim, 1, 1), dtype=jnp.float32)

    plan = build_plan(params, batch)
    fwd = jax.jit(generator_forward)
    out = fwd(plan, noise)
    jax.block_until_ready(out)
    assert out.shape == (batch, 1, 28, 28), out.shape
    assert out.dtype == jnp.float32

    ref = _reference_forward(params, noise)
    np.testing.assert_allclose(np.asarray(out), np.asarray(ref), atol=1e-2, rtol=0)
    print("KERNEL_OK")
</pallas_src>

<mosaic_0001>
module attributes {stable_mosaic.version = 11 : i64} {
  func.func @kernel(%arg0: memref<2x16xf32, #tpu.memory_space<vmem>>, %arg1: memref<4x8x2xbf16, #tpu.memory_space<vmem>>, %arg2: memref<16x1024xf32, #tpu.memory_space<vmem>>, %arg3: memref<2x256xf32, #tpu.memory_space<vmem>>, %arg4: memref<16x32xbf16, #tpu.memory_space<vmem>>, %arg5: memref<2x256xf32, #tpu.memory_space<vmem>>, %arg6: memref<32x64xbf16, #tpu.memory_space<vmem>>, %arg7: memref<2x256xf32, #tpu.memory_space<vmem>>, %arg8: memref<64x128xbf16, #tpu.memory_space<vmem>>, %arg9: memref<2x256xf32, #tpu.memory_space<vmem>>, %arg10: memref<56x320xbf16, #tpu.memory_space<vmem>>, %arg11: memref<256x1024xf32, #tpu.memory_space<any>>, %arg12: memref<256x1024xf32, #tpu.memory_space<any>>, %arg13: memref<256x1024xf32, #tpu.memory_space<any>>, %arg14: memref<256x640xf32, #tpu.memory_space<any>>, %arg15: memref<56x128xf32, #tpu.memory_space<vmem>>, %arg16: memref<320x256xf32, #tpu.memory_space<vmem>>, %arg17: memref<256x1024xf32, #tpu.memory_space<vmem>>, %arg18: memref<256x1024xf32, #tpu.memory_space<vmem>>, %arg19: memref<256x1024xf32, #tpu.memory_space<vmem>>, %arg20: memref<256x640xf32, #tpu.memory_space<vmem>>, %arg21: memref<4x!tpu.dma_semaphore, #tpu.memory_space<semaphore_mem>>) attributes {dimension_semantics = [], scalar_prefetch = 0 : i64, scratch_operands = 6 : i64, tpu.core_type = #tpu.core_type<tc>} {
    %c0_i32 = arith.constant 0 : i32
    %0 = tpu.memref_slice %arg21[%c0_i32] : memref<4x!tpu.dma_semaphore, #tpu.memory_space<semaphore_mem>> -> memref<1x!tpu.dma_semaphore, #tpu.memory_space<semaphore_mem>>
    %1 = tpu.memref_squeeze %0 : memref<1x!tpu.dma_semaphore, #tpu.memory_space<semaphore_mem>> -> memref<!tpu.dma_semaphore, #tpu.memory_space<semaphore_mem>>
    tpu.enqueue_dma source(%arg11 : memref<256x1024xf32, #tpu.memory_space<any>>) target(%arg17 : memref<256x1024xf32, #tpu.memory_space<vmem>>) target_semaphore(%1 : memref<!tpu.dma_semaphore, #tpu.memory_space<semaphore_mem>>)
    %c1_i32 = arith.constant 1 : i32
    %2 = tpu.memref_slice %arg21[%c1_i32] : memref<4x!tpu.dma_semaphore, #tpu.memory_space<semaphore_mem>> -> memref<1x!tpu.dma_semaphore, #tpu.memory_space<semaphore_mem>>
    %3 = tpu.memref_squeeze %2 : memref<1x!tpu.dma_semaphore, #tpu.memory_space<semaphore_mem>> -> memref<!tpu.dma_semaphore, #tpu.memory_space<semaphore_mem>>
    tpu.enqueue_dma source(%arg12 : memref<256x1024xf32, #tpu.memory_space<any>>) target(%arg18 : memref<256x1024xf32, #tpu.memory_space<vmem>>) target_semaphore(%3 : memref<!tpu.dma_semaphore, #tpu.memory_space<semaphore_mem>>)
    %c2_i32 = arith.constant 2 : i32
    %4 = tpu.memref_slice %arg21[%c2_i32] : memref<4x!tpu.dma_semaphore, #tpu.memory_space<semaphore_mem>> -> memref<1x!tpu.dma_semaphore, #tpu.memory_space<semaphore_mem>>
    %5 = tpu.memref_squeeze %4 : memref<1x!tpu.dma_semaphore, #tpu.memory_space<semaphore_mem>> -> memref<!tpu.dma_semaphore, #tpu.memory_space<semaphore_mem>>
    tpu.enqueue_dma source(%arg13 : memref<256x1024xf32, #tpu.memory_space<any>>) target(%arg19 : memref<256x1024xf32, #tpu.memory_space<vmem>>) target_semaphore(%5 : memref<!tpu.dma_semaphore, #tpu.memory_space<semaphore_mem>>)
    %c3_i32 = arith.constant 3 : i32
    %6 = tpu.memref_slice %arg21[%c3_i32] : memref<4x!tpu.dma_semaphore, #tpu.memory_space<semaphore_mem>> -> memref<1x!tpu.dma_semaphore, #tpu.memory_space<semaphore_mem>>
    %7 = tpu.memref_squeeze %6 : memref<1x!tpu.dma_semaphore, #tpu.memory_space<semaphore_mem>> -> memref<!tpu.dma_semaphore, #tpu.memory_space<semaphore_mem>>
    tpu.enqueue_dma source(%arg14 : memref<256x640xf32, #tpu.memory_space<any>>) target(%arg20 : memref<256x640xf32, #tpu.memory_space<vmem>>) target_semaphore(%7 : memref<!tpu.dma_semaphore, #tpu.memory_space<semaphore_mem>>)
    %c0 = arith.constant 0 : index
    %c0_0 = arith.constant 0 : index
    %8 = vector.load %arg0[%c0, %c0_0] : memref<2x16xf32, #tpu.memory_space<vmem>>, vector<2x16xf32>
    %c0_1 = arith.constant 0 : index
    %c0_2 = arith.constant 0 : index
    %9 = vector.load %arg2[%c0_1, %c0_2] : memref<16x1024xf32, #tpu.memory_space<vmem>>, vector<16x1024xf32>
    %cst = arith.constant dense<0.000000e+00> : vector<2x1024xf32>
    %10 = tpu.matmul %8, %9, %cst {dimension_numbers = #tpu.dot_dimension_numbers<[1], [0], [0], [1], [0, 0, 1, 1], [], []>} : vector<2x16xf32>, vector<16x1024xf32>, vector<2x1024xf32> -> vector<2x1024xf32>
    %c0_3 = arith.constant 0 : index
    %c0_4 = arith.constant 0 : index
    %c0_5 = arith.constant 0 : index
    %11 = vector.load %arg1[%c0_3, %c0_4, %c0_5] : memref<4x8x2xbf16, #tpu.memory_space<vmem>>, vector<1x8x2xbf16>
    %12 = vector.shape_cast %11 : vector<1x8x2xbf16> to vector<8x2xbf16>
    %13 = arith.extf %12 : vector<8x2xbf16> to vector<8x2xf32>
    %14 = vector.extract_strided_slice %10 {offsets = [0, 0], sizes = [2, 256], strides = [1, 1]} : vector<2x1024xf32> to vector<2x256xf32>
    %cst_6 = arith.constant dense<0.000000e+00> : vector<8x256xf32>
    %15 = tpu.matmul %13, %14, %cst_6 {dimension_numbers = #tpu.dot_dimension_numbers<[1], [0], [0], [1], [0, 0, 1, 1], [], []>} : vector<8x2xf32>, vector<2x256xf32>, vector<8x256xf32> -> vector<8x256xf32>
    %c1 = arith.constant 1 : index
    %c0_7 = arith.constant 0 : index
    %c0_8 = arith.constant 0 : index
    %16 = vector.load %arg1[%c1, %c0_7, %c0_8] : memref<4x8x2xbf16, #tpu.memory_space<vmem>>, vector<1x8x2xbf16>
    %17 = vector.shape_cast %16 : vector<1x8x2xbf16> to vector<8x2xbf16>
    %18 = arith.extf %17 : vector<8x2xbf16> to vector<8x2xf32>
    %19 = vector.extract_strided_slice %10 {offsets = [0, 256], sizes = [2, 256], strides = [1, 1]} : vector<2x1024xf32> to vector<2x256xf32>
    %cst_9 = arith.constant dense<0.000000e+00> : vector<8x256xf32>
    %20 = tpu.matmul %18, %19, %cst_9 {dimension_numbers = #tpu.dot_dimension_numbers<[1], [0], [0], [1], [0, 0, 1, 1], [], []>} : vector<8x2xf32>, vector<2x256xf32>, vector<8x256xf32> -> vector<8x256xf32>
    %21 = arith.addf %15, %20 : vector<8x256xf32>
    %c2 = arith.constant 2 : index
    %c0_10 = arith.constant 0 : index
    %c0_11 = arith.constant 0 : index
    %22 = vector.load %arg1[%c2, %c0_10, %c0_11] : memref<4x8x2xbf16, #tpu.memory_space<vmem>>, vector<1x8x2xbf16>
    %23 = vector.shape_cast %22 : vector<1x8x2xbf16> to vector<8x2xbf16>
    %24 = arith.extf %23 : vector<8x2xbf16> to vector<8x2xf32>
    %25 = vector.extract_strided_slice %10 {offsets = [0, 512], sizes = [2, 256], strides = [1, 1]} : vector<2x1024xf32> to vector<2x256xf32>
    %cst_12 = arith.constant dense<0.000000e+00> : vector<8x256xf32>
    %26 = tpu.matmul %24, %25, %cst_12 {dimension_numbers = #tpu.dot_dimension_numbers<[1], [0], [0], [1], [0, 0, 1, 1], [], []>} : vector<8x2xf32>, vector<2x256xf32>, vector<8x256xf32> -> vector<8x256xf32>
    %27 = arith.addf %21, %26 : vector<8x256xf32>
    %c3 = arith.constant 3 : index
    %c0_13 = arith.constant 0 : index
    %c0_14 = arith.constant 0 : index
    %28 = vector.load %arg1[%c3, %c0_13, %c0_14] : memref<4x8x2xbf16, #tpu.memory_space<vmem>>, vector<1x8x2xbf16>
    %29 = vector.shape_cast %28 : vector<1x8x2xbf16> to vector<8x2xbf16>
    %30 = arith.extf %29 : vector<8x2xbf16> to vector<8x2xf32>
    %31 = vector.extract_strided_slice %10 {offsets = [0, 768], sizes = [2, 256], strides = [1, 1]} : vector<2x1024xf32> to vector<2x256xf32>
    %cst_15 = arith.constant dense<0.000000e+00> : vector<8x256xf32>
    %32 = tpu.matmul %30, %31, %cst_15 {dimension_numbers = #tpu.dot_dimension_numbers<[1], [0], [0], [1], [0, 0, 1, 1], [], []>} : vector<8x2xf32>, vector<2x256xf32>, vector<8x256xf32> -> vector<8x256xf32>
    %33 = arith.addf %27, %32 : vector<8x256xf32>
    %cst_16 = arith.constant dense<0.000000e+00> : vector<256xf32>
    %34 = vector.multi_reduction <add>, %33, %cst_16 [0] : vector<8x256xf32> to vector<256xf32>
    %35 = vector.shape_cast %34 : vector<256xf32> to vector<1x256xf32>
    %36 = arith.mulf %33, %33 : vector<8x256xf32>
    %cst_17 = arith.constant dense<0.000000e+00> : vector<256xf32>
    %37 = vector.multi_reduction <add>, %36, %cst_17 [0] : vector<8x256xf32> to vector<256xf32>
    %38 = vector.shape_cast %37 : vector<256xf32> to vector<1x256xf32>
    %39 = tpu.concatenate %35, %38 in 0 : vector<1x256xf32>, vector<1x256xf32> -> vector<2x256xf32>
    %c64_i32 = arith.constant 64 : i32
    %40 = tpu.dynamic_rotate %39 by %c64_i32 dim 1 : vector<2x256xf32>, i32 -> vector<2x256xf32>
    %41 = arith.addf %39, %40 : vector<2x256xf32>
    %c128_i32 = arith.constant 128 : i32
    %42 = tpu.dynamic_rotate %41 by %c128_i32 dim 1 : vector<2x256xf32>, i32 -> vector<2x256xf32>
    %43 = arith.addf %41, %42 : vector<2x256xf32>
    %44 = vector.extract_strided_slice %43 {offsets = [0, 0], sizes = [1, 256], strides = [1, 1]} : vector<2x256xf32> to vector<1x256xf32>
    %cst_18 = arith.constant 3.125000e-02 : f32
    %45 = vector.broadcast %cst_18 : f32 to vector<1x256xf32>
    %46 = arith.mulf %44, %45 : vector<1x256xf32>
    %47 = vector.extract_strided_slice %43 {offsets = [1, 0], sizes = [1, 256], strides = [1, 1]} : vector<2x256xf32> to vector<1x256xf32>
    %cst_19 = arith.constant 3.125000e-02 : f32
    %48 = vector.broadcast %cst_19 : f32 to vector<1x256xf32>
    %49 = arith.mulf %47, %48 : vector<1x256xf32>
    %50 = arith.mulf %46, %46 : vector<1x256xf32>
    %51 = arith.subf %49, %50 : vector<1x256xf32>
    %cst_20 = arith.constant 0.000000e+00 : f32
    %52 = vector.broadcast %cst_20 : f32 to vector<1x256xf32>
    %53 = arith.maximumf %51, %52 : vector<1x256xf32>
    %c0_21 = arith.constant 0 : index
    %c0_22 = arith.constant 0 : index
    %54 = vector.load %arg3[%c0_21, %c0_22] : memref<2x256xf32, #tpu.memory_space<vmem>>, vector<1x256xf32>
    %cst_23 = arith.constant 9.99999974E-6 : f32
    %55 = vector.broadcast %cst_23 : f32 to vector<1x256xf32>
    %56 = arith.addf %53, %55 : vector<1x256xf32>
    %57 = math.rsqrt %56 : vector<1x256xf32>
    %58 = arith.mulf %54, %57 : vector<1x256xf32>
    %c1_24 = arith.constant 1 : index
    %c0_25 = arith.constant 0 : index
    %59 = vector.load %arg3[%c1_24, %c0_25] : memref<2x256xf32, #tpu.memory_space<vmem>>, vector<1x256xf32>
    %60 = arith.mulf %46, %58 : vector<1x256xf32>
    %61 = arith.subf %59, %60 : vector<1x256xf32>
    %62 = vector.broadcast %58 : vector<1x256xf32> to vector<8x256xf32>
    %63 = arith.mulf %33, %62 : vector<8x256xf32>
    %64 = vector.broadcast %61 : vector<1x256xf32> to vector<8x256xf32>
    %65 = arith.addf %63, %64 : vector<8x256xf32>
    %cst_26 = arith.constant 0.000000e+00 : f32
    %66 = vector.broadcast %cst_26 : f32 to vector<8x256xf32>
    %67 = arith.cmpf ogt, %65, %66 : vector<8x256xf32>
    %68 = math.exp %65 : vector<8x256xf32>
    %cst_27 = arith.constant 1.000000e+00 : f32
    %69 = vector.broadcast %cst_27 : f32 to vector<8x256xf32>
    %70 = arith.subf %68, %69 : vector<8x256xf32>
    %71 = arith.select %67, %65, %70 : vector<8x256xi1>, vector<8x256xf32>
    %c0_i32_28 = arith.constant 0 : i32
    %72 = tpu.memref_slice %arg21[%c0_i32_28] : memref<4x!tpu.dma_semaphore, #tpu.memory_space<semaphore_mem>> -> memref<1x!tpu.dma_semaphore, #tpu.memory_space<semaphore_mem>>
    %73 = tpu.memref_squeeze %72 : memref<1x!tpu.dma_semaphore, #tpu.memory_space<semaphore_mem>> -> memref<!tpu.dma_semaphore, #tpu.memory_space<semaphore_mem>>
    tpu.wait_dma2 semaphore(%73 : memref<!tpu.dma_semaphore, #tpu.memory_space<semaphore_mem>>) src(%arg11 : memref<256x1024xf32, #tpu.memory_space<any>>) dst(%arg17 : memref<256x1024xf32, #tpu.memory_space<vmem>>)
    %c0_29 = arith.constant 0 : index
    %c0_30 = arith.constant 0 : index
    %74 = vector.load %arg17[%c0_29, %c0_30] : memref<256x1024xf32, #tpu.memory_space<vmem>>, vector<256x1024xf32>
    %cst_31 = arith.constant dense<0.000000e+00> : vector<8x1024xf32>
    %75 = tpu.matmul %71, %74, %cst_31 {dimension_numbers = #tpu.dot_dimension_numbers<[1], [0], [0], [1], [0, 0, 1, 1], [], []>} : vector<8x256xf32>, vector<256x1024xf32>, vector<8x1024xf32> -> vector<8x1024xf32>
    %76 = vector.extract_strided_slice %75 {offsets = [0, 0], sizes = [8, 256], strides = [1, 1]} : vector<8x1024xf32> to vector<8x256xf32>
    %c0_32 = arith.constant 0 : index
    %c0_33 = arith.constant 0 : index
    %77 = vector.load %arg16[%c0_32, %c0_33] : memref<320x256xf32, #tpu.memory_space<vmem>>, vector<8x256xf32>
    tpu.vector_store %arg16[%c0_32, %c0_33], %76 {strides = array<i32>} : memref<320x256xf32, #tpu.memory_space<vmem>>, vector<8x256xf32>,
    %78 = vector.extract_strided_slice %75 {offsets = [0, 256], sizes = [8, 256], strides = [1, 1]} : vector<8x1024xf32> to vector<8x256xf32>
    %c8 = arith.constant 8 : index
    %c0_34 = arith.constant 0 : index
    %79 = vector.load %arg16[%c8, %c0_34] : memref<320x256xf32, #tpu.memory_space<vmem>>, vector<8x256xf32>
    tpu.vector_store %arg16[%c8, %c0_34], %78 {strides = array<i32>} : memref<320x256xf32, #tpu.memory_space<vmem>>, vector<8x256xf32>,
    %80 = vector.extract_strided_slice %75 {offsets = [0, 512], sizes = [8, 256], strides = [1, 1]} : vector<8x1024xf32> to vector<8x256xf32>
    %c16 = arith.constant 16 : index
    %c0_35 = arith.constant 0 : index
    %81 = vector.load %arg16[%c16, %c0_35] : memref<320x256xf32, #tpu.memory_space<vmem>>, vector<8x256xf32>
    tpu.vector_store %arg16[%c16, %c0_35], %80 {strides = array<i32>} : memref<320x256xf32, #tpu.memory_space<vmem>>, vector<8x256xf32>,
    %82 = vector.extract_strided_slice %75 {offsets = [0, 768], sizes = [8, 256], strides = [1, 1]} : vector<8x1024xf32> to vector<8x256xf32>
    %c24 = arith.constant 24 : index
    %c0_36 = arith.constant 0 : index
    %83 = vector.load %arg16[%c24, %c0_36] : memref<320x256xf32, #tpu.memory_space<vmem>>, vector<8x256xf32>
    tpu.vector_store %arg16[%c24, %c0_36], %82 {strides = array<i32>} : memref<320x256xf32, #tpu.memory_space<vmem>>, vector<8x256xf32>,
    %c0_37 = arith.constant 0 : index
    %c0_38 = arith.constant 0 : index
    %84 = vector.load %arg4[%c0_37, %c0_38] : memref<16x32xbf16, #tpu.memory_space<vmem>>, vector<16x32xbf16>
    %85 = arith.extf %84 : vector<16x32xbf16> to vector<16x32xf32>
    %c0_39 = arith.constant 0 : index
    %c0_40 = arith.constant 0 : index
    %86 = vector.load %arg16[%c0_39, %c0_40] : memref<320x256xf32, #tpu.memory_space<vmem>>, vector<32x256xf32>
    %cst_41 = arith.constant dense<0.000000e+00> : vector<16x256xf32>
    %87 = tpu.matmul %85, %86, %cst_41 {dimension_numbers = #tpu.dot_dimension_numbers<[1], [0], [0], [1], [0, 0, 1, 1], [], []>} : vector<16x32xf32>, vector<32x256xf32>, vector<16x256xf32> -> vector<16x256xf32>
    %cst_42 = arith.constant dense<0.000000e+00> : vector<256xf32>
    %88 = vector.multi_reduction <add>, %87, %cst_42 [0] : vector<16x256xf32> to vector<256xf32>
    %89 = vector.shape_cast %88 : vector<256xf32> to vector<1x256xf32>
    %90 = arith.mulf %87, %87 : vector<16x256xf32>
    %cst_43 = arith.constant dense<0.000000e+00> : vector<256xf32>
    %91 = vector.multi_reduction <add>, %90, %cst_43 [0] : vector<16x256xf32> to vector<256xf32>
    %92 = vector.shape_cast %91 : vector<256xf32> to vector<1x256xf32>
    %93 = tpu.concatenate %89, %92 in 0 : vector<1x256xf32>, vector<1x256xf32> -> vector<2x256xf32>
    %c32_i32 = arith.constant 32 : i32
    %94 = tpu.dynamic_rotate %93 by %c32_i32 dim 1 : vector<2x256xf32>, i32 -> vector<2x256xf32>
    %95 = arith.addf %93, %94 : vector<2x256xf32>
    %c64_i32_44 = arith.constant 64 : i32
    %96 = tpu.dynamic_rotate %95 by %c64_i32_44 dim 1 : vector<2x256xf32>, i32 -> vector<2x256xf32>
    %97 = arith.addf %95, %96 : vector<2x256xf32>
    %c128_i32_45 = arith.constant 128 : i32
    %98 = tpu.dynamic_rotate %97 by %c128_i32_45 dim 1 : vector<2x256xf32>, i32 -> vector<2x256xf32>
    %99 = arith.addf %97, %98 : vector<2x256xf32>
    %100 = vector.extract_strided_slice %99 {offsets = [0, 0], sizes = [1, 256], strides = [1, 1]} : vector<2x256xf32> to vector<1x256xf32>
    %cst_46 = arith.constant 7.812500e-03 : f32
    %101 = vector.broadcast %cst_46 : f32 to vector<1x256xf32>
    %102 = arith.mulf %100, %101 : vector<1x256xf32>
    %103 = vector.extract_strided_slice %99 {offsets = [1, 0], sizes = [1, 256], strides = [1, 1]} : vector<2x256xf32> to vector<1x256xf32>
    %cst_47 = arith.constant 7.812500e-03 : f32
    %104 = vector.broadcast %cst_47 : f32 to vector<1x256xf32>
    %105 = arith.mulf %103, %104 : vector<1x256xf32>
    %106 = arith.mulf %102, %102 : vector<1x256xf32>
    %107 = arith.subf %105, %106 : vector<1x256xf32>
    %cst_48 = arith.constant 0.000000e+00 : f32
    %108 = vector.broadcast %cst_48 : f32 to vector<1x256xf32>
    %109 = arith.maximumf %107, %108 : vector<1x256xf32>
    %c0_49 = arith.constant 0 : index
    %c0_50 = arith.constant 0 : index
    %110 = vector.load %arg5[%c0_49, %c0_50] : memref<2x256xf32, #tpu.memory_space<vmem>>, vector<1x256xf32>
    %cst_51 = arith.constant 9.99999974E-6 : f32
    %111 = vector.broadcast %cst_51 : f32 to vector<1x256xf32>
    %112 = arith.addf %109, %111 : vector<1x256xf32>
    %113 = math.rsqrt %112 : vector<1x256xf32>
    %114 = arith.mulf %110, %113 : vector<1x256xf32>
    %c1_52 = arith.constant 1 : index
    %c0_53 = arith.constant 0 : index
    %115 = vector.load %arg5[%c1_52, %c0_53] : memref<2x256xf32, #tpu.memory_space<vmem>>, vector<1x256xf32>
    %116 = arith.mulf %102, %114 : vector<1x256xf32>
    %117 = arith.subf %115, %116 : vector<1x256xf32>
    %118 = vector.broadcast %114 : vector<1x256xf32> to vector<16x256xf32>
    %119 = arith.mulf %87, %118 : vector<16x256xf32>
    %120 = vector.broadcast %117 : vector<1x256xf32> to vector<16x256xf32>
    %121 = arith.addf %119, %120 : vector<16x256xf32>
    %cst_54 = arith.constant 0.000000e+00 : f32
    %122 = vector.broadcast %cst_54 : f32 to vector<16x256xf32>
    %123 = arith.cmpf ogt, %121, %122 : vector<16x256xf32>
    %124 = math.exp %121 : vector<16x256xf32>
    %cst_55 = arith.constant 1.000000e+00 : f32
    %125 = vector.broadcast %cst_55 : f32 to vector<16x256xf32>
    %126 = arith.subf %124, %125 : vector<16x256xf32>
    %127 = arith.select %123, %121, %126 : vector<16x256xi1>, vector<16x256xf32>
    %c1_i32_56 = arith.constant 1 : i32
    %128 = tpu.memref_slice %arg21[%c1_i32_56] : memref<4x!tpu.dma_semaphore, #tpu.memory_space<semaphore_mem>> -> memref<1x!tpu.dma_semaphore, #tpu.memory_space<semaphore_mem>>
    %129 = tpu.memref_squeeze %128 : memref<1x!tpu.dma_semaphore, #tpu.memory_space<semaphore_mem>> -> memref<!tpu.dma_semaphore, #tpu.memory_space<semaphore_mem>>
    tpu.wait_dma2 semaphore(%129 : memref<!tpu.dma_semaphore, #tpu.memory_space<semaphore_mem>>) src(%arg12 : memref<256x1024xf32, #tpu.memory_space<any>>) dst(%arg18 : memref<256x1024xf32, #tpu.memory_space<vmem>>)
    %c0_57 = arith.constant 0 : index
    %c0_58 = arith.constant 0 : index
    %130 = vector.load %arg18[%c0_57, %c0_58] : memref<256x1024xf32, #tpu.memory_space<vmem>>, vector<256x1024xf32>
    %cst_59 = arith.constant dense<0.000000e+00> : vector<16x1024xf32>
    %131 = tpu.matmul %127, %130, %cst_59 {dimension_numbers = #tpu.dot_dimension_numbers<[1], [0], [0], [1], [0, 0, 1, 1], [], []>} : vector<16x256xf32>, vector<256x1024xf32>, vector<16x1024xf32> -> vector<16x1024xf32>
    %132 = vector.extract_strided_slice %131 {offsets = [0, 0], sizes = [16, 256], strides = [1, 1]} : vector<16x1024xf32> to vector<16x256xf32>
    %c0_60 = arith.constant 0 : index
    %c0_61 = arith.constant 0 : index
    %133 = vector.load %arg16[%c0_60, %c0_61] : memref<320x256xf32, #tpu.memory_space<vmem>>, vector<16x256xf32>
    tpu.vector_store %arg16[%c0_60, %c0_61], %132 {strides = array<i32>} : memref<320x256xf32, #tpu.memory_space<vmem>>, vector<16x256xf32>,
    %134 = vector.extract_strided_slice %131 {offsets = [0, 256], sizes = [16, 256], strides = [1, 1]} : vector<16x1024xf32> to vector<16x256xf32>
    %c16_62 = arith.constant 16 : index
    %c0_63 = arith.constant 0 : index
    %135 = vector.load %arg16[%c16_62, %c0_63] : memref<320x256xf32, #tpu.memory_space<vmem>>, vector<16x256xf32>
    tpu.vector_store %arg16[%c16_62, %c0_63], %134 {strides = array<i32>} : memref<320x256xf32, #tpu.memory_space<vmem>>, vector<16x256xf32>,
    %136 = vector.extract_strided_slice %131 {offsets = [0, 512], sizes = [16, 256], strides = [1, 1]} : vector<16x1024xf32> to vector<16x256xf32>
    %c32 = arith.constant 32 : index
    %c0_64 = arith.constant 0 : index
    %137 = vector.load %arg16[%c32, %c0_64] : memref<320x256xf32, #tpu.memory_space<vmem>>, vector<16x256xf32>
    tpu.vector_store %arg16[%c32, %c0_64], %136 {strides = array<i32>} : memref<320x256xf32, #tpu.memory_space<vmem>>, vector<16x256xf32>,
    %138 = vector.extract_strided_slice %131 {offsets = [0, 768], sizes = [16, 256], strides = [1, 1]} : vector<16x1024xf32> to vector<16x256xf32>
    %c48 = arith.constant 48 : index
    %c0_65 = arith.constant 0 : index
    %139 = vector.load %arg16[%c48, %c0_65] : memref<320x256xf32, #tpu.memory_space<vmem>>, vector<16x256xf32>
    tpu.vector_store %arg16[%c48, %c0_65], %138 {strides = array<i32>} : memref<320x256xf32, #tpu.memory_space<vmem>>, vector<16x256xf32>,
    %c0_66 = arith.constant 0 : index
    %c0_67 = arith.constant 0 : index
    %140 = vector.load %arg6[%c0_66, %c0_67] : memref<32x64xbf16, #tpu.memory_space<vmem>>, vector<32x64xbf16>
    %141 = arith.extf %140 : vector<32x64xbf16> to vector<32x64xf32>
    %c0_68 = arith.constant 0 : index
    %c0_69 = arith.constant 0 : index
    %142 = vector.load %arg16[%c0_68, %c0_69] : memref<320x256xf32, #tpu.memory_space<vmem>>, vector<64x256xf32>
    %cst_70 = arith.constant dense<0.000000e+00> : vector<32x256xf32>
    %143 = tpu.matmul %141, %142, %cst_70 {dimension_numbers = #tpu.dot_dimension_numbers<[1], [0], [0], [1], [0, 0, 1, 1], [], []>} : vector<32x64xf32>, vector<64x256xf32>, vector<32x256xf32> -> vector<32x256xf32>
    %cst_71 = arith.constant dense<0.000000e+00> : vector<256xf32>
    %144 = vector.multi_reduction <add>, %143, %cst_71 [0] : vector<32x256xf32> to vector<256xf32>
    %145 = vector.shape_cast %144 : vector<256xf32> to vector<1x256xf32>
    %146 = arith.mulf %143, %143 : vector<32x256xf32>
    %cst_72 = arith.constant dense<0.000000e+00> : vector<256xf32>
    %147 = vector.multi_reduction <add>, %146, %cst_72 [0] : vector<32x256xf32> to vector<256xf32>
    %148 = vector.shape_cast %147 : vector<256xf32> to vector<1x256xf32>
    %149 = tpu.concatenate %145, %148 in 0 : vector<1x256xf32>, vector<1x256xf32> -> vector<2x256xf32>
    %c16_i32 = arith.constant 16 : i32
    %150 = tpu.dynamic_rotate %149 by %c16_i32 dim 1 : vector<2x256xf32>, i32 -> vector<2x256xf32>
    %151 = arith.addf %149, %150 : vector<2x256xf32>
    %c32_i32_73 = arith.constant 32 : i32
    %152 = tpu.dynamic_rotate %151 by %c32_i32_73 dim 1 : vector<2x256xf32>, i32 -> vector<2x256xf32>
    %153 = arith.addf %151, %152 : vector<2x256xf32>
    %c64_i32_74 = arith.constant 64 : i32
    %154 = tpu.dynamic_rotate %153 by %c64_i32_74 dim 1 : vector<2x256xf32>, i32 -> vector<2x256xf32>
    %155 = arith.addf %153, %154 : vector<2x256xf32>
    %c128_i32_75 = arith.constant 128 : i32
    %156 = tpu.dynamic_rotate %155 by %c128_i32_75 dim 1 : vector<2x256xf32>, i32 -> vector<2x256xf32>
    %157 = arith.addf %155, %156 : vector<2x256xf32>
    %158 = vector.extract_strided_slice %157 {offsets = [0, 0], sizes = [1, 256], strides = [1, 1]} : vector<2x256xf32> to vector<1x256xf32>
    %cst_76 = arith.constant 0.001953125 : f32
    %159 = vector.broadcast %cst_76 : f32 to vector<1x256xf32>
    %160 = arith.mulf %158, %159 : vector<1x256xf32>
    %161 = vector.extract_strided_slice %157 {offsets = [1, 0], sizes = [1, 256], strides = [1, 1]} : vector<2x256xf32> to vector<1x256xf32>
    %cst_77 = arith.constant 0.001953125 : f32
    %162 = vector.broadcast %cst_77 : f32 to vector<1x256xf32>
    %163 = arith.mulf %161, %162 : vector<1x256xf32>
    %164 = arith.mulf %160, %160 : vector<1x256xf32>
    %165 = arith.subf %163, %164 : vector<1x256xf32>
    %cst_78 = arith.constant 0.000000e+00 : f32
    %166 = vector.broadcast %cst_78 : f32 to vector<1x256xf32>
    %167 = arith.maximumf %165, %166 : vector<1x256xf32>
    %c0_79 = arith.constant 0 : index
    %c0_80 = arith.constant 0 : index
    %168 = vector.load %arg7[%c0_79, %c0_80] : memref<2x256xf32, #tpu.memory_space<vmem>>, vector<1x256xf32>
    %cst_81 = arith.constant 9.99999974E-6 : f32
    %169 = vector.broadcast %cst_81 : f32 to vector<1x256xf32>
    %170 = arith.addf %167, %169 : vector<1x256xf32>
    %171 = math.rsqrt %170 : vector<1x256xf32>
    %172 = arith.mulf %168, %171 : vector<1x256xf32>
    %c1_82 = arith.constant 1 : index
    %c0_83 = arith.constant 0 : index
    %173 = vector.load %arg7[%c1_82, %c0_83] : memref<2x256xf32, #tpu.memory_space<vmem>>, vector<1x256xf32>
    %174 = arith.mulf %160, %172 : vector<1x256xf32>
    %175 = arith.subf %173, %174 : vector<1x256xf32>
    %176 = vector.broadcast %172 : vector<1x256xf32> to vector<32x256xf32>
    %177 = arith.mulf %143, %176 : vector<32x256xf32>
    %178 = vector.broadcast %175 : vector<1x256xf32> to vector<32x256xf32>
    %179 = arith.addf %177, %178 : vector<32x256xf32>
    %cst_84 = arith.constant 0.000000e+00 : f32
    %180 = vector.broadcast %cst_84 : f32 to vector<32x256xf32>
    %181 = arith.cmpf ogt, %179, %180 : vector<32x256xf32>
    %182 = math.exp %179 : vector<32x256xf32>
    %cst_85 = arith.constant 1.000000e+00 : f32
    %183 = vector.broadcast %cst_85 : f32 to vector<32x256xf32>
    %184 = arith.subf %182, %183 : vector<32x256xf32>
    %185 = arith.select %181, %179, %184 : vector<32x256xi1>, vector<32x256xf32>
    %c2_i32_86 = arith.constant 2 : i32
    %186 = tpu.memref_slice %arg21[%c2_i32_86] : memref<4x!tpu.dma_semaphore, #tpu.memory_space<semaphore_mem>> -> memref<1x!tpu.dma_semaphore, #tpu.memory_space<semaphore_mem>>
    %187 = tpu.memref_squeeze %186 : memref<1x!tpu.dma_semaphore, #tpu.memory_space<semaphore_mem>> -> memref<!tpu.dma_semaphore, #tpu.memory_space<semaphore_mem>>
    tpu.wait_dma2 semaphore(%187 : memref<!tpu.dma_semaphore, #tpu.memory_space<semaphore_mem>>) src(%arg13 : memref<256x1024xf32, #tpu.memory_space<any>>) dst(%arg19 : memref<256x1024xf32, #tpu.memory_space<vmem>>)
    %c0_87 = arith.constant 0 : index
    %c0_88 = arith.constant 0 : index
    %188 = vector.load %arg19[%c0_87, %c0_88] : memref<256x1024xf32, #tpu.memory_space<vmem>>, vector<256x1024xf32>
    %cst_89 = arith.constant dense<0.000000e+00> : vector<32x1024xf32>
    %189 = tpu.matmul %185, %188, %cst_89 {dimension_numbers = #tpu.dot_dimension_numbers<[1], [0], [0], [1], [0, 0, 1, 1], [], []>} : vector<32x256xf32>, vector<256x1024xf32>, vector<32x1024xf32> -> vector<32x1024xf32>
    %190 = vector.extract_strided_slice %189 {offsets = [0, 0], sizes = [32, 256], strides = [1, 1]} : vector<32x1024xf32> to vector<32x256xf32>
    %c0_90 = arith.constant 0 : index
    %c0_91 = arith.constant 0 : index
    %191 = vector.load %arg16[%c0_90, %c0_91] : memref<320x256xf32, #tpu.memory_space<vmem>>, vector<32x256xf32>
    tpu.vector_store %arg16[%c0_90, %c0_91], %190 {strides = array<i32>} : memref<320x256xf32, #tpu.memory_space<vmem>>, vector<32x256xf32>,
    %192 = vector.extract_strided_slice %189 {offsets = [0, 256], sizes = [32, 256], strides = [1, 1]} : vector<32x1024xf32> to vector<32x256xf32>
    %c32_92 = arith.constant 32 : index
    %c0_93 = arith.constant 0 : index
    %193 = vector.load %arg16[%c32_92, %c0_93] : memref<320x256xf32, #tpu.memory_space<vmem>>, vector<32x256xf32>
    tpu.vector_store %arg16[%c32_92, %c0_93], %192 {strides = array<i32>} : memref<320x256xf32, #tpu.memory_space<vmem>>, vector<32x256xf32>,
    %194 = vector.extract_strided_slice %189 {offsets = [0, 512], sizes = [32, 256], strides = [1, 1]} : vector<32x1024xf32> to vector<32x256xf32>
    %c64 = arith.constant 64 : index
    %c0_94 = arith.constant 0 : index
    %195 = vector.load %arg16[%c64, %c0_94] : memref<320x256xf32, #tpu.memory_space<vmem>>, vector<32x256xf32>
    tpu.vector_store %arg16[%c64, %c0_94], %194 {strides = array<i32>} : memref<320x256xf32, #tpu.memory_space<vmem>>, vector<32x256xf32>,
    %196 = vector.extract_strided_slice %189 {offsets = [0, 768], sizes = [32, 256], strides = [1, 1]} : vector<32x1024xf32> to vector<32x256xf32>
    %c96 = arith.constant 96 : index
    %c0_95 = arith.constant 0 : index
    %197 = vector.load %arg16[%c96, %c0_95] : memref<320x256xf32, #tpu.memory_space<vmem>>, vector<32x256xf32>
    tpu.vector_store %arg16[%c96, %c0_95], %196 {strides = array<i32>} : memref<320x256xf32, #tpu.memory_space<vmem>>, vector<32x256xf32>,
    %c0_96 = arith.constant 0 : index
    %c0_97 = arith.constant 0 : index
    %198 = vector.load %arg8[%c0_96, %c0_97] : memref<64x128xbf16, #tpu.memory_space<vmem>>, vector<64x128xbf16>
    %199 = arith.extf %198 : vector<64x128xbf16> to vector<64x128xf32>
    %c0_98 = arith.constant 0 : index
    %c0_99 = arith.constant 0 : index
    %200 = vector.load %arg16[%c0_98, %c0_99] : memref<320x256xf32, #tpu.memory_space<vmem>>, vector<128x256xf32>
    %cst_100 = arith.constant dense<0.000000e+00> : vector<64x256xf32>
    %201 = tpu.matmul %199, %200, %cst_100 {dimension_numbers = #tpu.dot_dimension_numbers<[1], [0], [0], [1], [0, 0, 1, 1], [], []>} : vector<64x128xf32>, vector<128x256xf32>, vector<64x256xf32> -> vector<64x256xf32>
    %cst_101 = arith.constant dense<0.000000e+00> : vector<256xf32>
    %202 = vector.multi_reduction <add>, %201, %cst_101 [0] : vector<64x256xf32> to vector<256xf32>
    %203 = vector.shape_cast %202 : vector<256xf32> to vector<1x256xf32>
    %204 = arith.mulf %201, %201 : vector<64x256xf32>
    %cst_102 = arith.constant dense<0.000000e+00> : vector<256xf32>
    %205 = vector.multi_reduction <add>, %204, %cst_102 [0] : vector<64x256xf32> to vector<256xf32>
    %206 = vector.shape_cast %205 : vector<256xf32> to vector<1x256xf32>
    %207 = tpu.concatenate %203, %206 in 0 : vector<1x256xf32>, vector<1x256xf32> -> vector<2x256xf32>
    %c8_i32 = arith.constant 8 : i32
    %208 = tpu.dynamic_rotate %207 by %c8_i32 dim 1 : vector<2x256xf32>, i32 -> vector<2x256xf32>
    %209 = arith.addf %207, %208 : vector<2x256xf32>
    %c16_i32_103 = arith.constant 16 : i32
    %210 = tpu.dynamic_rotate %209 by %c16_i32_103 dim 1 : vector<2x256xf32>, i32 -> vector<2x256xf32>
    %211 = arith.addf %209, %210 : vector<2x256xf32>
    %c32_i32_104 = arith.constant 32 : i32
    %212 = tpu.dynamic_rotate %211 by %c32_i32_104 dim 1 : vector<2x256xf32>, i32 -> vector<2x256xf32>
    %213 = arith.addf %211, %212 : vector<2x256xf32>
    %c64_i32_105 = arith.constant 64 : i32
    %214 = tpu.dynamic_rotate %213 by %c64_i32_105 dim 1 : vector<2x256xf32>, i32 -> vector<2x256xf32>
    %215 = arith.addf %213, %214 : vector<2x256xf32>
    %c128_i32_106 = arith.constant 128 : i32
    %216 = tpu.dynamic_rotate %215 by %c128_i32_106 dim 1 : vector<2x256xf32>, i32 -> vector<2x256xf32>
    %217 = arith.addf %215, %216 : vector<2x256xf32>
    %218 = vector.extract_strided_slice %217 {offsets = [0, 0], sizes = [1, 256], strides = [1, 1]} : vector<2x256xf32> to vector<1x256xf32>
    %cst_107 = arith.constant 4.8828125E-4 : f32
    %219 = vector.broadcast %cst_107 : f32 to vector<1x256xf32>
    %220 = arith.mulf %218, %219 : vector<1x256xf32>
    %221 = vector.extract_strided_slice %217 {offsets = [1, 0], sizes = [1, 256], strides = [1, 1]} : vector<2x256xf32> to vector<1x256xf32>
    %cst_108 = arith.constant 4.8828125E-4 : f32
    %222 = vector.broadcast %cst_108 : f32 to vector<1x256xf32>
    %223 = arith.mulf %221, %222 : vector<1x256xf32>
    %224 = arith.mulf %220, %220 : vector<1x256xf32>
    %225 = arith.subf %223, %224 : vector<1x256xf32>
    %cst_109 = arith.constant 0.000000e+00 : f32
    %226 = vector.broadcast %cst_109 : f32 to vector<1x256xf32>
    %227 = arith.maximumf %225, %226 : vector<1x256xf32>
    %c0_110 = arith.constant 0 : index
    %c0_111 = arith.constant 0 : index
    %228 = vector.load %arg9[%c0_110, %c0_111] : memref<2x256xf32, #tpu.memory_space<vmem>>, vector<1x256xf32>
    %cst_112 = arith.constant 9.99999974E-6 : f32
    %229 = vector.broadcast %cst_112 : f32 to vector<1x256xf32>
    %230 = arith.addf %227, %229 : vector<1x256xf32>
    %231 = math.rsqrt %230 : vector<1x256xf32>
    %232 = arith.mulf %228, %231 : vector<1x256xf32>
    %c1_113 = arith.constant 1 : index
    %c0_114 = arith.constant 0 : index
    %233 = vector.load %arg9[%c1_113, %c0_114] : memref<2x256xf32, #tpu.memory_space<vmem>>, vector<1x256xf32>
    %234 = arith.mulf %220, %232 : vector<1x256xf32>
    %235 = arith.subf %233, %234 : vector<1x256xf32>
    %236 = vector.broadcast %232 : vector<1x256xf32> to vector<64x256xf32>
    %237 = arith.mulf %201, %236 : vector<64x256xf32>
    %238 = vector.broadcast %235 : vector<1x256xf32> to vector<64x256xf32>
    %239 = arith.addf %237, %238 : vector<64x256xf32>
    %cst_115 = arith.constant 0.000000e+00 : f32
    %240 = vector.broadcast %cst_115 : f32 to vector<64x256xf32>
    %241 = arith.cmpf ogt, %239, %240 : vector<64x256xf32>
    %242 = math.exp %239 : vector<64x256xf32>
    %cst_116 = arith.constant 1.000000e+00 : f32
    %243 = vector.broadcast %cst_116 : f32 to vector<64x256xf32>
    %244 = arith.subf %242, %243 : vector<64x256xf32>
    %245 = arith.select %241, %239, %244 : vector<64x256xi1>, vector<64x256xf32>
    %c3_i32_117 = arith.constant 3 : i32
    %246 = tpu.memref_slice %arg21[%c3_i32_117] : memref<4x!tpu.dma_semaphore, #tpu.memory_space<semaphore_mem>> -> memref<1x!tpu.dma_semaphore, #tpu.memory_space<semaphore_mem>>
    %247 = tpu.memref_squeeze %246 : memref<1x!tpu.dma_semaphore, #tpu.memory_space<semaphore_mem>> -> memref<!tpu.dma_semaphore, #tpu.memory_space<semaphore_mem>>
    tpu.wait_dma2 semaphore(%247 : memref<!tpu.dma_semaphore, #tpu.memory_space<semaphore_mem>>) src(%arg14 : memref<256x640xf32, #tpu.memory_space<any>>) dst(%arg20 : memref<256x640xf32, #tpu.memory_space<vmem>>)
    %c0_118 = arith.constant 0 : index
    %c0_119 = arith.constant 0 : index
    %248 = vector.load %arg20[%c0_118, %c0_119] : memref<256x640xf32, #tpu.memory_space<vmem>>, vector<256x640xf32>
    %cst_120 = arith.constant dense<0.000000e+00> : vector<64x640xf32>
    %249 = tpu.matmul %245, %248, %cst_120 {dimension_numbers = #tpu.dot_dimension_numbers<[1], [0], [0], [1], [0, 0, 1, 1], [], []>} : vector<64x256xf32>, vector<256x640xf32>, vector<64x640xf32> -> vector<64x640xf32>
    %250 = vector.extract_strided_slice %249 {offsets = [0, 0], sizes = [64, 128], strides = [1, 1]} : vector<64x640xf32> to vector<64x128xf32>
    %c0_121 = arith.constant 0 : index
    %c0_122 = arith.constant 0 : index
    %251 = vector.load %arg16[%c0_121, %c0_122] : memref<320x256xf32, #tpu.memory_space<vmem>>, vector<64x128xf32>
    tpu.vector_store %arg16[%c0_121, %c0_122], %250 {strides = array<i32>} : memref<320x256xf32, #tpu.memory_space<vmem>>, vector<64x128xf32>,
    %252 = vector.extract_strided_slice %249 {offsets = [0, 128], sizes = [64, 128], strides = [1, 1]} : vector<64x640xf32> to vector<64x128xf32>
    %c64_123 = arith.constant 64 : index
    %c0_124 = arith.constant 0 : index
    %253 = vector.load %arg16[%c64_123, %c0_124] : memref<320x256xf32, #tpu.memory_space<vmem>>, vector<64x128xf32>
    tpu.vector_store %arg16[%c64_123, %c0_124], %252 {strides = array<i32>} : memref<320x256xf32, #tpu.memory_space<vmem>>, vector<64x128xf32>,
    %254 = vector.extract_strided_slice %249 {offsets = [0, 256], sizes = [64, 128], strides = [1, 1]} : vector<64x640xf32> to vector<64x128xf32>
    %c128 = arith.constant 128 : index
    %c0_125 = arith.constant 0 : index
    %255 = vector.load %arg16[%c128, %c0_125] : memref<320x256xf32, #tpu.memory_space<vmem>>, vector<64x128xf32>
    tpu.vector_store %arg16[%c128, %c0_125], %254 {strides = array<i32>} : memref<320x256xf32, #tpu.memory_space<vmem>>, vector<64x128xf32>,
    %256 = vector.extract_strided_slice %249 {offsets = [0, 384], sizes = [64, 128], strides = [1, 1]} : vector<64x640xf32> to vector<64x128xf32>
    %c192 = arith.constant 192 : index
    %c0_126 = arith.constant 0 : index
    %257 = vector.load %arg16[%c192, %c0_126] : memref<320x256xf32, #tpu.memory_space<vmem>>, vector<64x128xf32>
    tpu.vector_store %arg16[%c192, %c0_126], %256 {strides = array<i32>} : memref<320x256xf32, #tpu.memory_space<vmem>>, vector<64x128xf32>,
    %258 = vector.extract_strided_slice %249 {offsets = [0, 512], sizes = [64, 128], strides = [1, 1]} : vector<64x640xf32> to vector<64x128xf32>
    %c256 = arith.constant 256 : index
    %c0_127 = arith.constant 0 : index
    %259 = vector.load %arg16[%c256, %c0_127] : memref<320x256xf32, #tpu.memory_space<vmem>>, vector<64x128xf32>
    tpu.vector_store %arg16[%c256, %c0_127], %258 {strides = array<i32>} : memref<320x256xf32, #tpu.memory_space<vmem>>, vector<64x128xf32>,
    %c0_128 = arith.constant 0 : index
    %c0_129 = arith.constant 0 : index
    %260 = vector.load %arg10[%c0_128, %c0_129] : memref<56x320xbf16, #tpu.memory_space<vmem>>, vector<56x320xbf16>
    %261 = arith.extf %260 : vector<56x320xbf16> to vector<56x320xf32>
    %c0_130 = arith.constant 0 : index
    %c0_131 = arith.constant 0 : index
    %262 = vector.load %arg16[%c0_130, %c0_131] : memref<320x256xf32, #tpu.memory_space<vmem>>, vector<320x128xf32>
    %cst_132 = arith.constant dense<0.000000e+00> : vector<56x128xf32>
    %263 = tpu.matmul %261, %262, %cst_132 {dimension_numbers = #tpu.dot_dimension_numbers<[1], [0], [0], [1], [0, 0, 1, 1], [], []>} : vector<56x320xf32>, vector<320x128xf32>, vector<56x128xf32> -> vector<56x128xf32>
    %264 = math.tanh %263 : vector<56x128xf32>
    %c0_133 = arith.constant 0 : index
    %c0_134 = arith.constant 0 : index
    %265 = vector.load %arg15[%c0_133, %c0_134] : memref<56x128xf32, #tpu.memory_space<vmem>>, vector<56x128xf32>
    tpu.vector_store %arg15[%c0_133, %c0_134], %264 {strides = array<i32>} : memref<56x128xf32, #tpu.memory_space<vmem>>, vector<56x128xf32>,
    return
  }
}

</mosaic_0001>

<llo_original>
// kernel: generator_forward.1
$region0: #{generator_forward.1}
  #allocation0 [shape = 'u32[]', space=smem, size = 0x4, offset = 0x4, fixed_abs, tag = 'smem constant byte address 0x4 - core index']
  #allocation1 [shape = 'u32[72,128]{1,0:T(1,128)}', space=vmem, size = 0x9000, scoped, tag = 'internal scratch']
  #allocation2 [shape = 'f32[320,256]{1,0:T(8,128)}', space=vmem, size = 0x50000, scoped, tag = 'scratch operand']
  #allocation3 [shape = 'f32[256,1024]{1,0:T(8,128)}', space=vmem, size = 0x100000, scoped, tag = 'scratch operand']
  #allocation4 [shape = 'f32[256,1024]{1,0:T(8,128)}', space=vmem, size = 0x100000, scoped, tag = 'scratch operand']
  #allocation5 [shape = 'f32[256,1024]{1,0:T(8,128)}', space=vmem, size = 0x100000, scoped, tag = 'scratch operand']
  #allocation6 [shape = 'f32[256,640]{1,0:T(8,128)}', space=vmem, size = 0xa0000, scoped, tag = 'scratch operand']
  #allocation7 [shape = 's32[4]{0}', space=sflag, size = 0x10, scoped, tag = 'scratch operand']
  #allocation20 [shape = 's32[]', space=sflag, size = 0x4, offset = 0, fixed_abs, tag = 'sflag constant byte address 0x0 - dummy sync flag']
  #allocation21 [shape = 's32[]', space=sflag, size = 0x4, offset = 0, fixed_abs, tag = 'sflag constant byte address 0x0 - dummy sync flag']
  #allocation22 [shape = 'u32[]', space=smem, size = 0x4, offset = 0x44, fixed_abs, tag = 'smem constant byte address 0x44 - assertion arg 0']
  #allocation23 [shape = 'u32[]', space=smem, size = 0x4, offset = 0x48, fixed_abs, tag = 'smem constant byte address 0x48 - assertion arg 1']
  #allocation24 [shape = 's32[]', space=sflag, size = 0x4, offset = 0, fixed_abs, tag = 'sflag constant byte address 0x0 - dummy sync flag']
  #allocation25 [shape = 's32[]', space=sflag, size = 0x4, offset = 0, fixed_abs, tag = 'sflag constant byte address 0x0 - dummy sync flag']
  #allocation26 [shape = 's32[]', space=sflag, size = 0x4, offset = 0, fixed_abs, tag = 'sflag constant byte address 0x0 - dummy sync flag']
  #allocation27 [shape = 's32[]', space=sflag, size = 0x4, offset = 0, fixed_abs, tag = 'sflag constant byte address 0x0 - dummy sync flag']
  #allocation28 [shape = 's32[]', space=sflag, size = 0x4, offset = 0, fixed_abs, tag = 'sflag constant byte address 0x0 - dummy sync flag']
  #allocation29 [shape = 's32[]', space=sflag, size = 0x4, offset = 0, fixed_abs, tag = 'sflag constant byte address 0x0 - dummy sync flag']
  %s0 = inlined_call_operand.vmem [shape: f32[2,16], index: 0, kind: input, shape index: {}]
  %s1 = inlined_call_operand.vmem [shape: bf16[4,8,2], index: 1, kind: input, shape index: {}]
  %s2 = inlined_call_operand.hbm [shape: f32[16,1024], index: 2, kind: input, shape index: {}]
  %s3 = inlined_call_operand.hbm [shape: f32[2,256], index: 3, kind: input, shape index: {}]
  %s4 = inlined_call_operand.vmem [shape: bf16[16,32], index: 4, kind: input, shape index: {}]
  %s5 = inlined_call_operand.hbm [shape: f32[2,256], index: 5, kind: input, shape index: {}]
  %s6 = inlined_call_operand.vmem [shape: bf16[32,64], index: 6, kind: input, shape index: {}]
  %s7 = inlined_call_operand.hbm [shape: f32[2,256], index: 7, kind: input, shape index: {}]
  %s8 = inlined_call_operand.hbm [shape: bf16[64,128], index: 8, kind: input, shape index: {}]
  %s9 = inlined_call_operand.vmem [shape: f32[2,256], index: 9, kind: input, shape index: {}]
  %s10 = inlined_call_operand.hbm [shape: bf16[56,320], index: 10, kind: input, shape index: {}]
  %s11 = inlined_call_operand.hbm [shape: f32[256,1024], index: 11, kind: input, shape index: {}]
  %s12 = inlined_call_operand.hbm [shape: f32[256,1024], index: 12, kind: input, shape index: {}]
  %s13 = inlined_call_operand.hbm [shape: f32[256,1024], index: 13, kind: input, shape index: {}]
  %s14 = inlined_call_operand.hbm [shape: f32[256,640], index: 14, kind: input, shape index: {}]
  %s15 = inlined_call_operand.hbm [shape: f32[56,128], index: 15, kind: output, shape index: {}]
  %s16 = sld [smem:[#allocation0]]
  $region94: #{generator_forward.1} parent=0
    _
  %s18 = ssub.s32 1, %s16
  %s19 = scalar_select 0, %s18, %s16
  $region1: #{generator_forward.1} parent=0
    #allocation8 [shape = 'u8[65536]{0}', space=vmem, size = 0x10000, scoped, tag = 'input window, operand 2, single buffered']
    #allocation9 [shape = 's32[1]{0}', space=sflag, size = 0x4, scoped, tag = 'scoped memory for generator_forward.1']
    #allocation10 [shape = 's32[1]{0}', space=sflag, size = 0x4, scoped, tag = 'scoped memory for generator_forward.1']
    #allocation11 [shape = 'u8[2048]{0}', space=vmem, size = 0x800, scoped, tag = 'input window, operand 3, single buffered']
    #allocation12 [shape = 's32[1]{0}', space=sflag, size = 0x4, scoped, tag = 'scoped memory for generator_forward.1']
    #allocation13 [shape = 'u8[2048]{0}', space=vmem, size = 0x800, scoped, tag = 'input window, operand 5, single buffered']
    #allocation14 [shape = 'u8[2048]{0}', space=vmem, size = 0x800, scoped, tag = 'input window, operand 7, single buffered']
    #allocation15 [shape = 's32[1]{0}', space=sflag, size = 0x4, scoped, tag = 'scoped memory for generator_forward.1']
    #allocation16 [shape = 'u8[16384]{0}', space=vmem, size = 0x4000, scoped, tag = 'input window, operand 8, single buffered']
    #allocation17 [shape = 'u8[43008]{0}', space=vmem, size = 0xa800, scoped, tag = 'input window, operand 10, single buffered']
    #allocation18 [shape = 's32[1]{0}', space=sflag, size = 0x4, scoped, tag = 'scoped memory for generator_forward.1']
    #allocation19 [shape = 'u8[28672]{0}', space=vmem, size = 0x7000, scoped, tag = 'output window, operand 0, single buffered']
    %20 = vsyncpa [#allocation9], 0
    %21 = vsyncpa [#allocation12], 0
    %22 = vsyncpa [#allocation15], 0
    %23 = vsyncpa [#allocation18], 0
    %24 = vsyncpa [#allocation10], 0
    // Predicated region
    $region2: #{generator_forward.1} parent=1 // pred_check
      _
    $region3: #{generator_forward.1} parent=1 // pred_check_branch
      %26 = sbr.rel (0) target = $region5
    $region4: #{generator_forward.1} parent=1 // pred_region
      _
    $region5: #{generator_forward.1} parent=1 // pred_fallthru
      _
    // Predicated region
    $region6: #{generator_forward.1} parent=1 // pred_check
      _
    $region7: #{generator_forward.1} parent=1 // pred_check_branch
      %28 = sbr.rel (0) target = $region9
    $region8: #{generator_forward.1} parent=1 // pred_region
      _
    $region9: #{generator_forward.1} parent=1 // pred_fallthru
      _
    // Predicated region
    $region10: #{generator_forward.1} parent=1 // pred_check
      _
    $region11: #{generator_forward.1} parent=1 // pred_check_branch
      %30 = sbr.rel (0) target = $region13
    $region12: #{generator_forward.1} parent=1 // pred_region
      %32 = vsyncadd [#allocation9], 0
      %s33 = sshll.u32 %s2, 4
      %s34 = int_to_ptr.hbm [resolvable:$true] %s33
      %s35 = sshll.u32 [#allocation8], 4
      %s36 = int_to_ptr.vmem [resolvable:$true] %s35
      %41 = dma.hbm_to_vmem [thread:$0]  %s34, 2048, %s36, [#allocation9], 1024, 1024, 64
    $region13: #{generator_forward.1} parent=1 // pred_fallthru
      _
    // Predicated region
    $region14: #{generator_forward.1} parent=1 // pred_check
      _
    $region15: #{generator_forward.1} parent=1 // pred_check_branch
      %43 = sbr.rel (0) target = $region17
    $region16: #{generator_forward.1} parent=1 // pred_region
      %45 = vsyncadd [#allocation12], 0
      %s47 = sshll.u32 %s3, 4
      %s48 = int_to_ptr.hbm [resolvable:$true] %s47
      %s49 = sshll.u32 [#allocation11], 4
      %s50 = int_to_ptr.vmem [resolvable:$true] %s49
      %52 = dma.hbm_to_vmem [thread:$0]  %s48, 64, %s50, [#allocation12]
    $region17: #{generator_forward.1} parent=1 // pred_fallthru
      _
    // Predicated region
    $region18: #{generator_forward.1} parent=1 // pred_check
      _
    $region19: #{generator_forward.1} parent=1 // pred_check_branch
      %54 = sbr.rel (0) target = $region21
    $region20: #{generator_forward.1} parent=1 // pred_region
      _
    $region21: #{generator_forward.1} parent=1 // pred_fallthru
      _
    // Predicated region
    $region22: #{generator_forward.1} parent=1 // pred_check
      _
    $region23: #{generator_forward.1} parent=1 // pred_check_branch
      %56 = sbr.rel (0) target = $region25
    $region24: #{generator_forward.1} parent=1 // pred_region
      %58 = vsyncadd [#allocation12], 0
      %s60 = sshll.u32 %s5, 4
      %s61 = int_to_ptr.hbm [resolvable:$true] %s60
      %s62 = sshll.u32 [#allocation13], 4
      %s63 = int_to_ptr.vmem [resolvable:$true] %s62
      %65 = dma.hbm_to_vmem [thread:$0]  %s61, 64, %s63, [#allocation12]
    $region25: #{generator_forward.1} parent=1 // pred_fallthru
      _
    // Predicated region
    $region26: #{generator_forward.1} parent=1 // pred_check
      _
    $region27: #{generator_forward.1} parent=1 // pred_check_branch
      %67 = sbr.rel (0) target = $region29
    $region28: #{generator_forward.1} parent=1 // pred_region
      _
    $region29: #{generator_forward.1} parent=1 // pred_fallthru
      _
    // Predicated region
    $region30: #{generator_forward.1} parent=1 // pred_check
      _
    $region31: #{generator_forward.1} parent=1 // pred_check_branch
      %69 = sbr.rel (0) target = $region33
    $region32: #{generator_forward.1} parent=1 // pred_region
      %71 = vsyncadd [#allocation15], 0
      %s73 = sshll.u32 %s7, 4
      %s74 = int_to_ptr.hbm [resolvable:$true] %s73
      %s75 = sshll.u32 [#allocation14], 4
      %s76 = int_to_ptr.vmem [resolvable:$true] %s75
      %78 = dma.hbm_to_vmem [thread:$0]  %s74, 64, %s76, [#allocation15]
    $region33: #{generator_forward.1} parent=1 // pred_fallthru
      _
    // Predicated region
    $region34: #{generator_forward.1} parent=1 // pred_check
      _
    $region35: #{generator_forward.1} parent=1 // pred_check_branch
      %80 = sbr.rel (0) target = $region37
    $region36: #{generator_forward.1} parent=1 // pred_region
      %82 = vsyncadd [#allocation15], 0
      %s83 = sshll.u32 %s8, 4
      %s84 = int_to_ptr.hbm [resolvable:$true] %s83
      %s85 = sshll.u32 [#allocation16], 4
      %s86 = int_to_ptr.vmem [resolvable:$true] %s85
      %91 = dma.hbm_to_vmem [thread:$0]  %s84, 512, %s86, [#allocation15], 64, 64, 4
    $region37: #{generator_forward.1} parent=1 // pred_fallthru
      _
    // Predicated region
    $region38: #{generator_forward.1} parent=1 // pred_check
      _
    $region39: #{generator_forward.1} parent=1 // pred_check_branch
      %93 = sbr.rel (0) target = $region41
    $region40: #{generator_forward.1} parent=1 // pred_region
      _
    $region41: #{generator_forward.1} parent=1 // pred_fallthru
      _
    // Predicated region
    $region42: #{generator_forward.1} parent=1 // pred_check
      _
    $region43: #{generator_forward.1} parent=1 // pred_check_branch
      %95 = sbr.rel (0) target = $region45
    $region44: #{generator_forward.1} parent=1 // pred_region
      %97 = vsyncadd [#allocation18], 0
      %s98 = sshll.u32 %s10, 4
      %s99 = int_to_ptr.hbm [resolvable:$true] %s98
      %s100 = sshll.u32 [#allocation17], 4
      %s101 = int_to_ptr.vmem [resolvable:$true] %s100
      %106 = dma.hbm_to_vmem [thread:$0]  %s99, 1344, %s101, [#allocation18], 192, 192, 12
    $region45: #{generator_forward.1} parent=1 // pred_fallthru
      _
    // Predicated region
    $region46: #{generator_forward.1} parent=1 // pred_check
      _
    $region47: #{generator_forward.1} parent=1 // pred_check_branch
      %108 = sbr.rel (0) target = $region49
    $region48: #{generator_forward.1} parent=1 // pred_region
      %110 = dma.done [#allocation9], 2048
    $region49: #{generator_forward.1} parent=1 // pred_fallthru
      _
    // Predicated region
    $region50: #{generator_forward.1} parent=1 // pred_check
      _
    $region51: #{generator_forward.1} parent=1 // pred_check_branch
      %112 = sbr.rel (0) target = $region53
    $region52: #{generator_forward.1} parent=1 // pred_region
      %114 = dma.done [#allocation12], 64
    $region53: #{generator_forward.1} parent=1 // pred_fallthru
      _
    // Predicated region
    $region54: #{generator_forward.1} parent=1 // pred_check
      _
    $region55: #{generator_forward.1} parent=1 // pred_check_branch
      %116 = sbr.rel (0) target = $region57
    $region56: #{generator_forward.1} parent=1 // pred_region
      %118 = dma.done [#allocation12], 64
    $region57: #{generator_forward.1} parent=1 // pred_fallthru
      _
    // Predicated region
    $region58: #{generator_forward.1} parent=1 // pred_check
      _
    $region59: #{generator_forward.1} parent=1 // pred_check_branch
      %120 = sbr.rel (0) target = $region61
    $region60: #{generator_forward.1} parent=1 // pred_region
      %122 = dma.done [#allocation15], 64
    $region61: #{generator_forward.1} parent=1 // pred_fallthru
      _
    // Predicated region
    $region62: #{generator_forward.1} parent=1 // pred_check
      _
    $region63: #{generator_forward.1} parent=1 // pred_check_branch
      %124 = sbr.rel (0) target = $region65
    $region64: #{generator_forward.1} parent=1 // pred_region
      %126 = dma.done [#allocation15], 512
    $region65: #{generator_forward.1} parent=1 // pred_fallthru
      _
    // Predicated region
    $region66: #{generator_forward.1} parent=1 // pred_check
      _
    $region67: #{generator_forward.1} parent=1 // pred_check_branch
      %128 = sbr.rel (0) target = $region69
    $region68: #{generator_forward.1} parent=1 // pred_region
      %130 = dma.done [#allocation18], 1344
    $region69: #{generator_forward.1} parent=1 // pred_fallthru
      _
    // Predicated region
    $region70: #{generator_forward.1} parent=1 // pred_check
      _
    $region71: #{generator_forward.1} parent=1 // pred_check_branch
      %132 = sbr.rel target = $region73
    $region72: #{generator_forward.1} parent=1 // pred_region
      %133 = sst [smem:[#allocation22]] [#allocation21]
      %134 = sst [smem:[#allocation23]] [#allocation20]
    $region73: #{generator_forward.1} parent=1 // pred_fallthru
      _
    %136 = shalt.err (0)
    %s138 = sshll.u32 %s11, 4
    %s139 = int_to_ptr.hbm [resolvable:$true] %s138
    %s140 = sshll.u32 [#allocation3], 4
    %s141 = int_to_ptr.vmem [resolvable:$true] %s140
    %143 = dma.hbm_to_vmem [thread:$0]  %s139, 32768, %s141, [#allocation7]
    %s144 = scalar_lea.sflag [#allocation7], 1
    // Predicated region
    $region74: #{generator_forward.1} parent=1 // pred_check
      _
    $region75: #{generator_forward.1} parent=1 // pred_check_branch
      %146 = sbr.rel target = $region77
    $region76: #{generator_forward.1} parent=1 // pred_region
      %147 = sst [smem:[#allocation22]] [#allocation25]
      %148 = sst [smem:[#allocation23]] [#allocation24]
    $region77: #{generator_forward.1} parent=1 // pred_fallthru
      _
    %150 = shalt.err (0)
    %s152 = sshll.u32 %s12, 4
    %s153 = int_to_ptr.hbm [resolvable:$true] %s152
    %s154 = sshll.u32 [#allocation4], 4
    %s155 = int_to_ptr.vmem [resolvable:$true] %s154
    %157 = dma.hbm_to_vmem [thread:$0]  %s153, 32768, %s155, %s144
    %s158 = scalar_lea.sflag [#allocation7], 2
    // Predicated region
    $region78: #{generator_forward.1} parent=1 // pred_check
      _
    $region79: #{generator_forward.1} parent=1 // pred_check_branch
      %160 = sbr.rel target = $region81
    $region80: #{generator_forward.1} parent=1 // pred_region
      %161 = sst [smem:[#allocation22]] [#allocation27]
      %162 = sst [smem:[#allocation23]] [#allocation26]
    $region81: #{generator_forward.1} parent=1 // pred_fallthru
      _
    %164 = shalt.err (0)
    %s166 = sshll.u32 %s13, 4
    %s167 = int_to_ptr.hbm [resolvable:$true] %s166
    %s168 = sshll.u32 [#allocation5], 4
    %s169 = int_to_ptr.vmem [resolvable:$true] %s168
    %171 = dma.hbm_to_vmem [thread:$0]  %s167, 32768, %s169, %s158
    %s172 = scalar_lea.sflag [#allocation7], 3
    // Predicated region
    $region82: #{generator_forward.1} parent=1 // pred_check
      _
    $region83: #{generator_forward.1} parent=1 // pred_check_branch
      %174 = sbr.rel target = $region85
    $region84: #{generator_forward.1} parent=1 // pred_region
      %175 = sst [smem:[#allocation22]] [#allocation29]
      %176 = sst [smem:[#allocation23]] [#allocation28]
    $region85: #{generator_forward.1} parent=1 // pred_fallthru
      _
    %178 = shalt.err (0)
    %s180 = sshll.u32 %s14, 4
    %s181 = int_to_ptr.hbm [resolvable:$true] %s180
    %s182 = sshll.u32 [#allocation6], 4
    %s183 = int_to_ptr.vmem [resolvable:$true] %s182
    %185 = dma.hbm_to_vmem [thread:$0]  %s181, 20480, %s183, %s172
    %v186 = vld [vmem:[%s0] sm:$0x3]
    %v187 = vld [vmem:[#allocation8] sm:$0xff]
    %v188 = vld [vmem:[#allocation8 + $0x8] sm:$0xff]
    %v189 = vld [vmem:[#allocation8 + $0x10] sm:$0xff]
    %v190 = vld [vmem:[#allocation8 + $0x18] sm:$0xff]
    %v191 = vld [vmem:[#allocation8 + $0x20] sm:$0xff]
    %v192 = vld [vmem:[#allocation8 + $0x28] sm:$0xff]
    %v193 = vld [vmem:[#allocation8 + $0x30] sm:$0xff]
    %v194 = vld [vmem:[#allocation8 + $0x38] sm:$0xff]
    %v195 = vld [vmem:[#allocation8 + $0x40] sm:$0xff]
    %v196 = vld [vmem:[#allocation8 + $0x48] sm:$0xff]
    %v197 = vld [vmem:[#allocation8 + $0x50] sm:$0xff]
    %v198 = vld [vmem:[#allocation8 + $0x58] sm:$0xff]
    %v199 = vld [vmem:[#allocation8 + $0x60] sm:$0xff]
    %v200 = vld [vmem:[#allocation8 + $0x68] sm:$0xff]
    %v201 = vld [vmem:[#allocation8 + $0x70] sm:$0xff]
    %v202 = vld [vmem:[#allocation8 + $0x78] sm:$0xff]
    %vm203 = vcmask 130048
    %v205 = vsel %vm203, %v186, 0
    %207 = vmatpush.msra.mxu0 0.0
    %208 = vmatpush.msra.mxu0 0.0
    %209 = vmatpush.msra.mxu0 0.0
    %210 = vmatpush.msra.mxu0 0.0
    %211 = vmatpush.msra.mxu0 0.0
    %212 = vmatpush.msra.mxu0 0.0
    %213 = vmatpush.msra.mxu0 0.0
    %214 = vmatpush.msra.mxu0 0.0
    %215 = vmatpush.msra.mxu0 0.0
    %216 = vmatpush.msra.mxu0 0.0
    %217 = vmatpush.msra.mxu0 0.0
    %218 = vmatpush.msra.mxu0 0.0
    %219 = vmatpush.msra.mxu0 0.0
    %220 = vmatpush.msra.mxu0 0.0
    %221 = vmatpush.msra.mxu0 %v195
    %222 = vmatpush.msra.mxu0 %v187
    %223 = vmatmul.f32.gmra.mxu0 %v205
    %v224 = vpop.f32.mrf.mxu0
    %v225 = vadd.f32 0.0, %v224
    %226 = vdwg.mxu0
    %227 = vmatpush.msra.mxu0 0.0
    %228 = vmatpush.msra.mxu0 0.0
    %229 = vmatpush.msra.mxu0 0.0
    %230 = vmatpush.msra.mxu0 0.0
    %231 = vmatpush.msra.mxu0 0.0
    %232 = vmatpush.msra.mxu0 0.0
    %233 = vmatpush.msra.mxu0 0.0
    %234 = vmatpush.msra.mxu0 0.0
    %235 = vmatpush.msra.mxu0 0.0
    %236 = vmatpush.msra.mxu0 0.0
    %237 = vmatpush.msra.mxu0 0.0
    %238 = vmatpush.msra.mxu0 0.0
    %239 = vmatpush.msra.mxu0 0.0
    %240 = vmatpush.msra.mxu0 0.0
    %241 = vmatpush.msra.mxu0 %v196
    %242 = vmatpush.msra.mxu0 %v188
    %243 = vmatmul.f32.gmra.mxu0 %v205
    %v244 = vpop.f32.mrf.mxu0
    %v245 = vadd.f32 0.0, %v244
    %246 = vdwg.mxu0
    %247 = vmatpush.msra.mxu0 0.0
    %248 = vmatpush.msra.mxu0 0.0
    %249 = vmatpush.msra.mxu0 0.0
    %250 = vmatpush.msra.mxu0 0.0
    %251 = vmatpush.msra.mxu0 0.0
    %252 = vmatpush.msra.mxu0 0.0
    %253 = vmatpush.msra.mxu0 0.0
    %254 = vmatpush.msra.mxu0 0.0
    %255 = vmatpush.msra.mxu0 0.0
    %256 = vmatpush.msra.mxu0 0.0
    %257 = vmatpush.msra.mxu0 0.0
    %258 = vmatpush.msra.mxu0 0.0
    %259 = vmatpush.msra.mxu0 0.0
    %260 = vmatpush.msra.mxu0 0.0
    %261 = vmatpush.msra.mxu0 %v197
    %262 = vmatpush.msra.mxu0 %v189
    %263 = vmatmul.f32.gmra.mxu0 %v205
    %v264 = vpop.f32.mrf.mxu0
    %v265 = vadd.f32 0.0, %v264
    %266 = vdwg.mxu0
    %267 = vmatpush.msra.mxu0 0.0
    %268 = vmatpush.msra.mxu0 0.0
    %269 = vmatpush.msra.mxu0 0.0
    %270 = vmatpush.msra.mxu0 0.0
    %271 = vmatpush.msra.mxu0 0.0
    %272 = vmatpush.msra.mxu0 0.0
    %273 = vmatpush.msra.mxu0 0.0
    %274 = vmatpush.msra.mxu0 0.0
    %275 = vmatpush.msra.mxu0 0.0
    %276 = vmatpush.msra.mxu0 0.0
    %277 = vmatpush.msra.mxu0 0.0
    %278 = vmatpush.msra.mxu0 0.0
    %279 = vmatpush.msra.mxu0 0.0
    %280 = vmatpush.msra.mxu0 0.0
    %281 = vmatpush.msra.mxu0 %v198
    %282 = vmatpush.msra.mxu0 %v190
    %283 = vmatmul.f32.gmra.mxu0 %v205
    %v284 = vpop.f32.mrf.mxu0
    %v285 = vadd.f32 0.0, %v284
    %286 = vdwg.mxu0
    %287 = vmatpush.msra.mxu0 0.0
    %288 = vmatpush.msra.mxu0 0.0
    %289 = vmatpush.msra.mxu0 0.0
    %290 = vmatpush.msra.mxu0 0.0
    %291 = vmatpush.msra.mxu0 0.0
    %292 = vmatpush.msra.mxu0 0.0
    %293 = vmatpush.msra.mxu0 0.0
    %294 = vmatpush.msra.mxu0 0.0
    %295 = vmatpush.msra.mxu0 0.0
    %296 = vmatpush.msra.mxu0 0.0
    %297 = vmatpush.msra.mxu0 0.0
    %298 = vmatpush.msra.mxu0 0.0
    %299 = vmatpush.msra.mxu0 0.0
    %300 = vmatpush.msra.mxu0 0.0
    %301 = vmatpush.msra.mxu0 %v199
    %302 = vmatpush.msra.mxu0 %v191
    %303 = vmatmul.f32.gmra.mxu0 %v205
    %v304 = vpop.f32.mrf.mxu0
    %v305 = vadd.f32 0.0, %v304
    %306 = vdwg.mxu0
    %307 = vmatpush.msra.mxu0 0.0
    %308 = vmatpush.msra.mxu0 0.0
    %309 = vmatpush.msra.mxu0 0.0
    %310 = vmatpush.msra.mxu0 0.0
    %311 = vmatpush.msra.mxu0 0.0
    %312 = vmatpush.msra.mxu0 0.0
    %313 = vmatpush.msra.mxu0 0.0
    %314 = vmatpush.msra.mxu0 0.0
    %315 = vmatpush.msra.mxu0 0.0
    %316 = vmatpush.msra.mxu0 0.0
    %317 = vmatpush.msra.mxu0 0.0
    %318 = vmatpush.msra.mxu0 0.0
    %319 = vmatpush.msra.mxu0 0.0
    %320 = vmatpush.msra.mxu0 0.0
    %321 = vmatpush.msra.mxu0 %v200
    %322 = vmatpush.msra.mxu0 %v192
    %323 = vmatmul.f32.gmra.mxu0 %v205
    %v324 = vpop.f32.mrf.mxu0
    %v325 = vadd.f32 0.0, %v324
    %326 = vdwg.mxu0
    %327 = vmatpush.msra.mxu0 0.0
    %328 = vmatpush.msra.mxu0 0.0
    %329 = vmatpush.msra.mxu0 0.0
    %330 = vmatpush.msra.mxu0 0.0
    %331 = vmatpush.msra.mxu0 0.0
    %332 = vmatpush.msra.mxu0 0.0
    %333 = vmatpush.msra.mxu0 0.0
    %334 = vmatpush.msra.mxu0 0.0
    %335 = vmatpush.msra.mxu0 0.0
    %336 = vmatpush.msra.mxu0 0.0
    %337 = vmatpush.msra.mxu0 0.0
    %338 = vmatpush.msra.mxu0 0.0
    %339 = vmatpush.msra.mxu0 0.0
    %340 = vmatpush.msra.mxu0 0.0
    %341 = vmatpush.msra.mxu0 %v201
    %342 = vmatpush.msra.mxu0 %v193
    %343 = vmatmul.f32.gmra.mxu0 %v205
    %v344 = vpop.f32.mrf.mxu0
    %v345 = vadd.f32 0.0, %v344
    %346 = vdwg.mxu0
    %347 = vmatpush.msra.mxu0 0.0
    %348 = vmatpush.msra.mxu0 0.0
    %349 = vmatpush.msra.mxu0 0.0
    %350 = vmatpush.msra.mxu0 0.0
    %351 = vmatpush.msra.mxu0 0.0
    %352 = vmatpush.msra.mxu0 0.0
    %353 = vmatpush.msra.mxu0 0.0
    %354 = vmatpush.msra.mxu0 0.0
    %355 = vmatpush.msra.mxu0 0.0
    %356 = vmatpush.msra.mxu0 0.0
    %357 = vmatpush.msra.mxu0 0.0
    %358 = vmatpush.msra.mxu0 0.0
    %359 = vmatpush.msra.mxu0 0.0
    %360 = vmatpush.msra.mxu0 0.0
    %361 = vmatpush.msra.mxu0 %v202
    %362 = vmatpush.msra.mxu0 %v194
    %363 = vmatmul.f32.gmra.mxu0 %v205
    %v364 = vpop.f32.mrf.mxu0
    %v365 = vadd.f32 0.0, %v364
    %366 = vdwg.mxu0
    %v367 = vld [vmem:[%s1] sm:$0xf]
    %v368 = vunpack.c.l.bf16 %v367
    %s369 = scalar_lea.vmem %s1, 4
    %v370 = vld [vmem:[%s369] sm:$0xf]
    %v371 = vunpack.c.l.bf16 %v370
    %vm372 = vcmask 15360
    %v374 = vsel %vm372, %v371, 0
    %vm376 = vcmask 1041408
    %v378 = vsel %vm376, %v265, 0
    %v381 = vsel %vm376, %v285, 0
    %383 = vmatpush.msra.mxu0 0.0
    %384 = vmatpush.msra.mxu0 0.0
    %385 = vmatpush.msra.mxu0 0.0
    %386 = vmatpush.msra.mxu0 0.0
    %387 = vmatpush.msra.mxu0 0.0
    %388 = vmatpush.msra.mxu0 0.0
    %389 = vmatpush.msra.mxu0 0.0
    %390 = vmatpush.msra.mxu0 0.0
    %391 = vmatpush.msra.mxu0 0.0
    %392 = vmatpush.msra.mxu0 0.0
    %393 = vmatpush.msra.mxu0 0.0
    %394 = vmatpush.msra.mxu0 0.0
    %395 = vmatpush.msra.mxu0 0.0
    %396 = vmatpush.msra.mxu0 0.0
    %397 = vmatpush.msra.mxu0 0.0
    %398 = vmatpush.msra.mxu0 %v378
    %399 = vmatmul.f32.gmra.mxu0 %v374
    %v400 = vpop.f32.mrf.mxu0
    %v401 = vadd.f32 0.0, %v400
    %402 = vdwg.mxu0
    %403 = vmatpush.msra.mxu0 0.0
    %404 = vmatpush.msra.mxu0 0.0
    %405 = vmatpush.msra.mxu0 0.0
    %406 = vmatpush.msra.mxu0 0.0
    %407 = vmatpush.msra.mxu0 0.0
    %408 = vmatpush.msra.mxu0 0.0
    %409 = vmatpush.msra.mxu0 0.0
    %410 = vmatpush.msra.mxu0 0.0
    %411 = vmatpush.msra.mxu0 0.0
    %412 = vmatpush.msra.mxu0 0.0
    %413 = vmatpush.msra.mxu0 0.0
    %414 = vmatpush.msra.mxu0 0.0
    %415 = vmatpush.msra.mxu0 0.0
    %416 = vmatpush.msra.mxu0 0.0
    %417 = vmatpush.msra.mxu0 0.0
    %418 = vmatpush.msra.mxu0 %v381
    %419 = vmatmul.f32.gmra.mxu0 %v374
    %v420 = vpop.f32.mrf.mxu0
    %v421 = vadd.f32 0.0, %v420
    %422 = vdwg.mxu0
    %v424 = vsel %vm372, %v368, 0
    %v427 = vsel %vm376, %v225, 0
    %v430 = vsel %vm376, %v245, 0
    %432 = vmatpush.msra.mxu0 0.0
    %433 = vmatpush.msra.mxu0 0.0
    %434 = vmatpush.msra.mxu0 0.0
    %435 = vmatpush.msra.mxu0 0.0
    %436 = vmatpush.msra.mxu0 0.0
    %437 = vmatpush.msra.mxu0 0.0
    %438 = vmatpush.msra.mxu0 0.0
    %439 = vmatpush.msra.mxu0 0.0
    %440 = vmatpush.msra.mxu0 0.0
    %441 = vmatpush.msra.mxu0 0.0
    %442 = vmatpush.msra.mxu0 0.0
    %443 = vmatpush.msra.mxu0 0.0
    %444 = vmatpush.msra.mxu0 0.0
    %445 = vmatpush.msra.mxu0 0.0
    %446 = vmatpush.msra.mxu0 0.0
    %447 = vmatpush.msra.mxu0 %v427
    %448 = vmatmul.f32.gmra.mxu0 %v424
    %v449 = vpop.f32.mrf.mxu0
    %v450 = vadd.f32 %v401, %v449
    %451 = vdwg.mxu0
    %452 = vmatpush.msra.mxu0 0.0
    %453 = vmatpush.msra.mxu0 0.0
    %454 = vmatpush.msra.mxu0 0.0
    %455 = vmatpush.msra.mxu0 0.0
    %456 = vmatpush.msra.mxu0 0.0
    %457 = vmatpush.msra.mxu0 0.0
    %458 = vmatpush.msra.mxu0 0.0
    %459 = vmatpush.msra.mxu0 0.0
    %460 = vmatpush.msra.mxu0 0.0
    %461 = vmatpush.msra.mxu0 0.0
    %462 = vmatpush.msra.mxu0 0.0
    %463 = vmatpush.msra.mxu0 0.0
    %464 = vmatpush.msra.mxu0 0.0
    %465 = vmatpush.msra.mxu0 0.0
    %466 = vmatpush.msra.mxu0 0.0
    %467 = vmatpush.msra.mxu0 %v430
    %468 = vmatmul.f32.gmra.mxu0 %v424
    %v469 = vpop.f32.mrf.mxu0
    %v470 = vadd.f32 %v421, %v469
    %471 = vdwg.mxu0
    %s472 = scalar_lea.vmem %s1, 8
    %v473 = vld [vmem:[%s472] sm:$0xf]
    %v474 = vunpack.c.l.bf16 %v473
    %v476 = vsel %vm372, %v474, 0
    %v479 = vsel %vm376, %v305, 0
    %v482 = vsel %vm376, %v325, 0
    %484 = vmatpush.msra.mxu0 0.0
    %485 = vmatpush.msra.mxu0 0.0
    %486 = vmatpush.msra.mxu0 0.0
    %487 = vmatpush.msra.mxu0 0.0
    %488 = vmatpush.msra.mxu0 0.0
    %489 = vmatpush.msra.mxu0 0.0
    %490 = vmatpush.msra.mxu0 0.0
    %491 = vmatpush.msra.mxu0 0.0
    %492 = vmatpush.msra.mxu0 0.0
    %493 = vmatpush.msra.mxu0 0.0
    %494 = vmatpush.msra.mxu0 0.0
    %495 = vmatpush.msra.mxu0 0.0
    %496 = vmatpush.msra.mxu0 0.0
    %497 = vmatpush.msra.mxu0 0.0
    %498 = vmatpush.msra.mxu0 0.0
    %499 = vmatpush.msra.mxu0 %v479
    %500 = vmatmul.f32.gmra.mxu0 %v476
    %v501 = vpop.f32.mrf.mxu0
    %v502 = vadd.f32 0.0, %v501
    %503 = vdwg.mxu0
    %504 = vmatpush.msra.mxu0 0.0
    %505 = vmatpush.msra.mxu0 0.0
    %506 = vmatpush.msra.mxu0 0.0
    %507 = vmatpush.msra.mxu0 0.0
    %508 = vmatpush.msra.mxu0 0.0
    %509 = vmatpush.msra.mxu0 0.0
    %510 = vmatpush.msra.mxu0 0.0
    %511 = vmatpush.msra.mxu0 0.0
    %512 = vmatpush.msra.mxu0 0.0
    %513 = vmatpush.msra.mxu0 0.0
    %514 = vmatpush.msra.mxu0 0.0
    %515 = vmatpush.msra.mxu0 0.0
    %516 = vmatpush.msra.mxu0 0.0
    %517 = vmatpush.msra.mxu0 0.0
    %518 = vmatpush.msra.mxu0 0.0
    %519 = vmatpush.msra.mxu0 %v482
    %520 = vmatmul.f32.gmra.mxu0 %v476
    %v521 = vpop.f32.mrf.mxu0
    %v522 = vadd.f32 0.0, %v521
    %523 = vdwg.mxu0
    %v524 = vadd.f32 %v450, %v502
    %v525 = vadd.f32 %v470, %v522
    %s526 = scalar_lea.vmem %s1, 12
    %v527 = vld [vmem:[%s526] sm:$0xf]
    %v528 = vunpack.c.l.bf16 %v527
    %v530 = vsel %vm372, %v528, 0
    %v533 = vsel %vm376, %v345, 0
    %v536 = vsel %vm376, %v365, 0
    %538 = vmatpush.msra.mxu0 0.0
    %539 = vmatpush.msra.mxu0 0.0
    %540 = vmatpush.msra.mxu0 0.0
    %541 = vmatpush.msra.mxu0 0.0
    %542 = vmatpush.msra.mxu0 0.0
    %543 = vmatpush.msra.mxu0 0.0
    %544 = vmatpush.msra.mxu0 0.0
    %545 = vmatpush.msra.mxu0 0.0
    %546 = vmatpush.msra.mxu0 0.0
    %547 = vmatpush.msra.mxu0 0.0
    %548 = vmatpush.msra.mxu0 0.0
    %549 = vmatpush.msra.mxu0 0.0
    %550 = vmatpush.msra.mxu0 0.0
    %551 = vmatpush.msra.mxu0 0.0
    %552 = vmatpush.msra.mxu0 0.0
    %553 = vmatpush.msra.mxu0 %v533
    %554 = vmatmul.f32.gmra.mxu0 %v530
    %v555 = vpop.f32.mrf.mxu0
    %v556 = vadd.f32 0.0, %v555
    %557 = vdwg.mxu0
    %558 = vmatpush.msra.mxu0 0.0
    %559 = vmatpush.msra.mxu0 0.0
    %560 = vmatpush.msra.mxu0 0.0
    %561 = vmatpush.msra.mxu0 0.0
    %562 = vmatpush.msra.mxu0 0.0
    %563 = vmatpush.msra.mxu0 0.0
    %564 = vmatpush.msra.mxu0 0.0
    %565 = vmatpush.msra.mxu0 0.0
    %566 = vmatpush.msra.mxu0 0.0
    %567 = vmatpush.msra.mxu0 0.0
    %568 = vmatpush.msra.mxu0 0.0
    %569 = vmatpush.msra.mxu0 0.0
    %570 = vmatpush.msra.mxu0 0.0
    %571 = vmatpush.msra.mxu0 0.0
    %572 = vmatpush.msra.mxu0 0.0
    %573 = vmatpush.msra.mxu0 %v536
    %574 = vmatmul.f32.gmra.mxu0 %v530
    %v575 = vpop.f32.mrf.mxu0
    %v576 = vadd.f32 0.0, %v575
    %577 = vdwg.mxu0
    %v578 = vadd.f32 %v524, %v556
    %v579 = vadd.f32 %v525, %v576
    %v580 = vrot.slane %v578, 4
    %v581 = vadd.f32 %v578, %v580
    %v582 = vrot.slane %v581, 2
    %v583 = vadd.f32 %v581, %v582
    %v584 = vrot.slane %v583, 1
    %v585 = vadd.f32 %v583, %v584
    %v586 = vrot.slane %v579, 4
    %v587 = vadd.f32 %v579, %v586
    %v588 = vrot.slane %v587, 2
    %v589 = vadd.f32 %v587, %v588
    %v590 = vrot.slane %v589, 1
    %v591 = vadd.f32 %v589, %v590
    %v592 = vmul.f32 %v578, %v578
    %v593 = vmul.f32 %v579, %v579
    %v594 = vrot.slane %v592, 4
    %v595 = vadd.f32 %v592, %v594
    %v596 = vrot.slane %v595, 2
    %v597 = vadd.f32 %v595, %v596
    %v598 = vrot.slane %v597, 1
    %v599 = vadd.f32 %v597, %v598
    %v600 = vrot.slane %v593, 4
    %v601 = vadd.f32 %v593, %v600
    %v602 = vrot.slane %v601, 2
    %v603 = vadd.f32 %v601, %v602
    %v604 = vrot.slane %v603, 1
    %v605 = vadd.f32 %v603, %v604
    %vm606 = vcmask 1040384
    %v607 = vsel %vm606, %v585, %v599
    %v608 = vsel %vm606, %v591, %v605
    %609 = vrot.lane.b32.xlu0 %v607, 64
    %v610 = vpop.permute.xlu0 %609
    %611 = vrot.lane.b32.xlu0 %v608, 64
    %v612 = vpop.permute.xlu0 %611
    %v613 = vlaneseq
    %v614 = vand.u32 %v613, 127
    %vm615 = vcmp.lt.s32.totalorder %v614, 64
    %v616 = vsel %vm615, %v610, %v612
    %v617 = vsel %vm615, %v612, %v610
    %v618 = vadd.f32 %v607, %v617
    %v619 = vadd.f32 %v608, %v616
    %v620 = vadd.f32 %v618, %v619
    %v621 = vmul.f32 %v620, 0.03125
    %v622 = vmul.f32 %v621, %v621
    %v624 = vrot.slane %v622, 7
    %v626 = vsub.f32 %v621, %v624
    %v627 = vmax.f32 %v626, 0.0
    %v628 = vld [vmem:[#allocation11] ss:$2 sm:$0x3]
    %v629 = vadd.f32 %v627, 1e-05
    %v630 = vrsqrt.pop %v629
    %v631 = vmul.f32 %v630, %v629
    %v632 = vmul.f32 %v631, %v630
    %v633 = vmul.f32 0.5, %v632
    %v634 = vsub.f32 1.5, %v633
    %v635 = vmul.f32 %v630, %v634
    %vm636 = vweird.f32 %v629
    %vm637 = vweird.f32 %v630
    %vm638 = vmor %vm636, %vm637
    %v639 = vsel %vm638, %v630, %v635
    %641 = vst [vmem:[#allocation1] sm:$0xff] %v639
    %642 = vst [vmem:[#allocation1 + $0x9] sm:$0xff] %v639
    %s643 = scalar_lea.vmem [#allocation1], 1
    %v644 = vld [vmem:[%s643] ss:$9 sm:$0xff]
    %v646 = vmul.f32 %v628, %v644
    %s647 = scalar_lea.vmem [#allocation11], 1
    %v648 = vld [vmem:[%s647] ss:$2 sm:$0x3]
    %v650 = vperm.slane %v646, 0
    %v651 = vperm.slane %v646, 1
    %v654 = vmul.f32 %v621, %v650
    %v655 = vmul.f32 %v621, %v651
    %v658 = vrot.slane %v655, 7
    %v659 = vsel %vm606, %v654, %v658
    %v661 = vsub.f32 %v648, %v659
    %v662 = vmul.f32 %v578, %v650
    %v663 = vmul.f32 %v579, %v651
    %v665 = vperm.slane %v661, 0
    %v666 = vperm.slane %v661, 1
    %v669 = vadd.f32 %v662, %v665
    %v670 = vadd.f32 %v663, %v666
    %vm671 = vcmp.gt.f32.partialorder %v669, 0.0
    %vm672 = vcmp.gt.f32.partialorder %v670, 0.0
    %v673 = vmul.f32 %v669, 1.442695
    %v674 = vpow.pop %v673
    %v675 = vmul.f32 %v670, 1.442695
    %v676 = vpow.pop %v675
    %v677 = vsub.f32 %v674, 1.0
    %v678 = vsub.f32 %v676, 1.0
    %v679 = vsel %vm671, %v669, %v677
    %v680 = vsel %vm672, %v670, %v678
    %s681 = smul.u32 8, 32
    %s682 = smul.u32 %s681, 8
    %s683 = sshll.u32 %s682, 4
    %684 = dma.done [#allocation7], %s683
    %v685 = vld [vmem:[#allocation3] sm:$0xff]
    %v686 = vld [vmem:[#allocation3 + $0x8] sm:$0xff]
    %v687 = vld [vmem:[#allocation3 + $0x10] sm:$0xff]
    %v688 = vld [vmem:[#allocation3 + $0x18] sm:$0xff]
    %v689 = vld [vmem:[#allocation3 + $0x20] sm:$0xff]
    %v690 = vld [vmem:[#allocation3 + $0x28] sm:$0xff]
    %v691 = vld [vmem:[#allocation3 + $0x30] sm:$0xff]
    %v692 = vld [vmem:[#allocation3 + $0x38] sm:$0xff]
    %v693 = vld [vmem:[#allocation3 + $0x40] sm:$0xff]
    %v694 = vld [vmem:[#allocation3 + $0x48] sm:$0xff]
    %v695 = vld [vmem:[#allocation3 + $0x50] sm:$0xff]
    %v696 = vld [vmem:[#allocation3 + $0x58] sm:$0xff]
    %v697 = vld [vmem:[#allocation3 + $0x60] sm:$0xff]
    %v698 = vld [vmem:[#allocation3 + $0x68] sm:$0xff]
    %v699 = vld [vmem:[#allocation3 + $0x70] sm:$0xff]
    %v700 = vld [vmem:[#allocation3 + $0x78] sm:$0xff]
    %v701 = vld [vmem:[#allocation3 + $0x80] sm:$0xff]
    %v702 = vld [vmem:[#allocation3 + $0x88] sm:$0xff]
    %v703 = vld [vmem:[#allocation3 + $0x90] sm:$0xff]
    %v704 = vld [vmem:[#allocation3 + $0x98] sm:$0xff]
    %v705 = vld [vmem:[#allocation3 + $0xa0] sm:$0xff]
    %v706 = vld [vmem:[#allocation3 + $0xa8] sm:$0xff]
    %v707 = vld [vmem:[#allocation3 + $0xb0] sm:$0xff]
    %v708 = vld [vmem:[#allocation3 + $0xb8] sm:$0xff]
    %v709 = vld [vmem:[#allocation3 + $0xc0] sm:$0xff]
    %v710 = vld [vmem:[#allocation3 + $0xc8] sm:$0xff]
    %v711 = vld [vmem:[#allocation3 + $0xd0] sm:$0xff]
    %v712 = vld [vmem:[#allocation3 + $0xd8] sm:$0xff]
    %v713 = vld [vmem:[#allocation3 + $0xe0] sm:$0xff]
    %v714 = vld [vmem:[#allocation3 + $0xe8] sm:$0xff]
    %v715 = vld [vmem:[#allocation3 + $0xf0] sm:$0xff]
    %v716 = vld [vmem:[#allocation3 + $0xf8] sm:$0xff]
    %v717 = vld [vmem:[#allocation3 + $0x100] sm:$0xff]
    %v718 = vld [vmem:[#allocation3 + $0x108] sm:$0xff]
    %v719 = vld [vmem:[#allocation3 + $0x110] sm:$0xff]
    %v720 = vld [vmem:[#allocation3 + $0x118] sm:$0xff]
    %v721 = vld [vmem:[#allocation3 + $0x120] sm:$0xff]
    %v722 = vld [vmem:[#allocation3 + $0x128] sm:$0xff]
    %v723 = vld [vmem:[#allocation3 + $0x130] sm:$0xff]
    %v724 = vld [vmem:[#allocation3 + $0x138] sm:$0xff]
    %v725 = vld [vmem:[#allocation3 + $0x140] sm:$0xff]
    %v726 = vld [vmem:[#allocation3 + $0x148] sm:$0xff]
    %v727 = vld [vmem:[#allocation3 + $0x150] sm:$0xff]
    %v728 = vld [vmem:[#allocation3 + $0x158] sm:$0xff]
    %v729 = vld [vmem:[#allocation3 + $0x160] sm:$0xff]
    %v730 = vld [vmem:[#allocation3 + $0x168] sm:$0xff]
    %v731 = vld [vmem:[#allocation3 + $0x170] sm:$0xff]
    %v732 = vld [vmem:[#allocation3 + $0x178] sm:$0xff]
    %v733 = vld [vmem:[#allocation3 + $0x180] sm:$0xff]
    %v734 = vld [vmem:[#allocation3 + $0x188] sm:$0xff]
    %v735 = vld [vmem:[#allocation3 + $0x190] sm:$0xff]
    %v736 = vld [vmem:[#allocation3 + $0x198] sm:$0xff]
    %v737 = vld [vmem:[#allocation3 + $0x1a0] sm:$0xff]
    %v738 = vld [vmem:[#allocation3 + $0x1a8] sm:$0xff]
    %v739 = vld [vmem:[#allocation3 + $0x1b0] sm:$0xff]
    %v740 = vld [vmem:[#allocation3 + $0x1b8] sm:$0xff]
    %v741 = vld [vmem:[#allocation3 + $0x1c0] sm:$0xff]
    %v742 = vld [vmem:[#allocation3 + $0x1c8] sm:$0xff]
    %v743 = vld [vmem:[#allocation3 + $0x1d0] sm:$0xff]
    %v744 = vld [vmem:[#allocation3 + $0x1d8] sm:$0xff]
    %v745 = vld [vmem:[#allocation3 + $0x1e0] sm:$0xff]
    %v746 = vld [vmem:[#allocation3 + $0x1e8] sm:$0xff]
    %v747 = vld [vmem:[#allocation3 + $0x1f0] sm:$0xff]
    %v748 = vld [vmem:[#allocation3 + $0x1f8] sm:$0xff]
    %v749 = vld [vmem:[#allocation3 + $0x200] sm:$0xff]
    %v750 = vld [vmem:[#allocation3 + $0x208] sm:$0xff]
    %v751 = vld [vmem:[#allocation3 + $0x210] sm:$0xff]
    %v752 = vld [vmem:[#allocation3 + $0x218] sm:$0xff]
    %v753 = vld [vmem:[#allocation3 + $0x220] sm:$0xff]
    %v754 = vld [vmem:[#allocation3 + $0x228] sm:$0xff]
    %v755 = vld [vmem:[#allocation3 + $0x230] sm:$0xff]
    %v756 = vld [vmem:[#allocation3 + $0x238] sm:$0xff]
    %v757 = vld [vmem:[#allocation3 + $0x240] sm:$0xff]
    %v758 = vld [vmem:[#allocation3 + $0x248] sm:$0xff]
    %v759 = vld [vmem:[#allocation3 + $0x250] sm:$0xff]
    %v760 = vld [vmem:[#allocation3 + $0x258] sm:$0xff]
    %v761 = vld [vmem:[#allocation3 + $0x260] sm:$0xff]
    %v762 = vld [vmem:[#allocation3 + $0x268] sm:$0xff]
    %v763 = vld [vmem:[#allocation3 + $0x270] sm:$0xff]
    %v764 = vld [vmem:[#allocation3 + $0x278] sm:$0xff]
    %v765 = vld [vmem:[#allocation3 + $0x280] sm:$0xff]
    %v766 = vld [vmem:[#allocation3 + $0x288] sm:$0xff]
    %v767 = vld [vmem:[#allocation3 + $0x290] sm:$0xff]
    %v768 = vld [vmem:[#allocation3 + $0x298] sm:$0xff]
    %v769 = vld [vmem:[#allocation3 + $0x2a0] sm:$0xff]
    %v770 = vld [vmem:[#allocation3 + $0x2a8] sm:$0xff]
    %v771 = vld [vmem:[#allocation3 + $0x2b0] sm:$0xff]
    %v772 = vld [vmem:[#allocation3 + $0x2b8] sm:$0xff]
    %v773 = vld [vmem:[#allocation3 + $0x2c0] sm:$0xff]
    %v774 = vld [vmem:[#allocation3 + $0x2c8] sm:$0xff]
    %v775 = vld [vmem:[#allocation3 + $0x2d0] sm:$0xff]
    %v776 = vld [vmem:[#allocation3 + $0x2d8] sm:$0xff]
    %v777 = vld [vmem:[#allocation3 + $0x2e0] sm:$0xff]
    %v778 = vld [vmem:[#allocation3 + $0x2e8] sm:$0xff]
    %v779 = vld [vmem:[#allocation3 + $0x2f0] sm:$0xff]
    %v780 = vld [vmem:[#allocation3 + $0x2f8] sm:$0xff]
    %v781 = vld [vmem:[#allocation3 + $0x300] sm:$0xff]
    %v782 = vld [vmem:[#allocation3 + $0x308] sm:$0xff]
    %v783 = vld [vmem:[#allocation3 + $0x310] sm:$0xff]
    %v784 = vld [vmem:[#allocation3 + $0x318] sm:$0xff]
    %v785 = vld [vmem:[#allocation3 + $0x320] sm:$0xff]
    %v786 = vld [vmem:[#allocation3 + $0x328] sm:$0xff]
    %v787 = vld [vmem:[#allocation3 + $0x330] sm:$0xff]
    %v788 = vld [vmem:[#allocation3 + $0x338] sm:$0xff]
    %v789 = vld [vmem:[#allocation3 + $0x340] sm:$0xff]
    %v790 = vld [vmem:[#allocation3 + $0x348] sm:$0xff]
    %v791 = vld [vmem:[#allocation3 + $0x350] sm:$0xff]
    %v792 = vld [vmem:[#allocation3 + $0x358] sm:$0xff]
    %v793 = vld [vmem:[#allocation3 + $0x360] sm:$0xff]
    %v794 = vld [vmem:[#allocation3 + $0x368] sm:$0xff]
    %v795 = vld [vmem:[#allocation3 + $0x370] sm:$0xff]
    %v796 = vld [vmem:[#allocation3 + $0x378] sm:$0xff]
    %v797 = vld [vmem:[#allocation3 + $0x380] sm:$0xff]
    %v798 = vld [vmem:[#allocation3 + $0x388] sm:$0xff]
    %v799 = vld [vmem:[#allocation3 + $0x390] sm:$0xff]
    %v800 = vld [vmem:[#allocation3 + $0x398] sm:$0xff]
    %v801 = vld [vmem:[#allocation3 + $0x3a0] sm:$0xff]
    %v802 = vld [vmem:[#allocation3 + $0x3a8] sm:$0xff]
    %v803 = vld [vmem:[#allocation3 + $0x3b0] sm:$0xff]
    %v804 = vld [vmem:[#allocation3 + $0x3b8] sm:$0xff]
    %v805 = vld [vmem:[#allocation3 + $0x3c0] sm:$0xff]
    %v806 = vld [vmem:[#allocation3 + $0x3c8] sm:$0xff]
    %v807 = vld [vmem:[#allocation3 + $0x3d0] sm:$0xff]
    %v808 = vld [vmem:[#allocation3 + $0x3d8] sm:$0xff]
    %v809 = vld [vmem:[#allocation3 + $0x3e0] sm:$0xff]
    %v810 = vld [vmem:[#allocation3 + $0x3e8] sm:$0xff]
    %v811 = vld [vmem:[#allocation3 + $0x3f0] sm:$0xff]
    %v812 = vld [vmem:[#allocation3 + $0x3f8] sm:$0xff]
    %v813 = vld [vmem:[#allocation3 + $0x400] sm:$0xff]
    %v814 = vld [vmem:[#allocation3 + $0x408] sm:$0xff]
    %v815 = vld [vmem:[#allocation3 + $0x410] sm:$0xff]
    %v816 = vld [vmem:[#allocation3 + $0x418] sm:$0xff]
    %v817 = vld [vmem:[#allocation3 + $0x420] sm:$0xff]
    %v818 = vld [vmem:[#allocation3 + $0x428] sm:$0xff]
    %v819 = vld [vmem:[#allocation3 + $0x430] sm:$0xff]
    %v820 = vld [vmem:[#allocation3 + $0x438] sm:$0xff]
    %v821 = vld [vmem:[#allocation3 + $0x440] sm:$0xff]
    %v822 = vld [vmem:[#allocation3 + $0x448] sm:$0xff]
    %v823 = vld [vmem:[#allocation3 + $0x450] sm:$0xff]
    %v824 = vld [vmem:[#allocation3 + $0x458] sm:$0xff]
    %v825 = vld [vmem:[#allocation3 + $0x460] sm:$0xff]
    %v826 = vld [vmem:[#allocation3 + $0x468] sm:$0xff]
    %v827 = vld [vmem:[#allocation3 + $0x470] sm:$0xff]
    %v828 = vld [vmem:[#allocation3 + $0x478] sm:$0xff]
    %v829 = vld [vmem:[#allocation3 + $0x480] sm:$0xff]
    %v830 = vld [vmem:[#allocation3 + $0x488] sm:$0xff]
    %v831 = vld [vmem:[#allocation3 + $0x490] sm:$0xff]
    %v832 = vld [vmem:[#allocation3 + $0x498] sm:$0xff]
    %v833 = vld [vmem:[#allocation3 + $0x4a0] sm:$0xff]
    %v834 = vld [vmem:[#allocation3 + $0x4a8] sm:$0xff]
    %v835 = vld [vmem:[#allocation3 + $0x4b0] sm:$0xff]
    %v836 = vld [vmem:[#allocation3 + $0x4b8] sm:$0xff]
    %v837 = vld [vmem:[#allocation3 + $0x4c0] sm:$0xff]
    %v838 = vld [vmem:[#allocation3 + $0x4c8] sm:$0xff]
    %v839 = vld [vmem:[#allocation3 + $0x4d0] sm:$0xff]
    %v840 = vld [vmem:[#allocation3 + $0x4d8] sm:$0xff]
    %v841 = vld [vmem:[#allocation3 + $0x4e0] sm:$0xff]
    %v842 = vld [vmem:[#allocation3 + $0x4e8] sm:$0xff]
    %v843 = vld [vmem:[#allocation3 + $0x4f0] sm:$0xff]
    %v844 = vld [vmem:[#allocation3 + $0x4f8] sm:$0xff]
    %v845 = vld [vmem:[#allocation3 + $0x500] sm:$0xff]
    %v846 = vld [vmem:[#allocation3 + $0x508] sm:$0xff]
    %v847 = vld [vmem:[#allocation3 + $0x510] sm:$0xff]
    %v848 = vld [vmem:[#allocation3 + $0x518] sm:$0xff]
    %v849 = vld [vmem:[#allocation3 + $0x520] sm:$0xff]
    %v850 = vld [vmem:[#allocation3 + $0x528] sm:$0xff]
    %v851 = vld [vmem:[#allocation3 + $0x530] sm:$0xff]
    %v852 = vld [vmem:[#allocation3 + $0x538] sm:$0xff]
    %v853 = vld [vmem:[#allocation3 + $0x540] sm:$0xff]
    %v854 = vld [vmem:[#allocation3 + $0x548] sm:$0xff]
    %v855 = vld [vmem:[#allocation3 + $0x550] sm:$0xff]
    %v856 = vld [vmem:[#allocation3 + $0x558] sm:$0xff]
    %v857 = vld [vmem:[#allocation3 + $0x560] sm:$0xff]
    %v858 = vld [vmem:[#allocation3 + $0x568] sm:$0xff]
    %v859 = vld [vmem:[#allocation3 + $0x570] sm:$0xff]
    %v860 = vld [vmem:[#allocation3 + $0x578] sm:$0xff]
    %v861 = vld [vmem:[#allocation3 + $0x580] sm:$0xff]
    %v862 = vld [vmem:[#allocation3 + $0x588] sm:$0xff]
    %v863 = vld [vmem:[#allocation3 + $0x590] sm:$0xff]
    %v864 = vld [vmem:[#allocation3 + $0x598] sm:$0xff]
    %v865 = vld [vmem:[#allocation3 + $0x5a0] sm:$0xff]
    %v866 = vld [vmem:[#allocation3 + $0x5a8] sm:$0xff]
    %v867 = vld [vmem:[#allocation3 + $0x5b0] sm:$0xff]
    %v868 = vld [vmem:[#allocation3 + $0x5b8] sm:$0xff]
    %v869 = vld [vmem:[#allocation3 + $0x5c0] sm:$0xff]
    %v870 = vld [vmem:[#allocation3 + $0x5c8] sm:$0xff]
    %v871 = vld [vmem:[#allocation3 + $0x5d0] sm:$0xff]
    %v872 = vld [vmem:[#allocation3 + $0x5d8] sm:$0xff]
    %v873 = vld [vmem:[#allocation3 + $0x5e0] sm:$0xff]
    %v874 = vld [vmem:[#allocation3 + $0x5e8] sm:$0xff]
    %v875 = vld [vmem:[#allocation3 + $0x5f0] sm:$0xff]
    %v876 = vld [vmem:[#allocation3 + $0x5f8] sm:$0xff]
    %v877 = vld [vmem:[#allocation3 + $0x600] sm:$0xff]
    %v878 = vld [vmem:[#allocation3 + $0x608] sm:$0xff]
    %v879 = vld [vmem:[#allocation3 + $0x610] sm:$0xff]
    %v880 = vld [vmem:[#allocation3 + $0x618] sm:$0xff]
    %v881 = vld [vmem:[#allocation3 + $0x620] sm:$0xff]
    %v882 = vld [vmem:[#allocation3 + $0x628] sm:$0xff]
    %v883 = vld [vmem:[#allocation3 + $0x630] sm:$0xff]
    %v884 = vld [vmem:[#allocation3 + $0x638] sm:$0xff]
    %v885 = vld [vmem:[#allocation3 + $0x640] sm:$0xff]
    %v886 = vld [vmem:[#allocation3 + $0x648] sm:$0xff]
    %v887 = vld [vmem:[#allocation3 + $0x650] sm:$0xff]
    %v888 = vld [vmem:[#allocation3 + $0x658] sm:$0xff]
    %v889 = vld [vmem:[#allocation3 + $0x660] sm:$0xff]
    %v890 = vld [vmem:[#allocation3 + $0x668] sm:$0xff]
    %v891 = vld [vmem:[#allocation3 + $0x670] sm:$0xff]
    %v892 = vld [vmem:[#allocation3 + $0x678] sm:$0xff]
    %v893 = vld [vmem:[#allocation3 + $0x680] sm:$0xff]
    %v894 = vld [vmem:[#allocation3 + $0x688] sm:$0xff]
    %v895 = vld [vmem:[#allocation3 + $0x690] sm:$0xff]
    %v896 = vld [vmem:[#allocation3 + $0x698] sm:$0xff]
    %v897 = vld [vmem:[#allocation3 + $0x6a0] sm:$0xff]
    %v898 = vld [vmem:[#allocation3 + $0x6a8] sm:$0xff]
    %v899 = vld [vmem:[#allocation3 + $0x6b0] sm:$0xff]
    %v900 = vld [vmem:[#allocation3 + $0x6b8] sm:$0xff]
    %v901 = vld [vmem:[#allocation3 + $0x6c0] sm:$0xff]
    %v902 = vld [vmem:[#allocation3 + $0x6c8] sm:$0xff]
    %v903 = vld [vmem:[#allocation3 + $0x6d0] sm:$0xff]
    %v904 = vld [vmem:[#allocation3 + $0x6d8] sm:$0xff]
    %v905 = vld [vmem:[#allocation3 + $0x6e0] sm:$0xff]
    %v906 = vld [vmem:[#allocation3 + $0x6e8] sm:$0xff]
    %v907 = vld [vmem:[#allocation3 + $0x6f0] sm:$0xff]
    %v908 = vld [vmem:[#allocation3 + $0x6f8] sm:$0xff]
    %v909 = vld [vmem:[#allocation3 + $0x700] sm:$0xff]
    %v910 = vld [vmem:[#allocation3 + $0x708] sm:$0xff]
    %v911 = vld [vmem:[#allocation3 + $0x710] sm:$0xff]
    %v912 = vld [vmem:[#allocation3 + $0x718] sm:$0xff]
    %v913 = vld [vmem:[#allocation3 + $0x720] sm:$0xff]
    %v914 = vld [vmem:[#allocation3 + $0x728] sm:$0xff]
    %v915 = vld [vmem:[#allocation3 + $0x730] sm:$0xff]
    %v916 = vld [vmem:[#allocation3 + $0x738] sm:$0xff]
    %v917 = vld [vmem:[#allocation3 + $0x740] sm:$0xff]
    %v918 = vld [vmem:[#allocation3 + $0x748] sm:$0xff]
    %v919 = vld [vmem:[#allocation3 + $0x750] sm:$0xff]
    %v920 = vld [vmem:[#allocation3 + $0x758] sm:$0xff]
    %v921 = vld [vmem:[#allocation3 + $0x760] sm:$0xff]
    %v922 = vld [vmem:[#allocation3 + $0x768] sm:$0xff]
    %v923 = vld [vmem:[#allocation3 + $0x770] sm:$0xff]
    %v924 = vld [vmem:[#allocation3 + $0x778] sm:$0xff]
    %v925 = vld [vmem:[#allocation3 + $0x780] sm:$0xff]
    %v926 = vld [vmem:[#allocation3 + $0x788] sm:$0xff]
    %v927 = vld [vmem:[#allocation3 + $0x790] sm:$0xff]
    %v928 = vld [vmem:[#allocation3 + $0x798] sm:$0xff]
    %v929 = vld [vmem:[#allocation3 + $0x7a0] sm:$0xff]
    %v930 = vld [vmem:[#allocation3 + $0x7a8] sm:$0xff]
    %v931 = vld [vmem:[#allocation3 + $0x7b0] sm:$0xff]
    %v932 = vld [vmem:[#allocation3 + $0x7b8] sm:$0xff]
    %v933 = vld [vmem:[#allocation3 + $0x7c0] sm:$0xff]
    %v934 = vld [vmem:[#allocation3 + $0x7c8] sm:$0xff]
    %v935 = vld [vmem:[#allocation3 + $0x7d0] sm:$0xff]
    %v936 = vld [vmem:[#allocation3 + $0x7d8] sm:$0xff]
    %v937 = vld [vmem:[#allocation3 + $0x7e0] sm:$0xff]
    %v938 = vld [vmem:[#allocation3 + $0x7e8] sm:$0xff]
    %v939 = vld [vmem:[#allocation3 + $0x7f0] sm:$0xff]
    %v940 = vld [vmem:[#allocation3 + $0x7f8] sm:$0xff]
    %941 = vmatpush.msra.mxu0 %v805
    %942 = vmatpush.msra.mxu0 %v797
    %943 = vmatpush.msra.mxu0 %v789
    %944 = vmatpush.msra.mxu0 %v781
    %945 = vmatpush.msra.mxu0 %v773
    %946 = vmatpush.msra.mxu0 %v765
    %947 = vmatpush.msra.mxu0 %v757
    %948 = vmatpush.msra.mxu0 %v749
    %949 = vmatpush.msra.mxu0 %v741
    %950 = vmatpush.msra.mxu0 %v733
    %951 = vmatpush.msra.mxu0 %v725
    %952 = vmatpush.msra.mxu0 %v717
    %953 = vmatpush.msra.mxu0 %v709
    %954 = vmatpush.msra.mxu0 %v701
    %955 = vmatpush.msra.mxu0 %v693
    %956 = vmatpush.msra.mxu0 %v685
    %957 = vmatmul.f32.gmra.mxu0 %v679
    %v958 = vpop.f32.mrf.mxu0
    %v959 = vadd.f32 0.0, %v958
    %960 = vdwg.mxu0
    %961 = vmatpush.msra.mxu0 %v933
    %962 = vmatpush.msra.mxu0 %v925
    %963 = vmatpush.msra.mxu0 %v917
    %964 = vmatpush.msra.mxu0 %v909
    %965 = vmatpush.msra.mxu0 %v901
    %966 = vmatpush.msra.mxu0 %v893
    %967 = vmatpush.msra.mxu0 %v885
    %968 = vmatpush.msra.mxu0 %v877
    %969 = vmatpush.msra.mxu0 %v869
    %970 = vmatpush.msra.mxu0 %v861
    %971 = vmatpush.msra.mxu0 %v853
    %972 = vmatpush.msra.mxu0 %v845
    %973 = vmatpush.msra.mxu0 %v837
    %974 = vmatpush.msra.mxu0 %v829
    %975 = vmatpush.msra.mxu0 %v821
    %976 = vmatpush.msra.mxu0 %v813
    %977 = vmatmul.f32.gmra.mxu0 %v680
    %v978 = vpop.f32.mrf.mxu0
    %v979 = vadd.f32 %v959, %v978
    %980 = vdwg.mxu0
    %981 = vmatpush.msra.mxu0 %v806
    %982 = vmatpush.msra.mxu0 %v798
    %983 = vmatpush.msra.mxu0 %v790
    %984 = vmatpush.msra.mxu0 %v782
    %985 = vmatpush.msra.mxu0 %v774
    %986 = vmatpush.msra.mxu0 %v766
    %987 = vmatpush.msra.mxu0 %v758
    %988 = vmatpush.msra.mxu0 %v750
    %989 = vmatpush.msra.mxu0 %v742
    %990 = vmatpush.msra.mxu0 %v734
    %991 = vmatpush.msra.mxu0 %v726
    %992 = vmatpush.msra.mxu0 %v718
    %993 = vmatpush.msra.mxu0 %v710
    %994 = vmatpush.msra.mxu0 %v702
    %995 = vmatpush.msra.mxu0 %v694
    %996 = vmatpush.msra.mxu0 %v686
    %997 = vmatmul.f32.gmra.mxu0 %v679
    %v998 = vpop.f32.mrf.mxu0
    %v999 = vadd.f32 0.0, %v998
    %1000 = vdwg.mxu0
    %1001 = vmatpush.msra.mxu0 %v934
    %1002 = vmatpush.msra.mxu0 %v926
    %1003 = vmatpush.msra.mxu0 %v918
    %1004 = vmatpush.msra.mxu0 %v910
    %1005 = vmatpush.msra.mxu0 %v902
    %1006 = vmatpush.msra.mxu0 %v894
    %1007 = vmatpush.msra.mxu0 %v886
    %1008 = vmatpush.msra.mxu0 %v878
    %1009 = vmatpush.msra.mxu0 %v870
    %1010 = vmatpush.msra.mxu0 %v862
    %1011 = vmatpush.msra.mxu0 %v854
    %1012 = vmatpush.msra.mxu0 %v846
    %1013 = vmatpush.msra.mxu0 %v838
    %1014 = vmatpush.msra.mxu0 %v830
    %1015 = vmatpush.msra.mxu0 %v822
    %1016 = vmatpush.msra.mxu0 %v814
    %1017 = vmatmul.f32.gmra.mxu0 %v680
    %v1018 = vpop.f32.mrf.mxu0
    %v1019 = vadd.f32 %v999, %v1018
    %1020 = vdwg.mxu0
    %1021 = vmatpush.msra.mxu0 %v807
    %1022 = vmatpush.msra.mxu0 %v799
    %1023 = vmatpush.msra.mxu0 %v791
    %1024 = vmatpush.msra.mxu0 %v783
    %1025 = vmatpush.msra.mxu0 %v775
    %1026 = vmatpush.msra.mxu0 %v767
    %1027 = vmatpush.msra.mxu0 %v759
    %1028 = vmatpush.msra.mxu0 %v751
    %1029 = vmatpush.msra.mxu0 %v743
    %1030 = vmatpush.msra.mxu0 %v735
    %1031 = vmatpush.msra.mxu0 %v727
    %1032 = vmatpush.msra.mxu0 %v719
    %1033 = vmatpush.msra.mxu0 %v711
    %1034 = vmatpush.msra.mxu0 %v703
    %1035 = vmatpush.msra.mxu0 %v695
    %1036 = vmatpush.msra.mxu0 %v687
    %1037 = vmatmul.f32.gmra.mxu0 %v679
    %v1038 = vpop.f32.mrf.mxu0
    %v1039 = vadd.f32 0.0, %v1038
    %1040 = vdwg.mxu0
    %1041 = vmatpush.msra.mxu0 %v935
    %1042 = vmatpush.msra.mxu0 %v927
    %1043 = vmatpush.msra.mxu0 %v919
    %1044 = vmatpush.msra.mxu0 %v911
    %1045 = vmatpush.msra.mxu0 %v903
    %1046 = vmatpush.msra.mxu0 %v895
    %1047 = vmatpush.msra.mxu0 %v887
    %1048 = vmatpush.msra.mxu0 %v879
    %1049 = vmatpush.msra.mxu0 %v871
    %1050 = vmatpush.msra.mxu0 %v863
    %1051 = vmatpush.msra.mxu0 %v855
    %1052 = vmatpush.msra.mxu0 %v847
    %1053 = vmatpush.msra.mxu0 %v839
    %1054 = vmatpush.msra.mxu0 %v831
    %1055 = vmatpush.msra.mxu0 %v823
    %1056 = vmatpush.msra.mxu0 %v815
    %1057 = vmatmul.f32.gmra.mxu0 %v680
    %v1058 = vpop.f32.mrf.mxu0
    %v1059 = vadd.f32 %v1039, %v1058
    %1060 = vdwg.mxu0
    %1061 = vmatpush.msra.mxu0 %v808
    %1062 = vmatpush.msra.mxu0 %v800
    %1063 = vmatpush.msra.mxu0 %v792
    %1064 = vmatpush.msra.mxu0 %v784
    %1065 = vmatpush.msra.mxu0 %v776
    %1066 = vmatpush.msra.mxu0 %v768
    %1067 = vmatpush.msra.mxu0 %v760
    %1068 = vmatpush.msra.mxu0 %v752
    %1069 = vmatpush.msra.mxu0 %v744
    %1070 = vmatpush.msra.mxu0 %v736
    %1071 = vmatpush.msra.mxu0 %v728
    %1072 = vmatpush.msra.mxu0 %v720
    %1073 = vmatpush.msra.mxu0 %v712
    %1074 = vmatpush.msra.mxu0 %v704
    %1075 = vmatpush.msra.mxu0 %v696
    %1076 = vmatpush.msra.mxu0 %v688
    %1077 = vmatmul.f32.gmra.mxu0 %v679
    %v1078 = vpop.f32.mrf.mxu0
    %v1079 = vadd.f32 0.0, %v1078
    %1080 = vdwg.mxu0
    %1081 = vmatpush.msra.mxu0 %v936
    %1082 = vmatpush.msra.mxu0 %v928
    %1083 = vmatpush.msra.mxu0 %v920
    %1084 = vmatpush.msra.mxu0 %v912
    %1085 = vmatpush.msra.mxu0 %v904
    %1086 = vmatpush.msra.mxu0 %v896
    %1087 = vmatpush.msra.mxu0 %v888
    %1088 = vmatpush.msra.mxu0 %v880
    %1089 = vmatpush.msra.mxu0 %v872
    %1090 = vmatpush.msra.mxu0 %v864
    %1091 = vmatpush.msra.mxu0 %v856
    %1092 = vmatpush.msra.mxu0 %v848
    %1093 = vmatpush.msra.mxu0 %v840
    %1094 = vmatpush.msra.mxu0 %v832
    %1095 = vmatpush.msra.mxu0 %v824
    %1096 = vmatpush.msra.mxu0 %v816
    %1097 = vmatmul.f32.gmra.mxu0 %v680
    %v1098 = vpop.f32.mrf.mxu0
    %v1099 = vadd.f32 %v1079, %v1098
    %1100 = vdwg.mxu0
    %1101 = vmatpush.msra.mxu0 %v809
    %1102 = vmatpush.msra.mxu0 %v801
    %1103 = vmatpush.msra.mxu0 %v793
    %1104 = vmatpush.msra.mxu0 %v785
    %1105 = vmatpush.msra.mxu0 %v777
    %1106 = vmatpush.msra.mxu0 %v769
    %1107 = vmatpush.msra.mxu0 %v761
    %1108 = vmatpush.msra.mxu0 %v753
    %1109 = vmatpush.msra.mxu0 %v745
    %1110 = vmatpush.msra.mxu0 %v737
    %1111 = vmatpush.msra.mxu0 %v729
    %1112 = vmatpush.msra.mxu0 %v721
    %1113 = vmatpush.msra.mxu0 %v713
    %1114 = vmatpush.msra.mxu0 %v705
    %1115 = vmatpush.msra.mxu0 %v697
    %1116 = vmatpush.msra.mxu0 %v689
    %1117 = vmatmul.f32.gmra.mxu0 %v679
    %v1118 = vpop.f32.mrf.mxu0
    %v1119 = vadd.f32 0.0, %v1118
    %1120 = vdwg.mxu0
    %1121 = vmatpush.msra.mxu0 %v937
    %1122 = vmatpush.msra.mxu0 %v929
    %1123 = vmatpush.msra.mxu0 %v921
    %1124 = vmatpush.msra.mxu0 %v913
    %1125 = vmatpush.msra.mxu0 %v905
    %1126 = vmatpush.msra.mxu0 %v897
    %1127 = vmatpush.msra.mxu0 %v889
    %1128 = vmatpush.msra.mxu0 %v881
    %1129 = vmatpush.msra.mxu0 %v873
    %1130 = vmatpush.msra.mxu0 %v865
    %1131 = vmatpush.msra.mxu0 %v857
    %1132 = vmatpush.msra.mxu0 %v849
    %1133 = vmatpush.msra.mxu0 %v841
    %1134 = vmatpush.msra.mxu0 %v833
    %1135 = vmatpush.msra.mxu0 %v825
    %1136 = vmatpush.msra.mxu0 %v817
    %1137 = vmatmul.f32.gmra.mxu0 %v680
    %v1138 = vpop.f32.mrf.mxu0
    %v1139 = vadd.f32 %v1119, %v1138
    %1140 = vdwg.mxu0
    %1141 = vmatpush.msra.mxu0 %v810
    %1142 = vmatpush.msra.mxu0 %v802
    %1143 = vmatpush.msra.mxu0 %v794
    %1144 = vmatpush.msra.mxu0 %v786
    %1145 = vmatpush.msra.mxu0 %v778
    %1146 = vmatpush.msra.mxu0 %v770
    %1147 = vmatpush.msra.mxu0 %v762
    %1148 = vmatpush.msra.mxu0 %v754
    %1149 = vmatpush.msra.mxu0 %v746
    %1150 = vmatpush.msra.mxu0 %v738
    %1151 = vmatpush.msra.mxu0 %v730
    %1152 = vmatpush.msra.mxu0 %v722
    %1153 = vmatpush.msra.mxu0 %v714
    %1154 = vmatpush.msra.mxu0 %v706
    %1155 = vmatpush.msra.mxu0 %v698
    %1156 = vmatpush.msra.mxu0 %v690
    %1157 = vmatmul.f32.gmra.mxu0 %v679
    %v1158 = vpop.f32.mrf.mxu0
    %v1159 = vadd.f32 0.0, %v1158
    %1160 = vdwg.mxu0
    %1161 = vmatpush.msra.mxu0 %v938
    %1162 = vmatpush.msra.mxu0 %v930
    %1163 = vmatpush.msra.mxu0 %v922
    %1164 = vmatpush.msra.mxu0 %v914
    %1165 = vmatpush.msra.mxu0 %v906
    %1166 = vmatpush.msra.mxu0 %v898
    %1167 = vmatpush.msra.mxu0 %v890
    %1168 = vmatpush.msra.mxu0 %v882
    %1169 = vmatpush.msra.mxu0 %v874
    %1170 = vmatpush.msra.mxu0 %v866
    %1171 = vmatpush.msra.mxu0 %v858
    %1172 = vmatpush.msra.mxu0 %v850
    %1173 = vmatpush.msra.mxu0 %v842
    %1174 = vmatpush.msra.mxu0 %v834
    %1175 = vmatpush.msra.mxu0 %v826
    %1176 = vmatpush.msra.mxu0 %v818
    %1177 = vmatmul.f32.gmra.mxu0 %v680
    %v1178 = vpop.f32.mrf.mxu0
    %v1179 = vadd.f32 %v1159, %v1178
    %1180 = vdwg.mxu0
    %1181 = vmatpush.msra.mxu0 %v811
    %1182 = vmatpush.msra.mxu0 %v803
    %1183 = vmatpush.msra.mxu0 %v795
    %1184 = vmatpush.msra.mxu0 %v787
    %1185 = vmatpush.msra.mxu0 %v779
    %1186 = vmatpush.msra.mxu0 %v771
    %1187 = vmatpush.msra.mxu0 %v763
    %1188 = vmatpush.msra.mxu0 %v755
    %1189 = vmatpush.msra.mxu0 %v747
    %1190 = vmatpush.msra.mxu0 %v739
    %1191 = vmatpush.msra.mxu0 %v731
    %1192 = vmatpush.msra.mxu0 %v723
    %1193 = vmatpush.msra.mxu0 %v715
    %1194 = vmatpush.msra.mxu0 %v707
    %1195 = vmatpush.msra.mxu0 %v699
    %1196 = vmatpush.msra.mxu0 %v691
    %1197 = vmatmul.f32.gmra.mxu0 %v679
    %v1198 = vpop.f32.mrf.mxu0
    %v1199 = vadd.f32 0.0, %v1198
    %1200 = vdwg.mxu0
    %1201 = vmatpush.msra.mxu0 %v939
    %1202 = vmatpush.msra.mxu0 %v931
    %1203 = vmatpush.msra.mxu0 %v923
    %1204 = vmatpush.msra.mxu0 %v915
    %1205 = vmatpush.msra.mxu0 %v907
    %1206 = vmatpush.msra.mxu0 %v899
    %1207 = vmatpush.msra.mxu0 %v891
    %1208 = vmatpush.msra.mxu0 %v883
    %1209 = vmatpush.msra.mxu0 %v875
    %1210 = vmatpush.msra.mxu0 %v867
    %1211 = vmatpush.msra.mxu0 %v859
    %1212 = vmatpush.msra.mxu0 %v851
    %1213 = vmatpush.msra.mxu0 %v843
    %1214 = vmatpush.msra.mxu0 %v835
    %1215 = vmatpush.msra.mxu0 %v827
    %1216 = vmatpush.msra.mxu0 %v819
    %1217 = vmatmul.f32.gmra.mxu0 %v680
    %v1218 = vpop.f32.mrf.mxu0
    %v1219 = vadd.f32 %v1199, %v1218
    %1220 = vdwg.mxu0
    %1221 = vmatpush.msra.mxu0 %v812
    %1222 = vmatpush.msra.mxu0 %v804
    %1223 = vmatpush.msra.mxu0 %v796
    %1224 = vmatpush.msra.mxu0 %v788
    %1225 = vmatpush.msra.mxu0 %v780
    %1226 = vmatpush.msra.mxu0 %v772
    %1227 = vmatpush.msra.mxu0 %v764
    %1228 = vmatpush.msra.mxu0 %v756
    %1229 = vmatpush.msra.mxu0 %v748
    %1230 = vmatpush.msra.mxu0 %v740
    %1231 = vmatpush.msra.mxu0 %v732
    %1232 = vmatpush.msra.mxu0 %v724
    %1233 = vmatpush.msra.mxu0 %v716
    %1234 = vmatpush.msra.mxu0 %v708
    %1235 = vmatpush.msra.mxu0 %v700
    %1236 = vmatpush.msra.mxu0 %v692
    %1237 = vmatmul.f32.gmra.mxu0 %v679
    %v1238 = vpop.f32.mrf.mxu0
    %v1239 = vadd.f32 0.0, %v1238
    %1240 = vdwg.mxu0
    %1241 = vmatpush.msra.mxu0 %v940
    %1242 = vmatpush.msra.mxu0 %v932
    %1243 = vmatpush.msra.mxu0 %v924
    %1244 = vmatpush.msra.mxu0 %v916
    %1245 = vmatpush.msra.mxu0 %v908
    %1246 = vmatpush.msra.mxu0 %v900
    %1247 = vmatpush.msra.mxu0 %v892
    %1248 = vmatpush.msra.mxu0 %v884
    %1249 = vmatpush.msra.mxu0 %v876
    %1250 = vmatpush.msra.mxu0 %v868
    %1251 = vmatpush.msra.mxu0 %v860
    %1252 = vmatpush.msra.mxu0 %v852
    %1253 = vmatpush.msra.mxu0 %v844
    %1254 = vmatpush.msra.mxu0 %v836
    %1255 = vmatpush.msra.mxu0 %v828
    %1256 = vmatpush.msra.mxu0 %v820
    %1257 = vmatmul.f32.gmra.mxu0 %v680
    %v1258 = vpop.f32.mrf.mxu0
    %v1259 = vadd.f32 %v1239, %v1258
    %1260 = vdwg.mxu0
    %1261 = vst [vmem:[#allocation2] sm:$0xff] %v979
    %1262 = vst [vmem:[#allocation2 + $0x8] sm:$0xff] %v1019
    %1263 = vst [vmem:[#allocation2 + $0x10] sm:$0xff] %v1059
    %1264 = vst [vmem:[#allocation2 + $0x18] sm:$0xff] %v1099
    %1265 = vst [vmem:[#allocation2 + $0x20] sm:$0xff] %v1139
    %1266 = vst [vmem:[#allocation2 + $0x28] sm:$0xff] %v1179
    %1267 = vst [vmem:[#allocation2 + $0x30] sm:$0xff] %v1219
    %1268 = vst [vmem:[#allocation2 + $0x38] sm:$0xff] %v1259
    %v1269 = vld [vmem:[%s4] sm:$0xf]
    %v1270 = vld [vmem:[%s4 + $0x4] sm:$0xf]
    %v1271 = vunpack.c.l.bf16 %v1269
    %v1272 = vunpack.c.l.bf16 %v1270
    %v1273 = vld [vmem:[#allocation2] sm:$0xff]
    %v1274 = vld [vmem:[#allocation2 + $0x8] sm:$0xff]
    %v1275 = vld [vmem:[#allocation2 + $0x10] sm:$0xff]
    %v1276 = vld [vmem:[#allocation2 + $0x18] sm:$0xff]
    %v1277 = vld [vmem:[#allocation2 + $0x20] sm:$0xff]
    %v1278 = vld [vmem:[#allocation2 + $0x28] sm:$0xff]
    %v1279 = vld [vmem:[#allocation2 + $0x30] sm:$0xff]
    %v1280 = vld [vmem:[#allocation2 + $0x38] sm:$0xff]
    %vm1281 = vcmask 261120
    %v1283 = vsel %vm1281, %v1271, 0
    %v1286 = vsel %vm1281, %v1272, 0
    %1288 = vmatpush.msra.mxu0 0.0
    %1289 = vmatpush.msra.mxu0 0.0
    %1290 = vmatpush.msra.mxu0 0.0
    %1291 = vmatpush.msra.mxu0 0.0
    %1292 = vmatpush.msra.mxu0 0.0
    %1293 = vmatpush.msra.mxu0 0.0
    %1294 = vmatpush.msra.mxu0 0.0
    %1295 = vmatpush.msra.mxu0 0.0
    %1296 = vmatpush.msra.mxu0 0.0
    %1297 = vmatpush.msra.mxu0 0.0
    %1298 = vmatpush.msra.mxu0 0.0
    %1299 = vmatpush.msra.mxu0 0.0
    %1300 = vmatpush.msra.mxu0 %v1279
    %1301 = vmatpush.msra.mxu0 %v1277
    %1302 = vmatpush.msra.mxu0 %v1275
    %1303 = vmatpush.msra.mxu0 %v1273
    %1304 = vmatmul.f32.gmra.mxu0 %v1283
    %v1305 = vpop.f32.mrf.mxu0
    %v1306 = vadd.f32 0.0, %v1305
    %1307 = vmatmul.f32.gmra.mxu0 %v1286
    %v1308 = vpop.f32.mrf.mxu0
    %v1309 = vadd.f32 0.0, %v1308
    %1310 = vdwg.mxu0
    %1311 = vmatpush.msra.mxu0 0.0
    %1312 = vmatpush.msra.mxu0 0.0
    %1313 = vmatpush.msra.mxu0 0.0
    %1314 = vmatpush.msra.mxu0 0.0
    %1315 = vmatpush.msra.mxu0 0.0
    %1316 = vmatpush.msra.mxu0 0.0
    %1317 = vmatpush.msra.mxu0 0.0
    %1318 = vmatpush.msra.mxu0 0.0
    %1319 = vmatpush.msra.mxu0 0.0
    %1320 = vmatpush.msra.mxu0 0.0
    %1321 = vmatpush.msra.mxu0 0.0
    %1322 = vmatpush.msra.mxu0 0.0
    %1323 = vmatpush.msra.mxu0 %v1280
    %1324 = vmatpush.msra.mxu0 %v1278
    %1325 = vmatpush.msra.mxu0 %v1276
    %1326 = vmatpush.msra.mxu0 %v1274
    %1327 = vmatmul.f32.gmra.mxu0 %v1283
    %v1328 = vpop.f32.mrf.mxu0
    %v1329 = vadd.f32 0.0, %v1328
    %1330 = vmatmul.f32.gmra.mxu0 %v1286
    %v1331 = vpop.f32.mrf.mxu0
    %v1332 = vadd.f32 0.0, %v1331
    %1333 = vdwg.mxu0
    %v1334 = vadd.f32 %v1306, %v1309
    %v1335 = vrot.slane %v1334, 4
    %v1336 = vadd.f32 %v1334, %v1335
    %v1337 = vrot.slane %v1336, 2
    %v1338 = vadd.f32 %v1336, %v1337
    %v1339 = vrot.slane %v1338, 1
    %v1340 = vadd.f32 %v1338, %v1339
    %v1341 = vadd.f32 %v1329, %v1332
    %v1342 = vrot.slane %v1341, 4
    %v1343 = vadd.f32 %v1341, %v1342
    %v1344 = vrot.slane %v1343, 2
    %v1345 = vadd.f32 %v1343, %v1344
    %v1346 = vrot.slane %v1345, 1
    %v1347 = vadd.f32 %v1345, %v1346
    %v1348 = vmul.f32 %v1306, %v1306
    %v1349 = vmul.f32 %v1329, %v1329
    %v1350 = vmul.f32 %v1309, %v1309
    %v1351 = vmul.f32 %v1332, %v1332
    %v1352 = vadd.f32 %v1348, %v1350
    %v1353 = vrot.slane %v1352, 4
    %v1354 = vadd.f32 %v1352, %v1353
    %v1355 = vrot.slane %v1354, 2
    %v1356 = vadd.f32 %v1354, %v1355
    %v1357 = vrot.slane %v1356, 1
    %v1358 = vadd.f32 %v1356, %v1357
    %v1359 = vadd.f32 %v1349, %v1351
    %v1360 = vrot.slane %v1359, 4
    %v1361 = vadd.f32 %v1359, %v1360
    %v1362 = vrot.slane %v1361, 2
    %v1363 = vadd.f32 %v1361, %v1362
    %v1364 = vrot.slane %v1363, 1
    %v1365 = vadd.f32 %v1363, %v1364
    %v1366 = vsel %vm606, %v1340, %v1358
    %v1367 = vsel %vm606, %v1347, %v1365
    %1368 = vrot.lane.b32.xlu0 %v1366, 32
    %v1369 = vpop.permute.xlu0 %1368
    %1370 = vrot.lane.b32.xlu0 %v1367, 32
    %v1371 = vpop.permute.xlu0 %1370
    %vm1372 = vcmp.lt.s32.totalorder %v614, 32
    %v1373 = vsel %vm1372, %v1369, %v1371
    %v1374 = vsel %vm1372, %v1371, %v1369
    %v1375 = vadd.f32 %v1366, %v1374
    %v1376 = vadd.f32 %v1367, %v1373
    %1377 = vrot.lane.b32.xlu0 %v1375, 64
    %v1378 = vpop.permute.xlu0 %1377
    %1379 = vrot.lane.b32.xlu0 %v1376, 64
    %v1380 = vpop.permute.xlu0 %1379
    %v1381 = vsel %vm615, %v1378, %v1380
    %v1382 = vsel %vm615, %v1380, %v1378
    %v1383 = vadd.f32 %v1375, %v1382
    %v1384 = vadd.f32 %v1376, %v1381
    %v1385 = vadd.f32 %v1383, %v1384
    %v1386 = vmul.f32 %v1385, 0.0078125
    %v1387 = vmul.f32 %v1386, %v1386
    %v1389 = vrot.slane %v1387, 7
    %v1391 = vsub.f32 %v1386, %v1389
    %v1392 = vmax.f32 %v1391, 0.0
    %v1393 = vld [vmem:[#allocation13] ss:$2 sm:$0x3]
    %v1394 = vadd.f32 %v1392, 1e-05
    %v1395 = vrsqrt.pop %v1394
    %v1396 = vmul.f32 %v1395, %v1394
    %v1397 = vmul.f32 %v1396, %v1395
    %v1398 = vmul.f32 0.5, %v1397
    %v1399 = vsub.f32 1.5, %v1398
    %v1400 = vmul.f32 %v1395, %v1399
    %vm1401 = vweird.f32 %v1394
    %vm1402 = vweird.f32 %v1395
    %vm1403 = vmor %vm1401, %vm1402
    %v1404 = vsel %vm1403, %v1395, %v1400
    %1406 = vst [vmem:[#allocation1] sm:$0xff] %v1404
    %1407 = vst [vmem:[#allocation1 + $0x9] sm:$0xff] %v1404
    %s1408 = scalar_lea.vmem [#allocation1], 1
    %v1409 = vld [vmem:[%s1408] ss:$9 sm:$0xff]
    %v1411 = vmul.f32 %v1393, %v1409
    %s1412 = scalar_lea.vmem [#allocation13], 1
    %v1413 = vld [vmem:[%s1412] ss:$2 sm:$0x3]
    %v1415 = vperm.slane %v1411, 0
    %v1416 = vperm.slane %v1411, 1
    %v1419 = vmul.f32 %v1386, %v1415
    %v1420 = vmul.f32 %v1386, %v1416
    %v1423 = vrot.slane %v1420, 7
    %v1424 = vsel %vm606, %v1419, %v1423
    %v1426 = vsub.f32 %v1413, %v1424
    %v1427 = vmul.f32 %v1306, %v1415
    %v1428 = vmul.f32 %v1329, %v1416
    %v1429 = vmul.f32 %v1309, %v1415
    %v1430 = vmul.f32 %v1332, %v1416
    %v1432 = vperm.slane %v1426, 0
    %v1433 = vperm.slane %v1426, 1
    %v1436 = vadd.f32 %v1427, %v1432
    %v1437 = vadd.f32 %v1428, %v1433
    %v1438 = vadd.f32 %v1429, %v1432
    %v1439 = vadd.f32 %v1430, %v1433
    %vm1440 = vcmp.gt.f32.partialorder %v1436, 0.0
    %vm1441 = vcmp.gt.f32.partialorder %v1437, 0.0
    %vm1442 = vcmp.gt.f32.partialorder %v1438, 0.0
    %vm1443 = vcmp.gt.f32.partialorder %v1439, 0.0
    %v1444 = vmul.f32 %v1436, 1.442695
    %v1445 = vpow.pop %v1444
    %v1446 = vmul.f32 %v1437, 1.442695
    %v1447 = vpow.pop %v1446
    %v1448 = vmul.f32 %v1438, 1.442695
    %v1449 = vpow.pop %v1448
    %v1450 = vmul.f32 %v1439, 1.442695
    %v1451 = vpow.pop %v1450
    %v1452 = vsub.f32 %v1445, 1.0
    %v1453 = vsub.f32 %v1447, 1.0
    %v1454 = vsub.f32 %v1449, 1.0
    %v1455 = vsub.f32 %v1451, 1.0
    %v1456 = vsel %vm1440, %v1436, %v1452
    %v1457 = vsel %vm1441, %v1437, %v1453
    %v1458 = vsel %vm1442, %v1438, %v1454
    %v1459 = vsel %vm1443, %v1439, %v1455
    %s1460 = sshll.u32 %s682, 4
    %1461 = dma.done %s144, %s1460
    %v1462 = vld [vmem:[#allocation4] sm:$0xff]
    %v1463 = vld [vmem:[#allocation4 + $0x8] sm:$0xff]
    %v1464 = vld [vmem:[#allocation4 + $0x10] sm:$0xff]
    %v1465 = vld [vmem:[#allocation4 + $0x18] sm:$0xff]
    %v1466 = vld [vmem:[#allocation4 + $0x20] sm:$0xff]
    %v1467 = vld [vmem:[#allocation4 + $0x28] sm:$0xff]
    %v1468 = vld [vmem:[#allocation4 + $0x30] sm:$0xff]
    %v1469 = vld [vmem:[#allocation4 + $0x38] sm:$0xff]
    %v1470 = vld [vmem:[#allocation4 + $0x40] sm:$0xff]
    %v1471 = vld [vmem:[#allocation4 + $0x48] sm:$0xff]
    %v1472 = vld [vmem:[#allocation4 + $0x50] sm:$0xff]
    %v1473 = vld [vmem:[#allocation4 + $0x58] sm:$0xff]
    %v1474 = vld [vmem:[#allocation4 + $0x60] sm:$0xff]
    %v1475 = vld [vmem:[#allocation4 + $0x68] sm:$0xff]
    %v1476 = vld [vmem:[#allocation4 + $0x70] sm:$0xff]
    %v1477 = vld [vmem:[#allocation4 + $0x78] sm:$0xff]
    %v1478 = vld [vmem:[#allocation4 + $0x80] sm:$0xff]
    %v1479 = vld [vmem:[#allocation4 + $0x88] sm:$0xff]
    %v1480 = vld [vmem:[#allocation4 + $0x90] sm:$0xff]
    %v1481 = vld [vmem:[#allocation4 + $0x98] sm:$0xff]
    %v1482 = vld [vmem:[#allocation4 + $0xa0] sm:$0xff]
    %v1483 = vld [vmem:[#allocation4 + $0xa8] sm:$0xff]
    %v1484 = vld [vmem:[#allocation4 + $0xb0] sm:$0xff]
    %v1485 = vld [vmem:[#allocation4 + $0xb8] sm:$0xff]
    %v1486 = vld [vmem:[#allocation4 + $0xc0] sm:$0xff]
    %v1487 = vld [vmem:[#allocation4 + $0xc8] sm:$0xff]
    %v1488 = vld [vmem:[#allocation4 + $0xd0] sm:$0xff]
    %v1489 = vld [vmem:[#allocation4 + $0xd8] sm:$0xff]
    %v1490 = vld [vmem:[#allocation4 + $0xe0] sm:$0xff]
    %v1491 = vld [vmem:[#allocation4 + $0xe8] sm:$0xff]
    %v1492 = vld [vmem:[#allocation4 + $0xf0] sm:$0xff]
    %v1493 = vld [vmem:[#allocation4 + $0xf8] sm:$0xff]
    %v1494 = vld [vmem:[#allocation4 + $0x100] sm:$0xff]
    %v1495 = vld [vmem:[#allocation4 + $0x108] sm:$0xff]
    %v1496 = vld [vmem:[#allocation4 + $0x110] sm:$0xff]
    %v1497 = vld [vmem:[#allocation4 + $0x118] sm:$0xff]
    %v1498 = vld [vmem:[#allocation4 + $0x120] sm:$0xff]
    %v1499 = vld [vmem:[#allocation4 + $0x128] sm:$0xff]
    %v1500 = vld [vmem:[#allocation4 + $0x130] sm:$0xff]
    %v1501 = vld [vmem:[#allocation4 + $0x138] sm:$0xff]
    %v1502 = vld [vmem:[#allocation4 + $0x140] sm:$0xff]
    %v1503 = vld [vmem:[#allocation4 + $0x148] sm:$0xff]
    %v1504 = vld [vmem:[#allocation4 + $0x150] sm:$0xff]
    %v1505 = vld [vmem:[#allocation4 + $0x158] sm:$0xff]
    %v1506 = vld [vmem:[#allocation4 + $0x160] sm:$0xff]
    %v1507 = vld [vmem:[#allocation4 + $0x168] sm:$0xff]
    %v1508 = vld [vmem:[#allocation4 + $0x170] sm:$0xff]
    %v1509 = vld [vmem:[#allocation4 + $0x178] sm:$0xff]
    %v1510 = vld [vmem:[#allocation4 + $0x180] sm:$0xff]
    %v1511 = vld [vmem:[#allocation4 + $0x188] sm:$0xff]
    %v1512 = vld [vmem:[#allocation4 + $0x190] sm:$0xff]
    %v1513 = vld [vmem:[#allocation4 + $0x198] sm:$0xff]
    %v1514 = vld [vmem:[#allocation4 + $0x1a0] sm:$0xff]
    %v1515 = vld [vmem:[#allocation4 + $0x1a8] sm:$0xff]
    %v1516 = vld [vmem:[#allocation4 + $0x1b0] sm:$0xff]
    %v1517 = vld [vmem:[#allocation4 + $0x1b8] sm:$0xff]
    %v1518 = vld [vmem:[#allocation4 + $0x1c0] sm:$0xff]
    %v1519 = vld [vmem:[#allocation4 + $0x1c8] sm:$0xff]
    %v1520 = vld [vmem:[#allocation4 + $0x1d0] sm:$0xff]
    %v1521 = vld [vmem:[#allocation4 + $0x1d8] sm:$0xff]
    %v1522 = vld [vmem:[#allocation4 + $0x1e0] sm:$0xff]
    %v1523 = vld [vmem:[#allocation4 + $0x1e8] sm:$0xff]
    %v1524 = vld [vmem:[#allocation4 + $0x1f0] sm:$0xff]
    %v1525 = vld [vmem:[#allocation4 + $0x1f8] sm:$0xff]
    %v1526 = vld [vmem:[#allocation4 + $0x200] sm:$0xff]
    %v1527 = vld [vmem:[#allocation4 + $0x208] sm:$0xff]
    %v1528 = vld [vmem:[#allocation4 + $0x210] sm:$0xff]
    %v1529 = vld [vmem:[#allocation4 + $0x218] sm:$0xff]
    %v1530 = vld [vmem:[#allocation4 + $0x220] sm:$0xff]
    %v1531 = vld [vmem:[#allocation4 + $0x228] sm:$0xff]
    %v1532 = vld [vmem:[#allocation4 + $0x230] sm:$0xff]
    %v1533 = vld [vmem:[#allocation4 + $0x238] sm:$0xff]
    %v1534 = vld [vmem:[#allocation4 + $0x240] sm:$0xff]
    %v1535 = vld [vmem:[#allocation4 + $0x248] sm:$0xff]
    %v1536 = vld [vmem:[#allocation4 + $0x250] sm:$0xff]
    %v1537 = vld [vmem:[#allocation4 + $0x258] sm:$0xff]
    %v1538 = vld [vmem:[#allocation4 + $0x260] sm:$0xff]
    %v1539 = vld [vmem:[#allocation4 + $0x268] sm:$0xff]
    %v1540 = vld [vmem:[#allocation4 + $0x270] sm:$0xff]
    %v1541 = vld [vmem:[#allocation4 + $0x278] sm:$0xff]
    %v1542 = vld [vmem:[#allocation4 + $0x280] sm:$0xff]
    %v1543 = vld [vmem:[#allocation4 + $0x288] sm:$0xff]
    %v1544 = vld [vmem:[#allocation4 + $0x290] sm:$0xff]
    %v1545 = vld [vmem:[#allocation4 + $0x298] sm:$0xff]
    %v1546 = vld [vmem:[#allocation4 + $0x2a0] sm:$0xff]
    %v1547 = vld [vmem:[#allocation4 + $0x2a8] sm:$0xff]
    %v1548 = vld [vmem:[#allocation4 + $0x2b0] sm:$0xff]
    %v1549 = vld [vmem:[#allocation4 + $0x2b8] sm:$0xff]
    %v1550 = vld [vmem:[#allocation4 + $0x2c0] sm:$0xff]
    %v1551 = vld [vmem:[#allocation4 + $0x2c8] sm:$0xff]
    %v1552 = vld [vmem:[#allocation4 + $0x2d0] sm:$0xff]
    %v1553 = vld [vmem:[#allocation4 + $0x2d8] sm:$0xff]
    %v1554 = vld [vmem:[#allocation4 + $0x2e0] sm:$0xff]
    %v1555 = vld [vmem:[#allocation4 + $0x2e8] sm:$0xff]
    %v1556 = vld [vmem:[#allocation4 + $0x2f0] sm:$0xff]
    %v1557 = vld [vmem:[#allocation4 + $0x2f8] sm:$0xff]
    %v1558 = vld [vmem:[#allocation4 + $0x300] sm:$0xff]
    %v1559 = vld [vmem:[#allocation4 + $0x308] sm:$0xff]
    %v1560 = vld [vmem:[#allocation4 + $0x310] sm:$0xff]
    %v1561 = vld [vmem:[#allocation4 + $0x318] sm:$0xff]
    %v1562 = vld [vmem:[#allocation4 + $0x320] sm:$0xff]
    %v1563 = vld [vmem:[#allocation4 + $0x328] sm:$0xff]
    %v1564 = vld [vmem:[#allocation4 + $0x330] sm:$0xff]
    %v1565 = vld [vmem:[#allocation4 + $0x338] sm:$0xff]
    %v1566 = vld [vmem:[#allocation4 + $0x340] sm:$0xff]
    %v1567 = vld [vmem:[#allocation4 + $0x348] sm:$0xff]
    %v1568 = vld [vmem:[#allocation4 + $0x350] sm:$0xff]
    %v1569 = vld [vmem:[#allocation4 + $0x358] sm:$0xff]
    %v1570 = vld [vmem:[#allocation4 + $0x360] sm:$0xff]
    %v1571 = vld [vmem:[#allocation4 + $0x368] sm:$0xff]
    %v1572 = vld [vmem:[#allocation4 + $0x370] sm:$0xff]
    %v1573 = vld [vmem:[#allocation4 + $0x378] sm:$0xff]
    %v1574 = vld [vmem:[#allocation4 + $0x380] sm:$0xff]
    %v1575 = vld [vmem:[#allocation4 + $0x388] sm:$0xff]
    %v1576 = vld [vmem:[#allocation4 + $0x390] sm:$0xff]
    %v1577 = vld [vmem:[#allocation4 + $0x398] sm:$0xff]
    %v1578 = vld [vmem:[#allocation4 + $0x3a0] sm:$0xff]
    %v1579 = vld [vmem:[#allocation4 + $0x3a8] sm:$0xff]
    %v1580 = vld [vmem:[#allocation4 + $0x3b0] sm:$0xff]
    %v1581 = vld [vmem:[#allocation4 + $0x3b8] sm:$0xff]
    %v1582 = vld [vmem:[#allocation4 + $0x3c0] sm:$0xff]
    %v1583 = vld [vmem:[#allocation4 + $0x3c8] sm:$0xff]
    %v1584 = vld [vmem:[#allocation4 + $0x3d0] sm:$0xff]
    %v1585 = vld [vmem:[#allocation4 + $0x3d8] sm:$0xff]
    %v1586 = vld [vmem:[#allocation4 + $0x3e0] sm:$0xff]
    %v1587 = vld [vmem:[#allocation4 + $0x3e8] sm:$0xff]
    %v1588 = vld [vmem:[#allocation4 + $0x3f0] sm:$0xff]
    %v1589 = vld [vmem:[#allocation4 + $0x3f8] sm:$0xff]
    %v1590 = vld [vmem:[#allocation4 + $0x400] sm:$0xff]
    %v1591 = vld [vmem:[#allocation4 + $0x408] sm:$0xff]
    %v1592 = vld [vmem:[#allocation4 + $0x410] sm:$0xff]
    %v1593 = vld [vmem:[#allocation4 + $0x418] sm:$0xff]
    %v1594 = vld [vmem:[#allocation4 + $0x420] sm:$0xff]
    %v1595 = vld [vmem:[#allocation4 + $0x428] sm:$0xff]
    %v1596 = vld [vmem:[#allocation4 + $0x430] sm:$0xff]
    %v1597 = vld [vmem:[#allocation4 + $0x438] sm:$0xff]
    %v1598 = vld [vmem:[#allocation4 + $0x440] sm:$0xff]
    %v1599 = vld [vmem:[#allocation4 + $0x448] sm:$0xff]
    %v1600 = vld [vmem:[#allocation4 + $0x450] sm:$0xff]
    %v1601 = vld [vmem:[#allocation4 + $0x458] sm:$0xff]
    %v1602 = vld [vmem:[#allocation4 + $0x460] sm:$0xff]
    %v1603 = vld [vmem:[#allocation4 + $0x468] sm:$0xff]
    %v1604 = vld [vmem:[#allocation4 + $0x470] sm:$0xff]
    %v1605 = vld [vmem:[#allocation4 + $0x478] sm:$0xff]
    %v1606 = vld [vmem:[#allocation4 + $0x480] sm:$0xff]
    %v1607 = vld [vmem:[#allocation4 + $0x488] sm:$0xff]
    %v1608 = vld [vmem:[#allocation4 + $0x490] sm:$0xff]
    %v1609 = vld [vmem:[#allocation4 + $0x498] sm:$0xff]
    %v1610 = vld [vmem:[#allocation4 + $0x4a0] sm:$0xff]
    %v1611 = vld [vmem:[#allocation4 + $0x4a8] sm:$0xff]
    %v1612 = vld [vmem:[#allocation4 + $0x4b0] sm:$0xff]
    %v1613 = vld [vmem:[#allocation4 + $0x4b8] sm:$0xff]
    %v1614 = vld [vmem:[#allocation4 + $0x4c0] sm:$0xff]
    %v1615 = vld [vmem:[#allocation4 + $0x4c8] sm:$0xff]
    %v1616 = vld [vmem:[#allocation4 + $0x4d0] sm:$0xff]
    %v1617 = vld [vmem:[#allocation4 + $0x4d8] sm:$0xff]
    %v1618 = vld [vmem:[#allocation4 + $0x4e0] sm:$0xff]
    %v1619 = vld [vmem:[#allocation4 + $0x4e8] sm:$0xff]
    %v1620 = vld [vmem:[#allocation4 + $0x4f0] sm:$0xff]
    %v1621 = vld [vmem:[#allocation4 + $0x4f8] sm:$0xff]
    %v1622 = vld [vmem:[#allocation4 + $0x500] sm:$0xff]
    %v1623 = vld [vmem:[#allocation4 + $0x508] sm:$0xff]
    %v1624 = vld [vmem:[#allocation4 + $0x510] sm:$0xff]
    %v1625 = vld [vmem:[#allocation4 + $0x518] sm:$0xff]
    %v1626 = vld [vmem:[#allocation4 + $0x520] sm:$0xff]
    %v1627 = vld [vmem:[#allocation4 + $0x528] sm:$0xff]
    %v1628 = vld [vmem:[#allocation4 + $0x530] sm:$0xff]
    %v1629 = vld [vmem:[#allocation4 + $0x538] sm:$0xff]
    %v1630 = vld [vmem:[#allocation4 + $0x540] sm:$0xff]
    %v1631 = vld [vmem:[#allocation4 + $0x548] sm:$0xff]
    %v1632 = vld [vmem:[#allocation4 + $0x550] sm:$0xff]
    %v1633 = vld [vmem:[#allocation4 + $0x558] sm:$0xff]
    %v1634 = vld [vmem:[#allocation4 + $0x560] sm:$0xff]
    %v1635 = vld [vmem:[#allocation4 + $0x568] sm:$0xff]
    %v1636 = vld [vmem:[#allocation4 + $0x570] sm:$0xff]
    %v1637 = vld [vmem:[#allocation4 + $0x578] sm:$0xff]
    %v1638 = vld [vmem:[#allocation4 + $0x580] sm:$0xff]
    %v1639 = vld [vmem:[#allocation4 + $0x588] sm:$0xff]
    %v1640 = vld [vmem:[#allocation4 + $0x590] sm:$0xff]
    %v1641 = vld [vmem:[#allocation4 + $0x598] sm:$0xff]
    %v1642 = vld [vmem:[#allocation4 + $0x5a0] sm:$0xff]
    %v1643 = vld [vmem:[#allocation4 + $0x5a8] sm:$0xff]
    %v1644 = vld [vmem:[#allocation4 + $0x5b0] sm:$0xff]
    %v1645 = vld [vmem:[#allocation4 + $0x5b8] sm:$0xff]
    %v1646 = vld [vmem:[#allocation4 + $0x5c0] sm:$0xff]
    %v1647 = vld [vmem:[#allocation4 + $0x5c8] sm:$0xff]
    %v1648 = vld [vmem:[#allocation4 + $0x5d0] sm:$0xff]
    %v1649 = vld [vmem:[#allocation4 + $0x5d8] sm:$0xff]
    %v1650 = vld [vmem:[#allocation4 + $0x5e0] sm:$0xff]
    %v1651 = vld [vmem:[#allocation4 + $0x5e8] sm:$0xff]
    %v1652 = vld [vmem:[#allocation4 + $0x5f0] sm:$0xff]
    %v1653 = vld [vmem:[#allocation4 + $0x5f8] sm:$0xff]
    %v1654 = vld [vmem:[#allocation4 + $0x600] sm:$0xff]
    %v1655 = vld [vmem:[#allocation4 + $0x608] sm:$0xff]
    %v1656 = vld [vmem:[#allocation4 + $0x610] sm:$0xff]
    %v1657 = vld [vmem:[#allocation4 + $0x618] sm:$0xff]
    %v1658 = vld [vmem:[#allocation4 + $0x620] sm:$0xff]
    %v1659 = vld [vmem:[#allocation4 + $0x628] sm:$0xff]
    %v1660 = vld [vmem:[#allocation4 + $0x630] sm:$0xff]
    %v1661 = vld [vmem:[#allocation4 + $0x638] sm:$0xff]
    %v1662 = vld [vmem:[#allocation4 + $0x640] sm:$0xff]
    %v1663 = vld [vmem:[#allocation4 + $0x648] sm:$0xff]
    %v1664 = vld [vmem:[#allocation4 + $0x650] sm:$0xff]
    %v1665 = vld [vmem:[#allocation4 + $0x658] sm:$0xff]
    %v1666 = vld [vmem:[#allocation4 + $0x660] sm:$0xff]
    %v1667 = vld [vmem:[#allocation4 + $0x668] sm:$0xff]
    %v1668 = vld [vmem:[#allocation4 + $0x670] sm:$0xff]
    %v1669 = vld [vmem:[#allocation4 + $0x678] sm:$0xff]
    %v1670 = vld [vmem:[#allocation4 + $0x680] sm:$0xff]
    %v1671 = vld [vmem:[#allocation4 + $0x688] sm:$0xff]
    %v1672 = vld [vmem:[#allocation4 + $0x690] sm:$0xff]
    %v1673 = vld [vmem:[#allocation4 + $0x698] sm:$0xff]
    %v1674 = vld [vmem:[#allocation4 + $0x6a0] sm:$0xff]
    %v1675 = vld [vmem:[#allocation4 + $0x6a8] sm:$0xff]
    %v1676 = vld [vmem:[#allocation4 + $0x6b0] sm:$0xff]
    %v1677 = vld [vmem:[#allocation4 + $0x6b8] sm:$0xff]
    %v1678 = vld [vmem:[#allocation4 + $0x6c0] sm:$0xff]
    %v1679 = vld [vmem:[#allocation4 + $0x6c8] sm:$0xff]
    %v1680 = vld [vmem:[#allocation4 + $0x6d0] sm:$0xff]
    %v1681 = vld [vmem:[#allocation4 + $0x6d8] sm:$0xff]
    %v1682 = vld [vmem:[#allocation4 + $0x6e0] sm:$0xff]
    %v1683 = vld [vmem:[#allocation4 + $0x6e8] sm:$0xff]
    %v1684 = vld [vmem:[#allocation4 + $0x6f0] sm:$0xff]
    %v1685 = vld [vmem:[#allocation4 + $0x6f8] sm:$0xff]
    %v1686 = vld [vmem:[#allocation4 + $0x700] sm:$0xff]
    %v1687 = vld [vmem:[#allocation4 + $0x708] sm:$0xff]
    %v1688 = vld [vmem:[#allocation4 + $0x710] sm:$0xff]
    %v1689 = vld [vmem:[#allocation4 + $0x718] sm:$0xff]
    %v1690 = vld [vmem:[#allocation4 + $0x720] sm:$0xff]
    %v1691 = vld [vmem:[#allocation4 + $0x728] sm:$0xff]
    %v1692 = vld [vmem:[#allocation4 + $0x730] sm:$0xff]
    %v1693 = vld [vmem:[#allocation4 + $0x738] sm:$0xff]
    %v1694 = vld [vmem:[#allocation4 + $0x740] sm:$0xff]
    %v1695 = vld [vmem:[#allocation4 + $0x748] sm:$0xff]
    %v1696 = vld [vmem:[#allocation4 + $0x750] sm:$0xff]
    %v1697 = vld [vmem:[#allocation4 + $0x758] sm:$0xff]
    %v1698 = vld [vmem:[#allocation4 + $0x760] sm:$0xff]
    %v1699 = vld [vmem:[#allocation4 + $0x768] sm:$0xff]
    %v1700 = vld [vmem:[#allocation4 + $0x770] sm:$0xff]
    %v1701 = vld [vmem:[#allocation4 + $0x778] sm:$0xff]
    %v1702 = vld [vmem:[#allocation4 + $0x780] sm:$0xff]
    %v1703 = vld [vmem:[#allocation4 + $0x788] sm:$0xff]
    %v1704 = vld [vmem:[#allocation4 + $0x790] sm:$0xff]
    %v1705 = vld [vmem:[#allocation4 + $0x798] sm:$0xff]
    %v1706 = vld [vmem:[#allocation4 + $0x7a0] sm:$0xff]
    %v1707 = vld [vmem:[#allocation4 + $0x7a8] sm:$0xff]
    %v1708 = vld [vmem:[#allocation4 + $0x7b0] sm:$0xff]
    %v1709 = vld [vmem:[#allocation4 + $0x7b8] sm:$0xff]
    %v1710 = vld [vmem:[#allocation4 + $0x7c0] sm:$0xff]
    %v1711 = vld [vmem:[#allocation4 + $0x7c8] sm:$0xff]
    %v1712 = vld [vmem:[#allocation4 + $0x7d0] sm:$0xff]
    %v1713 = vld [vmem:[#allocation4 + $0x7d8] sm:$0xff]
    %v1714 = vld [vmem:[#allocation4 + $0x7e0] sm:$0xff]
    %v1715 = vld [vmem:[#allocation4 + $0x7e8] sm:$0xff]
    %v1716 = vld [vmem:[#allocation4 + $0x7f0] sm:$0xff]
    %v1717 = vld [vmem:[#allocation4 + $0x7f8] sm:$0xff]
    %1718 = vmatpush.msra.mxu0 %v1582
    %1719 = vmatpush.msra.mxu0 %v1574
    %1720 = vmatpush.msra.mxu0 %v1566
    %1721 = vmatpush.msra.mxu0 %v1558
    %1722 = vmatpush.msra.mxu0 %v1550
    %1723 = vmatpush.msra.mxu0 %v1542
    %1724 = vmatpush.msra.mxu0 %v1534
    %1725 = vmatpush.msra.mxu0 %v1526
    %1726 = vmatpush.msra.mxu0 %v1518
    %1727 = vmatpush.msra.mxu0 %v1510
    %1728 = vmatpush.msra.mxu0 %v1502
    %1729 = vmatpush.msra.mxu0 %v1494
    %1730 = vmatpush.msra.mxu0 %v1486
    %1731 = vmatpush.msra.mxu0 %v1478
    %1732 = vmatpush.msra.mxu0 %v1470
    %1733 = vmatpush.msra.mxu0 %v1462
    %1734 = vmatmul.f32.gmra.mxu0 %v1456
    %v1735 = vpop.f32.mrf.mxu0
    %v1736 = vadd.f32 0.0, %v1735
    %1737 = vmatmul.f32.gmra.mxu0 %v1458
    %v1738 = vpop.f32.mrf.mxu0
    %v1739 = vadd.f32 0.0, %v1738
    %1740 = vdwg.mxu0
    %1741 = vmatpush.msra.mxu0 %v1710
    %1742 = vmatpush.msra.mxu0 %v1702
    %1743 = vmatpush.msra.mxu0 %v1694
    %1744 = vmatpush.msra.mxu0 %v1686
    %1745 = vmatpush.msra.mxu0 %v1678
    %1746 = vmatpush.msra.mxu0 %v1670
    %1747 = vmatpush.msra.mxu0 %v1662
    %1748 = vmatpush.msra.mxu0 %v1654
    %1749 = vmatpush.msra.mxu0 %v1646
    %1750 = vmatpush.msra.mxu0 %v1638
    %1751 = vmatpush.msra.mxu0 %v1630
    %1752 = vmatpush.msra.mxu0 %v1622
    %1753 = vmatpush.msra.mxu0 %v1614
    %1754 = vmatpush.msra.mxu0 %v1606
    %1755 = vmatpush.msra.mxu0 %v1598
    %1756 = vmatpush.msra.mxu0 %v1590
    %1757 = vmatmul.f32.gmra.mxu0 %v1457
    %v1758 = vpop.f32.mrf.mxu0
    %v1759 = vadd.f32 %v1736, %v1758
    %1760 = vmatmul.f32.gmra.mxu0 %v1459
    %v1761 = vpop.f32.mrf.mxu0
    %v1762 = vadd.f32 %v1739, %v1761
    %1763 = vdwg.mxu0
    %1764 = vmatpush.msra.mxu0 %v1583
    %1765 = vmatpush.msra.mxu0 %v1575
    %1766 = vmatpush.msra.mxu0 %v1567
    %1767 = vmatpush.msra.mxu0 %v1559
    %1768 = vmatpush.msra.mxu0 %v1551
    %1769 = vmatpush.msra.mxu0 %v1543
    %1770 = vmatpush.msra.mxu0 %v1535
    %1771 = vmatpush.msra.mxu0 %v1527
    %1772 = vmatpush.msra.mxu0 %v1519
    %1773 = vmatpush.msra.mxu0 %v1511
    %1774 = vmatpush.msra.mxu0 %v1503
    %1775 = vmatpush.msra.mxu0 %v1495
    %1776 = vmatpush.msra.mxu0 %v1487
    %1777 = vmatpush.msra.mxu0 %v1479
    %1778 = vmatpush.msra.mxu0 %v1471
    %1779 = vmatpush.msra.mxu0 %v1463
    %1780 = vmatmul.f32.gmra.mxu0 %v1456
    %v1781 = vpop.f32.mrf.mxu0
    %v1782 = vadd.f32 0.0, %v1781
    %1783 = vmatmul.f32.gmra.mxu0 %v1458
    %v1784 = vpop.f32.mrf.mxu0
    %v1785 = vadd.f32 0.0, %v1784
    %1786 = vdwg.mxu0
    %1787 = vmatpush.msra.mxu0 %v1711
    %1788 = vmatpush.msra.mxu0 %v1703
    %1789 = vmatpush.msra.mxu0 %v1695
    %1790 = vmatpush.msra.mxu0 %v1687
    %1791 = vmatpush.msra.mxu0 %v1679
    %1792 = vmatpush.msra.mxu0 %v1671
    %1793 = vmatpush.msra.mxu0 %v1663
    %1794 = vmatpush.msra.mxu0 %v1655
    %1795 = vmatpush.msra.mxu0 %v1647
    %1796 = vmatpush.msra.mxu0 %v1639
    %1797 = vmatpush.msra.mxu0 %v1631
    %1798 = vmatpush.msra.mxu0 %v1623
    %1799 = vmatpush.msra.mxu0 %v1615
    %1800 = vmatpush.msra.mxu0 %v1607
    %1801 = vmatpush.msra.mxu0 %v1599
    %1802 = vmatpush.msra.mxu0 %v1591
    %1803 = vmatmul.f32.gmra.mxu0 %v1457
    %v1804 = vpop.f32.mrf.mxu0
    %v1805 = vadd.f32 %v1782, %v1804
    %1806 = vmatmul.f32.gmra.mxu0 %v1459
    %v1807 = vpop.f32.mrf.mxu0
    %v1808 = vadd.f32 %v1785, %v1807
    %1809 = vdwg.mxu0
    %1810 = vmatpush.msra.mxu0 %v1584
    %1811 = vmatpush.msra.mxu0 %v1576
    %1812 = vmatpush.msra.mxu0 %v1568
    %1813 = vmatpush.msra.mxu0 %v1560
    %1814 = vmatpush.msra.mxu0 %v1552
    %1815 = vmatpush.msra.mxu0 %v1544
    %1816 = vmatpush.msra.mxu0 %v1536
    %1817 = vmatpush.msra.mxu0 %v1528
    %1818 = vmatpush.msra.mxu0 %v1520
    %1819 = vmatpush.msra.mxu0 %v1512
    %1820 = vmatpush.msra.mxu0 %v1504
    %1821 = vmatpush.msra.mxu0 %v1496
    %1822 = vmatpush.msra.mxu0 %v1488
    %1823 = vmatpush.msra.mxu0 %v1480
    %1824 = vmatpush.msra.mxu0 %v1472
    %1825 = vmatpush.msra.mxu0 %v1464
    %1826 = vmatmul.f32.gmra.mxu0 %v1456
    %v1827 = vpop.f32.mrf.mxu0
    %v1828 = vadd.f32 0.0, %v1827
    %1829 = vmatmul.f32.gmra.mxu0 %v1458
    %v1830 = vpop.f32.mrf.mxu0
    %v1831 = vadd.f32 0.0, %v1830
    %1832 = vdwg.mxu0
    %1833 = vmatpush.msra.mxu0 %v1712
    %1834 = vmatpush.msra.mxu0 %v1704
    %1835 = vmatpush.msra.mxu0 %v1696
    %1836 = vmatpush.msra.mxu0 %v1688
    %1837 = vmatpush.msra.mxu0 %v1680
    %1838 = vmatpush.msra.mxu0 %v1672
    %1839 = vmatpush.msra.mxu0 %v1664
    %1840 = vmatpush.msra.mxu0 %v1656
    %1841 = vmatpush.msra.mxu0 %v1648
    %1842 = vmatpush.msra.mxu0 %v1640
    %1843 = vmatpush.msra.mxu0 %v1632
    %1844 = vmatpush.msra.mxu0 %v1624
    %1845 = vmatpush.msra.mxu0 %v1616
    %1846 = vmatpush.msra.mxu0 %v1608
    %1847 = vmatpush.msra.mxu0 %v1600
    %1848 = vmatpush.msra.mxu0 %v1592
    %1849 = vmatmul.f32.gmra.mxu0 %v1457
    %v1850 = vpop.f32.mrf.mxu0
    %v1851 = vadd.f32 %v1828, %v1850
    %1852 = vmatmul.f32.gmra.mxu0 %v1459
    %v1853 = vpop.f32.mrf.mxu0
    %v1854 = vadd.f32 %v1831, %v1853
    %1855 = vdwg.mxu0
    %1856 = vmatpush.msra.mxu0 %v1585
    %1857 = vmatpush.msra.mxu0 %v1577
    %1858 = vmatpush.msra.mxu0 %v1569
    %1859 = vmatpush.msra.mxu0 %v1561
    %1860 = vmatpush.msra.mxu0 %v1553
    %1861 = vmatpush.msra.mxu0 %v1545
    %1862 = vmatpush.msra.mxu0 %v1537
    %1863 = vmatpush.msra.mxu0 %v1529
    %1864 = vmatpush.msra.mxu0 %v1521
    %1865 = vmatpush.msra.mxu0 %v1513
    %1866 = vmatpush.msra.mxu0 %v1505
    %1867 = vmatpush.msra.mxu0 %v1497
    %1868 = vmatpush.msra.mxu0 %v1489
    %1869 = vmatpush.msra.mxu0 %v1481
    %1870 = vmatpush.msra.mxu0 %v1473
    %1871 = vmatpush.msra.mxu0 %v1465
    %1872 = vmatmul.f32.gmra.mxu0 %v1456
    %v1873 = vpop.f32.mrf.mxu0
    %v1874 = vadd.f32 0.0, %v1873
    %1875 = vmatmul.f32.gmra.mxu0 %v1458
    %v1876 = vpop.f32.mrf.mxu0
    %v1877 = vadd.f32 0.0, %v1876
    %1878 = vdwg.mxu0
    %1879 = vmatpush.msra.mxu0 %v1713
    %1880 = vmatpush.msra.mxu0 %v1705
    %1881 = vmatpush.msra.mxu0 %v1697
    %1882 = vmatpush.msra.mxu0 %v1689
    %1883 = vmatpush.msra.mxu0 %v1681
    %1884 = vmatpush.msra.mxu0 %v1673
    %1885 = vmatpush.msra.mxu0 %v1665
    %1886 = vmatpush.msra.mxu0 %v1657
    %1887 = vmatpush.msra.mxu0 %v1649
    %1888 = vmatpush.msra.mxu0 %v1641
    %1889 = vmatpush.msra.mxu0 %v1633
    %1890 = vmatpush.msra.mxu0 %v1625
    %1891 = vmatpush.msra.mxu0 %v1617
    %1892 = vmatpush.msra.mxu0 %v1609
    %1893 = vmatpush.msra.mxu0 %v1601
    %1894 = vmatpush.msra.mxu0 %v1593
    %1895 = vmatmul.f32.gmra.mxu0 %v1457
    %v1896 = vpop.f32.mrf.mxu0
    %v1897 = vadd.f32 %v1874, %v1896
    %1898 = vmatmul.f32.gmra.mxu0 %v1459
    %v1899 = vpop.f32.mrf.mxu0
    %v1900 = vadd.f32 %v1877, %v1899
    %1901 = vdwg.mxu0
    %1902 = vmatpush.msra.mxu0 %v1586
    %1903 = vmatpush.msra.mxu0 %v1578
    %1904 = vmatpush.msra.mxu0 %v1570
    %1905 = vmatpush.msra.mxu0 %v1562
    %1906 = vmatpush.msra.mxu0 %v1554
    %1907 = vmatpush.msra.mxu0 %v1546
    %1908 = vmatpush.msra.mxu0 %v1538
    %1909 = vmatpush.msra.mxu0 %v1530
    %1910 = vmatpush.msra.mxu0 %v1522
    %1911 = vmatpush.msra.mxu0 %v1514
    %1912 = vmatpush.msra.mxu0 %v1506
    %1913 = vmatpush.msra.mxu0 %v1498
    %1914 = vmatpush.msra.mxu0 %v1490
    %1915 = vmatpush.msra.mxu0 %v1482
    %1916 = vmatpush.msra.mxu0 %v1474
    %1917 = vmatpush.msra.mxu0 %v1466
    %1918 = vmatmul.f32.gmra.mxu0 %v1456
    %v1919 = vpop.f32.mrf.mxu0
    %v1920 = vadd.f32 0.0, %v1919
    %1921 = vmatmul.f32.gmra.mxu0 %v1458
    %v1922 = vpop.f32.mrf.mxu0
    %v1923 = vadd.f32 0.0, %v1922
    %1924 = vdwg.mxu0
    %1925 = vmatpush.msra.mxu0 %v1714
    %1926 = vmatpush.msra.mxu0 %v1706
    %1927 = vmatpush.msra.mxu0 %v1698
    %1928 = vmatpush.msra.mxu0 %v1690
    %1929 = vmatpush.msra.mxu0 %v1682
    %1930 = vmatpush.msra.mxu0 %v1674
    %1931 = vmatpush.msra.mxu0 %v1666
    %1932 = vmatpush.msra.mxu0 %v1658
    %1933 = vmatpush.msra.mxu0 %v1650
    %1934 = vmatpush.msra.mxu0 %v1642
    %1935 = vmatpush.msra.mxu0 %v1634
    %1936 = vmatpush.msra.mxu0 %v1626
    %1937 = vmatpush.msra.mxu0 %v1618
    %1938 = vmatpush.msra.mxu0 %v1610
    %1939 = vmatpush.msra.mxu0 %v1602
    %1940 = vmatpush.msra.mxu0 %v1594
    %1941 = vmatmul.f32.gmra.mxu0 %v1457
    %v1942 = vpop.f32.mrf.mxu0
    %v1943 = vadd.f32 %v1920, %v1942
    %1944 = vmatmul.f32.gmra.mxu0 %v1459
    %v1945 = vpop.f32.mrf.mxu0
    %v1946 = vadd.f32 %v1923, %v1945
    %1947 = vdwg.mxu0
    %1948 = vmatpush.msra.mxu0 %v1587
    %1949 = vmatpush.msra.mxu0 %v1579
    %1950 = vmatpush.msra.mxu0 %v1571
    %1951 = vmatpush.msra.mxu0 %v1563
    %1952 = vmatpush.msra.mxu0 %v1555
    %1953 = vmatpush.msra.mxu0 %v1547
    %1954 = vmatpush.msra.mxu0 %v1539
    %1955 = vmatpush.msra.mxu0 %v1531
    %1956 = vmatpush.msra.mxu0 %v1523
    %1957 = vmatpush.msra.mxu0 %v1515
    %1958 = vmatpush.msra.mxu0 %v1507
    %1959 = vmatpush.msra.mxu0 %v1499
    %1960 = vmatpush.msra.mxu0 %v1491
    %1961 = vmatpush.msra.mxu0 %v1483
    %1962 = vmatpush.msra.mxu0 %v1475
    %1963 = vmatpush.msra.mxu0 %v1467
    %1964 = vmatmul.f32.gmra.mxu0 %v1456
    %v1965 = vpop.f32.mrf.mxu0
    %v1966 = vadd.f32 0.0, %v1965
    %1967 = vmatmul.f32.gmra.mxu0 %v1458
    %v1968 = vpop.f32.mrf.mxu0
    %v1969 = vadd.f32 0.0, %v1968
    %1970 = vdwg.mxu0
    %1971 = vmatpush.msra.mxu0 %v1715
    %1972 = vmatpush.msra.mxu0 %v1707
    %1973 = vmatpush.msra.mxu0 %v1699
    %1974 = vmatpush.msra.mxu0 %v1691
    %1975 = vmatpush.msra.mxu0 %v1683
    %1976 = vmatpush.msra.mxu0 %v1675
    %1977 = vmatpush.msra.mxu0 %v1667
    %1978 = vmatpush.msra.mxu0 %v1659
    %1979 = vmatpush.msra.mxu0 %v1651
    %1980 = vmatpush.msra.mxu0 %v1643
    %1981 = vmatpush.msra.mxu0 %v1635
    %1982 = vmatpush.msra.mxu0 %v1627
    %1983 = vmatpush.msra.mxu0 %v1619
    %1984 = vmatpush.msra.mxu0 %v1611
    %1985 = vmatpush.msra.mxu0 %v1603
    %1986 = vmatpush.msra.mxu0 %v1595
    %1987 = vmatmul.f32.gmra.mxu0 %v1457
    %v1988 = vpop.f32.mrf.mxu0
    %v1989 = vadd.f32 %v1966, %v1988
    %1990 = vmatmul.f32.gmra.mxu0 %v1459
    %v1991 = vpop.f32.mrf.mxu0
    %v1992 = vadd.f32 %v1969, %v1991
    %1993 = vdwg.mxu0
    %1994 = vmatpush.msra.mxu0 %v1588
    %1995 = vmatpush.msra.mxu0 %v1580
    %1996 = vmatpush.msra.mxu0 %v1572
    %1997 = vmatpush.msra.mxu0 %v1564
    %1998 = vmatpush.msra.mxu0 %v1556
    %1999 = vmatpush.msra.mxu0 %v1548
    %2000 = vmatpush.msra.mxu0 %v1540
    %2001 = vmatpush.msra.mxu0 %v1532
    %2002 = vmatpush.msra.mxu0 %v1524
    %2003 = vmatpush.msra.mxu0 %v1516
    %2004 = vmatpush.msra.mxu0 %v1508
    %2005 = vmatpush.msra.mxu0 %v1500
    %2006 = vmatpush.msra.mxu0 %v1492
    %2007 = vmatpush.msra.mxu0 %v1484
    %2008 = vmatpush.msra.mxu0 %v1476
    %2009 = vmatpush.msra.mxu0 %v1468
    %2010 = vmatmul.f32.gmra.mxu0 %v1456
    %v2011 = vpop.f32.mrf.mxu0
    %v2012 = vadd.f32 0.0, %v2011
    %2013 = vmatmul.f32.gmra.mxu0 %v1458
    %v2014 = vpop.f32.mrf.mxu0
    %v2015 = vadd.f32 0.0, %v2014
    %2016 = vdwg.mxu0
    %2017 = vmatpush.msra.mxu0 %v1716
    %2018 = vmatpush.msra.mxu0 %v1708
    %2019 = vmatpush.msra.mxu0 %v1700
    %2020 = vmatpush.msra.mxu0 %v1692
    %2021 = vmatpush.msra.mxu0 %v1684
    %2022 = vmatpush.msra.mxu0 %v1676
    %2023 = vmatpush.msra.mxu0 %v1668
    %2024 = vmatpush.msra.mxu0 %v1660
    %2025 = vmatpush.msra.mxu0 %v1652
    %2026 = vmatpush.msra.mxu0 %v1644
    %2027 = vmatpush.msra.mxu0 %v1636
    %2028 = vmatpush.msra.mxu0 %v1628
    %2029 = vmatpush.msra.mxu0 %v1620
    %2030 = vmatpush.msra.mxu0 %v1612
    %2031 = vmatpush.msra.mxu0 %v1604
    %2032 = vmatpush.msra.mxu0 %v1596
    %2033 = vmatmul.f32.gmra.mxu0 %v1457
    %v2034 = vpop.f32.mrf.mxu0
    %v2035 = vadd.f32 %v2012, %v2034
    %2036 = vmatmul.f32.gmra.mxu0 %v1459
    %v2037 = vpop.f32.mrf.mxu0
    %v2038 = vadd.f32 %v2015, %v2037
    %2039 = vdwg.mxu0
    %2040 = vmatpush.msra.mxu0 %v1589
    %2041 = vmatpush.msra.mxu0 %v1581
    %2042 = vmatpush.msra.mxu0 %v1573
    %2043 = vmatpush.msra.mxu0 %v1565
    %2044 = vmatpush.msra.mxu0 %v1557
    %2045 = vmatpush.msra.mxu0 %v1549
    %2046 = vmatpush.msra.mxu0 %v1541
    %2047 = vmatpush.msra.mxu0 %v1533
    %2048 = vmatpush.msra.mxu0 %v1525
    %2049 = vmatpush.msra.mxu0 %v1517
    %2050 = vmatpush.msra.mxu0 %v1509
    %2051 = vmatpush.msra.mxu0 %v1501
    %2052 = vmatpush.msra.mxu0 %v1493
    %2053 = vmatpush.msra.mxu0 %v1485
    %2054 = vmatpush.msra.mxu0 %v1477
    %2055 = vmatpush.msra.mxu0 %v1469
    %2056 = vmatmul.f32.gmra.mxu0 %v1456
    %v2057 = vpop.f32.mrf.mxu0
    %v2058 = vadd.f32 0.0, %v2057
    %2059 = vmatmul.f32.gmra.mxu0 %v1458
    %v2060 = vpop.f32.mrf.mxu0
    %v2061 = vadd.f32 0.0, %v2060
    %2062 = vdwg.mxu0
    %2063 = vmatpush.msra.mxu0 %v1717
    %2064 = vmatpush.msra.mxu0 %v1709
    %2065 = vmatpush.msra.mxu0 %v1701
    %2066 = vmatpush.msra.mxu0 %v1693
    %2067 = vmatpush.msra.mxu0 %v1685
    %2068 = vmatpush.msra.mxu0 %v1677
    %2069 = vmatpush.msra.mxu0 %v1669
    %2070 = vmatpush.msra.mxu0 %v1661
    %2071 = vmatpush.msra.mxu0 %v1653
    %2072 = vmatpush.msra.mxu0 %v1645
    %2073 = vmatpush.msra.mxu0 %v1637
    %2074 = vmatpush.msra.mxu0 %v1629
    %2075 = vmatpush.msra.mxu0 %v1621
    %2076 = vmatpush.msra.mxu0 %v1613
    %2077 = vmatpush.msra.mxu0 %v1605
    %2078 = vmatpush.msra.mxu0 %v1597
    %2079 = vmatmul.f32.gmra.mxu0 %v1457
    %v2080 = vpop.f32.mrf.mxu0
    %v2081 = vadd.f32 %v2058, %v2080
    %2082 = vmatmul.f32.gmra.mxu0 %v1459
    %v2083 = vpop.f32.mrf.mxu0
    %v2084 = vadd.f32 %v2061, %v2083
    %2085 = vdwg.mxu0
    %2086 = vst [vmem:[#allocation2] sm:$0xff] %v1759
    %2087 = vst [vmem:[#allocation2 + $0x8] sm:$0xff] %v1805
    %2088 = vst [vmem:[#allocation2 + $0x10] sm:$0xff] %v1762
    %2089 = vst [vmem:[#allocation2 + $0x18] sm:$0xff] %v1808
    %2090 = vst [vmem:[#allocation2 + $0x20] sm:$0xff] %v1851
    %2091 = vst [vmem:[#allocation2 + $0x28] sm:$0xff] %v1897
    %2092 = vst [vmem:[#allocation2 + $0x30] sm:$0xff] %v1854
    %2093 = vst [vmem:[#allocation2 + $0x38] sm:$0xff] %v1900
    %2094 = vst [vmem:[#allocation2 + $0x40] sm:$0xff] %v1943
    %2095 = vst [vmem:[#allocation2 + $0x48] sm:$0xff] %v1989
    %2096 = vst [vmem:[#allocation2 + $0x50] sm:$0xff] %v1946
    %2097 = vst [vmem:[#allocation2 + $0x58] sm:$0xff] %v1992
    %2098 = vst [vmem:[#allocation2 + $0x60] sm:$0xff] %v2035
    %2099 = vst [vmem:[#allocation2 + $0x68] sm:$0xff] %v2081
    %2100 = vst [vmem:[#allocation2 + $0x70] sm:$0xff] %v2038
    %2101 = vst [vmem:[#allocation2 + $0x78] sm:$0xff] %v2084
    %v2102 = vld [vmem:[%s6] sm:$0xf]
    %v2103 = vld [vmem:[%s6 + $0x4] sm:$0xf]
    %v2104 = vld [vmem:[%s6 + $0x8] sm:$0xf]
    %v2105 = vld [vmem:[%s6 + $0xc] sm:$0xf]
    %v2106 = vunpack.c.l.bf16 %v2102
    %v2107 = vunpack.c.l.bf16 %v2103
    %v2108 = vunpack.c.l.bf16 %v2104
    %v2109 = vunpack.c.l.bf16 %v2105
    %v2110 = vld [vmem:[#allocation2] sm:$0xff]
    %v2111 = vld [vmem:[#allocation2 + $0x8] sm:$0xff]
    %v2112 = vld [vmem:[#allocation2 + $0x10] sm:$0xff]
    %v2113 = vld [vmem:[#allocation2 + $0x18] sm:$0xff]
    %v2114 = vld [vmem:[#allocation2 + $0x20] sm:$0xff]
    %v2115 = vld [vmem:[#allocation2 + $0x28] sm:$0xff]
    %v2116 = vld [vmem:[#allocation2 + $0x30] sm:$0xff]
    %v2117 = vld [vmem:[#allocation2 + $0x38] sm:$0xff]
    %v2118 = vld [vmem:[#allocation2 + $0x40] sm:$0xff]
    %v2119 = vld [vmem:[#allocation2 + $0x48] sm:$0xff]
    %v2120 = vld [vmem:[#allocation2 + $0x50] sm:$0xff]
    %v2121 = vld [vmem:[#allocation2 + $0x58] sm:$0xff]
    %v2122 = vld [vmem:[#allocation2 + $0x60] sm:$0xff]
    %v2123 = vld [vmem:[#allocation2 + $0x68] sm:$0xff]
    %v2124 = vld [vmem:[#allocation2 + $0x70] sm:$0xff]
    %v2125 = vld [vmem:[#allocation2 + $0x78] sm:$0xff]
    %vm2126 = vcmask 523264
    %v2128 = vsel %vm2126, %v2106, 0
    %v2131 = vsel %vm2126, %v2107, 0
    %v2134 = vsel %vm2126, %v2108, 0
    %v2137 = vsel %vm2126, %v2109, 0
    %2139 = vmatpush.msra.mxu0 0.0
    %2140 = vmatpush.msra.mxu0 0.0
    %2141 = vmatpush.msra.mxu0 0.0
    %2142 = vmatpush.msra.mxu0 0.0
    %2143 = vmatpush.msra.mxu0 0.0
    %2144 = vmatpush.msra.mxu0 0.0
    %2145 = vmatpush.msra.mxu0 0.0
    %2146 = vmatpush.msra.mxu0 0.0
    %2147 = vmatpush.msra.mxu0 %v2124
    %2148 = vmatpush.msra.mxu0 %v2122
    %2149 = vmatpush.msra.mxu0 %v2120
    %2150 = vmatpush.msra.mxu0 %v2118
    %2151 = vmatpush.msra.mxu0 %v2116
    %2152 = vmatpush.msra.mxu0 %v2114
    %2153 = vmatpush.msra.mxu0 %v2112
    %2154 = vmatpush.msra.mxu0 %v2110
    %2155 = vmatmul.f32.gmra.mxu0 %v2128
    %v2156 = vpop.f32.mrf.mxu0
    %v2157 = vadd.f32 0.0, %v2156
    %2158 = vmatmul.f32.gmra.mxu0 %v2131
    %v2159 = vpop.f32.mrf.mxu0
    %v2160 = vadd.f32 0.0, %v2159
    %2161 = vmatmul.f32.gmra.mxu0 %v2134
    %v2162 = vpop.f32.mrf.mxu0
    %v2163 = vadd.f32 0.0, %v2162
    %2164 = vmatmul.f32.gmra.mxu0 %v2137
    %v2165 = vpop.f32.mrf.mxu0
    %v2166 = vadd.f32 0.0, %v2165
    %2167 = vdwg.mxu0
    %2168 = vmatpush.msra.mxu0 0.0
    %2169 = vmatpush.msra.mxu0 0.0
    %2170 = vmatpush.msra.mxu0 0.0
    %2171 = vmatpush.msra.mxu0 0.0
    %2172 = vmatpush.msra.mxu0 0.0
    %2173 = vmatpush.msra.mxu0 0.0
    %2174 = vmatpush.msra.mxu0 0.0
    %2175 = vmatpush.msra.mxu0 0.0
    %2176 = vmatpush.msra.mxu0 %v2125
    %2177 = vmatpush.msra.mxu0 %v2123
    %2178 = vmatpush.msra.mxu0 %v2121
    %2179 = vmatpush.msra.mxu0 %v2119
    %2180 = vmatpush.msra.mxu0 %v2117
    %2181 = vmatpush.msra.mxu0 %v2115
    %2182 = vmatpush.msra.mxu0 %v2113
    %2183 = vmatpush.msra.mxu0 %v2111
    %2184 = vmatmul.f32.gmra.mxu0 %v2128
    %v2185 = vpop.f32.mrf.mxu0
    %v2186 = vadd.f32 0.0, %v2185
    %2187 = vmatmul.f32.gmra.mxu0 %v2131
    %v2188 = vpop.f32.mrf.mxu0
    %v2189 = vadd.f32 0.0, %v2188
    %2190 = vmatmul.f32.gmra.mxu0 %v2134
    %v2191 = vpop.f32.mrf.mxu0
    %v2192 = vadd.f32 0.0, %v2191
    %2193 = vmatmul.f32.gmra.mxu0 %v2137
    %v2194 = vpop.f32.mrf.mxu0
    %v2195 = vadd.f32 0.0, %v2194
    %2196 = vdwg.mxu0
    %v2197 = vadd.f32 %v2157, %v2160
    %v2198 = vadd.f32 %v2197, %v2163
    %v2199 = vadd.f32 %v2198, %v2166
    %v2200 = vrot.slane %v2199, 4
    %v2201 = vadd.f32 %v2199, %v2200
    %v2202 = vrot.slane %v2201, 2
    %v2203 = vadd.f32 %v2201, %v2202
    %v2204 = vrot.slane %v2203, 1
    %v2205 = vadd.f32 %v2203, %v2204
    %v2206 = vadd.f32 %v2186, %v2189
    %v2207 = vadd.f32 %v2206, %v2192
    %v2208 = vadd.f32 %v2207, %v2195
    %v2209 = vrot.slane %v2208, 4
    %v2210 = vadd.f32 %v2208, %v2209
    %v2211 = vrot.slane %v2210, 2
    %v2212 = vadd.f32 %v2210, %v2211
    %v2213 = vrot.slane %v2212, 1
    %v2214 = vadd.f32 %v2212, %v2213
    %v2215 = vmul.f32 %v2157, %v2157
    %v2216 = vmul.f32 %v2186, %v2186
    %v2217 = vmul.f32 %v2160, %v2160
    %v2218 = vmul.f32 %v2189, %v2189
    %v2219 = vmul.f32 %v2163, %v2163
    %v2220 = vmul.f32 %v2192, %v2192
    %v2221 = vmul.f32 %v2166, %v2166
    %v2222 = vmul.f32 %v2195, %v2195
    %v2223 = vadd.f32 %v2215, %v2217
    %v2224 = vadd.f32 %v2223, %v2219
    %v2225 = vadd.f32 %v2224, %v2221
    %v2226 = vrot.slane %v2225, 4
    %v2227 = vadd.f32 %v2225, %v2226
    %v2228 = vrot.slane %v2227, 2
    %v2229 = vadd.f32 %v2227, %v2228
    %v2230 = vrot.slane %v2229, 1
    %v2231 = vadd.f32 %v2229, %v2230
    %v2232 = vadd.f32 %v2216, %v2218
    %v2233 = vadd.f32 %v2232, %v2220
    %v2234 = vadd.f32 %v2233, %v2222
    %v2235 = vrot.slane %v2234, 4
    %v2236 = vadd.f32 %v2234, %v2235
    %v2237 = vrot.slane %v2236, 2
    %v2238 = vadd.f32 %v2236, %v2237
    %v2239 = vrot.slane %v2238, 1
    %v2240 = vadd.f32 %v2238, %v2239
    %v2241 = vsel %vm606, %v2205, %v2231
    %v2242 = vsel %vm606, %v2214, %v2240
    %2243 = vrot.lane.b32.xlu0 %v2241, 16
    %v2244 = vpop.permute.xlu0 %2243
    %2245 = vrot.lane.b32.xlu0 %v2242, 16
    %v2246 = vpop.permute.xlu0 %2245
    %vm2247 = vcmp.lt.s32.totalorder %v614, 16
    %v2248 = vsel %vm2247, %v2244, %v2246
    %v2249 = vsel %vm2247, %v2246, %v2244
    %v2250 = vadd.f32 %v2241, %v2249
    %v2251 = vadd.f32 %v2242, %v2248
    %2252 = vrot.lane.b32.xlu0 %v2250, 32
    %v2253 = vpop.permute.xlu0 %2252
    %2254 = vrot.lane.b32.xlu0 %v2251, 32
    %v2255 = vpop.permute.xlu0 %2254
    %v2256 = vsel %vm1372, %v2253, %v2255
    %v2257 = vsel %vm1372, %v2255, %v2253
    %v2258 = vadd.f32 %v2250, %v2257
    %v2259 = vadd.f32 %v2251, %v2256
    %2260 = vrot.lane.b32.xlu0 %v2258, 64
    %v2261 = vpop.permute.xlu0 %2260
    %2262 = vrot.lane.b32.xlu0 %v2259, 64
    %v2263 = vpop.permute.xlu0 %2262
    %v2264 = vsel %vm615, %v2261, %v2263
    %v2265 = vsel %vm615, %v2263, %v2261
    %v2266 = vadd.f32 %v2258, %v2265
    %v2267 = vadd.f32 %v2259, %v2264
    %v2268 = vadd.f32 %v2266, %v2267
    %v2269 = vmul.f32 %v2268, 0.001953125
    %v2270 = vmul.f32 %v2269, %v2269
    %v2272 = vrot.slane %v2270, 7
    %v2274 = vsub.f32 %v2269, %v2272
    %v2275 = vmax.f32 %v2274, 0.0
    %v2276 = vld [vmem:[#allocation14] ss:$2 sm:$0x3]
    %v2277 = vadd.f32 %v2275, 1e-05
    %v2278 = vrsqrt.pop %v2277
    %v2279 = vmul.f32 %v2278, %v2277
    %v2280 = vmul.f32 %v2279, %v2278
    %v2281 = vmul.f32 0.5, %v2280
    %v2282 = vsub.f32 1.5, %v2281
    %v2283 = vmul.f32 %v2278, %v2282
    %vm2284 = vweird.f32 %v2277
    %vm2285 = vweird.f32 %v2278
    %vm2286 = vmor %vm2284, %vm2285
    %v2287 = vsel %vm2286, %v2278, %v2283
    %2289 = vst [vmem:[#allocation1] sm:$0xff] %v2287
    %2290 = vst [vmem:[#allocation1 + $0x9] sm:$0xff] %v2287
    %s2291 = scalar_lea.vmem [#allocation1], 1
    %v2292 = vld [vmem:[%s2291] ss:$9 sm:$0xff]
    %v2294 = vmul.f32 %v2276, %v2292
    %s2295 = scalar_lea.vmem [#allocation14], 1
    %v2296 = vld [vmem:[%s2295] ss:$2 sm:$0x3]
    %v2298 = vperm.slane %v2294, 0
    %v2299 = vperm.slane %v2294, 1
    %v2302 = vmul.f32 %v2269, %v2298
    %v2303 = vmul.f32 %v2269, %v2299
    %v2306 = vrot.slane %v2303, 7
    %v2307 = vsel %vm606, %v2302, %v2306
    %v2309 = vsub.f32 %v2296, %v2307
    %v2310 = vmul.f32 %v2157, %v2298
    %v2311 = vmul.f32 %v2186, %v2299
    %v2312 = vmul.f32 %v2160, %v2298
    %v2313 = vmul.f32 %v2189, %v2299
    %v2314 = vmul.f32 %v2163, %v2298
    %v2315 = vmul.f32 %v2192, %v2299
    %v2316 = vmul.f32 %v2166, %v2298
    %v2317 = vmul.f32 %v2195, %v2299
    %v2319 = vperm.slane %v2309, 0
    %v2320 = vperm.slane %v2309, 1
    %v2323 = vadd.f32 %v2310, %v2319
    %v2324 = vadd.f32 %v2311, %v2320
    %v2325 = vadd.f32 %v2312, %v2319
    %v2326 = vadd.f32 %v2313, %v2320
    %v2327 = vadd.f32 %v2314, %v2319
    %v2328 = vadd.f32 %v2315, %v2320
    %v2329 = vadd.f32 %v2316, %v2319
    %v2330 = vadd.f32 %v2317, %v2320
    %vm2331 = vcmp.gt.f32.partialorder %v2323, 0.0
    %vm2332 = vcmp.gt.f32.partialorder %v2324, 0.0
    %vm2333 = vcmp.gt.f32.partialorder %v2325, 0.0
    %vm2334 = vcmp.gt.f32.partialorder %v2326, 0.0
    %vm2335 = vcmp.gt.f32.partialorder %v2327, 0.0
    %vm2336 = vcmp.gt.f32.partialorder %v2328, 0.0
    %vm2337 = vcmp.gt.f32.partialorder %v2329, 0.0
    %vm2338 = vcmp.gt.f32.partialorder %v2330, 0.0
    %v2339 = vmul.f32 %v2323, 1.442695
    %v2340 = vpow.pop %v2339
    %v2341 = vmul.f32 %v2324, 1.442695
    %v2342 = vpow.pop %v2341
    %v2343 = vmul.f32 %v2325, 1.442695
    %v2344 = vpow.pop %v2343
    %v2345 = vmul.f32 %v2326, 1.442695
    %v2346 = vpow.pop %v2345
    %v2347 = vmul.f32 %v2327, 1.442695
    %v2348 = vpow.pop %v2347
    %v2349 = vmul.f32 %v2328, 1.442695
    %v2350 = vpow.pop %v2349
    %v2351 = vmul.f32 %v2329, 1.442695
    %v2352 = vpow.pop %v2351
    %v2353 = vmul.f32 %v2330, 1.442695
    %v2354 = vpow.pop %v2353
    %v2355 = vsub.f32 %v2340, 1.0
    %v2356 = vsub.f32 %v2342, 1.0
    %v2357 = vsub.f32 %v2344, 1.0
    %v2358 = vsub.f32 %v2346, 1.0
    %v2359 = vsub.f32 %v2348, 1.0
    %v2360 = vsub.f32 %v2350, 1.0
    %v2361 = vsub.f32 %v2352, 1.0
    %v2362 = vsub.f32 %v2354, 1.0
    %v2363 = vsel %vm2331, %v2323, %v2355
    %v2364 = vsel %vm2332, %v2324, %v2356
    %v2365 = vsel %vm2333, %v2325, %v2357
    %v2366 = vsel %vm2334, %v2326, %v2358
    %v2367 = vsel %vm2335, %v2327, %v2359
    %v2368 = vsel %vm2336, %v2328, %v2360
    %v2369 = vsel %vm2337, %v2329, %v2361
    %v2370 = vsel %vm2338, %v2330, %v2362
    %s2371 = sshll.u32 %s682, 4
    %2372 = dma.done %s158, %s2371
    %v2373 = vld [vmem:[#allocation5] sm:$0xff]
    %v2374 = vld [vmem:[#allocation5 + $0x8] sm:$0xff]
    %v2375 = vld [vmem:[#allocation5 + $0x10] sm:$0xff]
    %v2376 = vld [vmem:[#allocation5 + $0x18] sm:$0xff]
    %v2377 = vld [vmem:[#allocation5 + $0x20] sm:$0xff]
    %v2378 = vld [vmem:[#allocation5 + $0x28] sm:$0xff]
    %v2379 = vld [vmem:[#allocation5 + $0x30] sm:$0xff]
    %v2380 = vld [vmem:[#allocation5 + $0x38] sm:$0xff]
    %v2381 = vld [vmem:[#allocation5 + $0x40] sm:$0xff]
    %v2382 = vld [vmem:[#allocation5 + $0x48] sm:$0xff]
    %v2383 = vld [vmem:[#allocation5 + $0x50] sm:$0xff]
    %v2384 = vld [vmem:[#allocation5 + $0x58] sm:$0xff]
    %v2385 = vld [vmem:[#allocation5 + $0x60] sm:$0xff]
    %v2386 = vld [vmem:[#allocation5 + $0x68] sm:$0xff]
    %v2387 = vld [vmem:[#allocation5 + $0x70] sm:$0xff]
    %v2388 = vld [vmem:[#allocation5 + $0x78] sm:$0xff]
    %v2389 = vld [vmem:[#allocation5 + $0x80] sm:$0xff]
    %v2390 = vld [vmem:[#allocation5 + $0x88] sm:$0xff]
    %v2391 = vld [vmem:[#allocation5 + $0x90] sm:$0xff]
    %v2392 = vld [vmem:[#allocation5 + $0x98] sm:$0xff]
    %v2393 = vld [vmem:[#allocation5 + $0xa0] sm:$0xff]
    %v2394 = vld [vmem:[#allocation5 + $0xa8] sm:$0xff]
    %v2395 = vld [vmem:[#allocation5 + $0xb0] sm:$0xff]
    %v2396 = vld [vmem:[#allocation5 + $0xb8] sm:$0xff]
    %v2397 = vld [vmem:[#allocation5 + $0xc0] sm:$0xff]
    %v2398 = vld [vmem:[#allocation5 + $0xc8] sm:$0xff]
    %v2399 = vld [vmem:[#allocation5 + $0xd0] sm:$0xff]
    %v2400 = vld [vmem:[#allocation5 + $0xd8] sm:$0xff]
    %v2401 = vld [vmem:[#allocation5 + $0xe0] sm:$0xff]
    %v2402 = vld [vmem:[#allocation5 + $0xe8] sm:$0xff]
    %v2403 = vld [vmem:[#allocation5 + $0xf0] sm:$0xff]
    %v2404 = vld [vmem:[#allocation5 + $0xf8] sm:$0xff]
    %v2405 = vld [vmem:[#allocation5 + $0x100] sm:$0xff]
    %v2406 = vld [vmem:[#allocation5 + $0x108] sm:$0xff]
    %v2407 = vld [vmem:[#allocation5 + $0x110] sm:$0xff]
    %v2408 = vld [vmem:[#allocation5 + $0x118] sm:$0xff]
    %v2409 = vld [vmem:[#allocation5 + $0x120] sm:$0xff]
    %v2410 = vld [vmem:[#allocation5 + $0x128] sm:$0xff]
    %v2411 = vld [vmem:[#allocation5 + $0x130] sm:$0xff]
    %v2412 = vld [vmem:[#allocation5 + $0x138] sm:$0xff]
    %v2413 = vld [vmem:[#allocation5 + $0x140] sm:$0xff]
    %v2414 = vld [vmem:[#allocation5 + $0x148] sm:$0xff]
    %v2415 = vld [vmem:[#allocation5 + $0x150] sm:$0xff]
    %v2416 = vld [vmem:[#allocation5 + $0x158] sm:$0xff]
    %v2417 = vld [vmem:[#allocation5 + $0x160] sm:$0xff]
    %v2418 = vld [vmem:[#allocation5 + $0x168] sm:$0xff]
    %v2419 = vld [vmem:[#allocation5 + $0x170] sm:$0xff]
    %v2420 = vld [vmem:[#allocation5 + $0x178] sm:$0xff]
    %v2421 = vld [vmem:[#allocation5 + $0x180] sm:$0xff]
    %v2422 = vld [vmem:[#allocation5 + $0x188] sm:$0xff]
    %v2423 = vld [vmem:[#allocation5 + $0x190] sm:$0xff]
    %v2424 = vld [vmem:[#allocation5 + $0x198] sm:$0xff]
    %v2425 = vld [vmem:[#allocation5 + $0x1a0] sm:$0xff]
    %v2426 = vld [vmem:[#allocation5 + $0x1a8] sm:$0xff]
    %v2427 = vld [vmem:[#allocation5 + $0x1b0] sm:$0xff]
    %v2428 = vld [vmem:[#allocation5 + $0x1b8] sm:$0xff]
    %v2429 = vld [vmem:[#allocation5 + $0x1c0] sm:$0xff]
    %v2430 = vld [vmem:[#allocation5 + $0x1c8] sm:$0xff]
    %v2431 = vld [vmem:[#allocation5 + $0x1d0] sm:$0xff]
    %v2432 = vld [vmem:[#allocation5 + $0x1d8] sm:$0xff]
    %v2433 = vld [vmem:[#allocation5 + $0x1e0] sm:$0xff]
    %v2434 = vld [vmem:[#allocation5 + $0x1e8] sm:$0xff]
    %v2435 = vld [vmem:[#allocation5 + $0x1f0] sm:$0xff]
    %v2436 = vld [vmem:[#allocation5 + $0x1f8] sm:$0xff]
    %v2437 = vld [vmem:[#allocation5 + $0x200] sm:$0xff]
    %v2438 = vld [vmem:[#allocation5 + $0x208] sm:$0xff]
    %v2439 = vld [vmem:[#allocation5 + $0x210] sm:$0xff]
    %v2440 = vld [vmem:[#allocation5 + $0x218] sm:$0xff]
    %v2441 = vld [vmem:[#allocation5 + $0x220] sm:$0xff]
    %v2442 = vld [vmem:[#allocation5 + $0x228] sm:$0xff]
    %v2443 = vld [vmem:[#allocation5 + $0x230] sm:$0xff]
    %v2444 = vld [vmem:[#allocation5 + $0x238] sm:$0xff]
    %v2445 = vld [vmem:[#allocation5 + $0x240] sm:$0xff]
    %v2446 = vld [vmem:[#allocation5 + $0x248] sm:$0xff]
    %v2447 = vld [vmem:[#allocation5 + $0x250] sm:$0xff]
    %v2448 = vld [vmem:[#allocation5 + $0x258] sm:$0xff]
    %v2449 = vld [vmem:[#allocation5 + $0x260] sm:$0xff]
    %v2450 = vld [vmem:[#allocation5 + $0x268] sm:$0xff]
    %v2451 = vld [vmem:[#allocation5 + $0x270] sm:$0xff]
    %v2452 = vld [vmem:[#allocation5 + $0x278] sm:$0xff]
    %v2453 = vld [vmem:[#allocation5 + $0x280] sm:$0xff]
    %v2454 = vld [vmem:[#allocation5 + $0x288] sm:$0xff]
    %v2455 = vld [vmem:[#allocation5 + $0x290] sm:$0xff]
    %v2456 = vld [vmem:[#allocation5 + $0x298] sm:$0xff]
    %v2457 = vld [vmem:[#allocation5 + $0x2a0] sm:$0xff]
    %v2458 = vld [vmem:[#allocation5 + $0x2a8] sm:$0xff]
    %v2459 = vld [vmem:[#allocation5 + $0x2b0] sm:$0xff]
    %v2460 = vld [vmem:[#allocation5 + $0x2b8] sm:$0xff]
    %v2461 = vld [vmem:[#allocation5 + $0x2c0] sm:$0xff]
    %v2462 = vld [vmem:[#allocation5 + $0x2c8] sm:$0xff]
    %v2463 = vld [vmem:[#allocation5 + $0x2d0] sm:$0xff]
    %v2464 = vld [vmem:[#allocation5 + $0x2d8] sm:$0xff]
    %v2465 = vld [vmem:[#allocation5 + $0x2e0] sm:$0xff]
    %v2466 = vld [vmem:[#allocation5 + $0x2e8] sm:$0xff]
    %v2467 = vld [vmem:[#allocation5 + $0x2f0] sm:$0xff]
    %v2468 = vld [vmem:[#allocation5 + $0x2f8] sm:$0xff]
    %v2469 = vld [vmem:[#allocation5 + $0x300] sm:$0xff]
    %v2470 = vld [vmem:[#allocation5 + $0x308] sm:$0xff]
    %v2471 = vld [vmem:[#allocation5 + $0x310] sm:$0xff]
    %v2472 = vld [vmem:[#allocation5 + $0x318] sm:$0xff]
    %v2473 = vld [vmem:[#allocation5 + $0x320] sm:$0xff]
    %v2474 = vld [vmem:[#allocation5 + $0x328] sm:$0xff]
    %v2475 = vld [vmem:[#allocation5 + $0x330] sm:$0xff]
    %v2476 = vld [vmem:[#allocation5 + $0x338] sm:$0xff]
    %v2477 = vld [vmem:[#allocation5 + $0x340] sm:$0xff]
    %v2478 = vld [vmem:[#allocation5 + $0x348] sm:$0xff]
    %v2479 = vld [vmem:[#allocation5 + $0x350] sm:$0xff]
    %v2480 = vld [vmem:[#allocation5 + $0x358] sm:$0xff]
    %v2481 = vld [vmem:[#allocation5 + $0x360] sm:$0xff]
    %v2482 = vld [vmem:[#allocation5 + $0x368] sm:$0xff]
    %v2483 = vld [vmem:[#allocation5 + $0x370] sm:$0xff]
    %v2484 = vld [vmem:[#allocation5 + $0x378] sm:$0xff]
    %v2485 = vld [vmem:[#allocation5 + $0x380] sm:$0xff]
    %v2486 = vld [vmem:[#allocation5 + $0x388] sm:$0xff]
    %v2487 = vld [vmem:[#allocation5 + $0x390] sm:$0xff]
    %v2488 = vld [vmem:[#allocation5 + $0x398] sm:$0xff]
    %v2489 = vld [vmem:[#allocation5 + $0x3a0] sm:$0xff]
    %v2490 = vld [vmem:[#allocation5 + $0x3a8] sm:$0xff]
    %v2491 = vld [vmem:[#allocation5 + $0x3b0] sm:$0xff]
    %v2492 = vld [vmem:[#allocation5 + $0x3b8] sm:$0xff]
    %v2493 = vld [vmem:[#allocation5 + $0x3c0] sm:$0xff]
    %v2494 = vld [vmem:[#allocation5 + $0x3c8] sm:$0xff]
    %v2495 = vld [vmem:[#allocation5 + $0x3d0] sm:$0xff]
    %v2496 = vld [vmem:[#allocation5 + $0x3d8] sm:$0xff]
    %v2497 = vld [vmem:[#allocation5 + $0x3e0] sm:$0xff]
    %v2498 = vld [vmem:[#allocation5 + $0x3e8] sm:$0xff]
    %v2499 = vld [vmem:[#allocation5 + $0x3f0] sm:$0xff]
    %v2500 = vld [vmem:[#allocation5 + $0x3f8] sm:$0xff]
    %v2501 = vld [vmem:[#allocation5 + $0x400] sm:$0xff]
    %v2502 = vld [vmem:[#allocation5 + $0x408] sm:$0xff]
    %v2503 = vld [vmem:[#allocation5 + $0x410] sm:$0xff]
    %v2504 = vld [vmem:[#allocation5 + $0x418] sm:$0xff]
    %v2505 = vld [vmem:[#allocation5 + $0x420] sm:$0xff]
    %v2506 = vld [vmem:[#allocation5 + $0x428] sm:$0xff]
    %v2507 = vld [vmem:[#allocation5 + $0x430] sm:$0xff]
    %v2508 = vld [vmem:[#allocation5 + $0x438] sm:$0xff]
    %v2509 = vld [vmem:[#allocation5 + $0x440] sm:$0xff]
    %v2510 = vld [vmem:[#allocation5 + $0x448] sm:$0xff]
    %v2511 = vld [vmem:[#allocation5 + $0x450] sm:$0xff]
    %v2512 = vld [vmem:[#allocation5 + $0x458] sm:$0xff]
    %v2513 = vld [vmem:[#allocation5 + $0x460] sm:$0xff]
    %v2514 = vld [vmem:[#allocation5 + $0x468] sm:$0xff]
    %v2515 = vld [vmem:[#allocation5 + $0x470] sm:$0xff]
    %v2516 = vld [vmem:[#allocation5 + $0x478] sm:$0xff]
    %v2517 = vld [vmem:[#allocation5 + $0x480] sm:$0xff]
    %v2518 = vld [vmem:[#allocation5 + $0x488] sm:$0xff]
    %v2519 = vld [vmem:[#allocation5 + $0x490] sm:$0xff]
    %v2520 = vld [vmem:[#allocation5 + $0x498] sm:$0xff]
    %v2521 = vld [vmem:[#allocation5 + $0x4a0] sm:$0xff]
    %v2522 = vld [vmem:[#allocation5 + $0x4a8] sm:$0xff]
    %v2523 = vld [vmem:[#allocation5 + $0x4b0] sm:$0xff]
    %v2524 = vld [vmem:[#allocation5 + $0x4b8] sm:$0xff]
    %v2525 = vld [vmem:[#allocation5 + $0x4c0] sm:$0xff]
    %v2526 = vld [vmem:[#allocation5 + $0x4c8] sm:$0xff]
    %v2527 = vld [vmem:[#allocation5 + $0x4d0] sm:$0xff]
    %v2528 = vld [vmem:[#allocation5 + $0x4d8] sm:$0xff]
    %v2529 = vld [vmem:[#allocation5 + $0x4e0] sm:$0xff]
    %v2530 = vld [vmem:[#allocation5 + $0x4e8] sm:$0xff]
    %v2531 = vld [vmem:[#allocation5 + $0x4f0] sm:$0xff]
    %v2532 = vld [vmem:[#allocation5 + $0x4f8] sm:$0xff]
    %v2533 = vld [vmem:[#allocation5 + $0x500] sm:$0xff]
    %v2534 = vld [vmem:[#allocation5 + $0x508] sm:$0xff]
    %v2535 = vld [vmem:[#allocation5 + $0x510] sm:$0xff]
    %v2536 = vld [vmem:[#allocation5 + $0x518] sm:$0xff]
    %v2537 = vld [vmem:[#allocation5 + $0x520] sm:$0xff]
    %v2538 = vld [vmem:[#allocation5 + $0x528] sm:$0xff]
    %v2539 = vld [vmem:[#allocation5 + $0x530] sm:$0xff]
    %v2540 = vld [vmem:[#allocation5 + $0x538] sm:$0xff]
    %v2541 = vld [vmem:[#allocation5 + $0x540] sm:$0xff]
    %v2542 = vld [vmem:[#allocation5 + $0x548] sm:$0xff]
    %v2543 = vld [vmem:[#allocation5 + $0x550] sm:$0xff]
    %v2544 = vld [vmem:[#allocation5 + $0x558] sm:$0xff]
    %v2545 = vld [vmem:[#allocation5 + $0x560] sm:$0xff]
    %v2546 = vld [vmem:[#allocation5 + $0x568] sm:$0xff]
    %v2547 = vld [vmem:[#allocation5 + $0x570] sm:$0xff]
    %v2548 = vld [vmem:[#allocation5 + $0x578] sm:$0xff]
    %v2549 = vld [vmem:[#allocation5 + $0x580] sm:$0xff]
    %v2550 = vld [vmem:[#allocation5 + $0x588] sm:$0xff]
    %v2551 = vld [vmem:[#allocation5 + $0x590] sm:$0xff]
    %v2552 = vld [vmem:[#allocation5 + $0x598] sm:$0xff]
    %v2553 = vld [vmem:[#allocation5 + $0x5a0] sm:$0xff]
    %v2554 = vld [vmem:[#allocation5 + $0x5a8] sm:$0xff]
    %v2555 = vld [vmem:[#allocation5 + $0x5b0] sm:$0xff]
    %v2556 = vld [vmem:[#allocation5 + $0x5b8] sm:$0xff]
    %v2557 = vld [vmem:[#allocation5 + $0x5c0] sm:$0xff]
    %v2558 = vld [vmem:[#allocation5 + $0x5c8] sm:$0xff]
    %v2559 = vld [vmem:[#allocation5 + $0x5d0] sm:$0xff]
    %v2560 = vld [vmem:[#allocation5 + $0x5d8] sm:$0xff]
    %v2561 = vld [vmem:[#allocation5 + $0x5e0] sm:$0xff]
    %v2562 = vld [vmem:[#allocation5 + $0x5e8] sm:$0xff]
    %v2563 = vld [vmem:[#allocation5 + $0x5f0] sm:$0xff]
    %v2564 = vld [vmem:[#allocation5 + $0x5f8] sm:$0xff]
    %v2565 = vld [vmem:[#allocation5 + $0x600] sm:$0xff]
    %v2566 = vld [vmem:[#allocation5 + $0x608] sm:$0xff]
    %v2567 = vld [vmem:[#allocation5 + $0x610] sm:$0xff]
    %v2568 = vld [vmem:[#allocation5 + $0x618] sm:$0xff]
    %v2569 = vld [vmem:[#allocation5 + $0x620] sm:$0xff]
    %v2570 = vld [vmem:[#allocation5 + $0x628] sm:$0xff]
    %v2571 = vld [vmem:[#allocation5 + $0x630] sm:$0xff]
    %v2572 = vld [vmem:[#allocation5 + $0x638] sm:$0xff]
    %v2573 = vld [vmem:[#allocation5 + $0x640] sm:$0xff]
    %v2574 = vld [vmem:[#allocation5 + $0x648] sm:$0xff]
    %v2575 = vld [vmem:[#allocation5 + $0x650] sm:$0xff]
    %v2576 = vld [vmem:[#allocation5 + $0x658] sm:$0xff]
    %v2577 = vld [vmem:[#allocation5 + $0x660] sm:$0xff]
    %v2578 = vld [vmem:[#allocation5 + $0x668] sm:$0xff]
    %v2579 = vld [vmem:[#allocation5 + $0x670] sm:$0xff]
    %v2580 = vld [vmem:[#allocation5 + $0x678] sm:$0xff]
    %v2581 = vld [vmem:[#allocation5 + $0x680] sm:$0xff]
    %v2582 = vld [vmem:[#allocation5 + $0x688] sm:$0xff]
    %v2583 = vld [vmem:[#allocation5 + $0x690] sm:$0xff]
    %v2584 = vld [vmem:[#allocation5 + $0x698] sm:$0xff]
    %v2585 = vld [vmem:[#allocation5 + $0x6a0] sm:$0xff]
    %v2586 = vld [vmem:[#allocation5 + $0x6a8] sm:$0xff]
    %v2587 = vld [vmem:[#allocation5 + $0x6b0] sm:$0xff]
    %v2588 = vld [vmem:[#allocation5 + $0x6b8] sm:$0xff]
    %v2589 = vld [vmem:[#allocation5 + $0x6c0] sm:$0xff]
    %v2590 = vld [vmem:[#allocation5 + $0x6c8] sm:$0xff]
    %v2591 = vld [vmem:[#allocation5 + $0x6d0] sm:$0xff]
    %v2592 = vld [vmem:[#allocation5 + $0x6d8] sm:$0xff]
    %v2593 = vld [vmem:[#allocation5 + $0x6e0] sm:$0xff]
    %v2594 = vld [vmem:[#allocation5 + $0x6e8] sm:$0xff]
    %v2595 = vld [vmem:[#allocation5 + $0x6f0] sm:$0xff]
    %v2596 = vld [vmem:[#allocation5 + $0x6f8] sm:$0xff]
    %v2597 = vld [vmem:[#allocation5 + $0x700] sm:$0xff]
    %v2598 = vld [vmem:[#allocation5 + $0x708] sm:$0xff]
    %v2599 = vld [vmem:[#allocation5 + $0x710] sm:$0xff]
    %v2600 = vld [vmem:[#allocation5 + $0x718] sm:$0xff]
    %v2601 = vld [vmem:[#allocation5 + $0x720] sm:$0xff]
    %v2602 = vld [vmem:[#allocation5 + $0x728] sm:$0xff]
    %v2603 = vld [vmem:[#allocation5 + $0x730] sm:$0xff]
    %v2604 = vld [vmem:[#allocation5 + $0x738] sm:$0xff]
    %v2605 = vld [vmem:[#allocation5 + $0x740] sm:$0xff]
    %v2606 = vld [vmem:[#allocation5 + $0x748] sm:$0xff]
    %v2607 = vld [vmem:[#allocation5 + $0x750] sm:$0xff]
    %v2608 = vld [vmem:[#allocation5 + $0x758] sm:$0xff]
    %v2609 = vld [vmem:[#allocation5 + $0x760] sm:$0xff]
    %v2610 = vld [vmem:[#allocation5 + $0x768] sm:$0xff]
    %v2611 = vld [vmem:[#allocation5 + $0x770] sm:$0xff]
    %v2612 = vld [vmem:[#allocation5 + $0x778] sm:$0xff]
    %v2613 = vld [vmem:[#allocation5 + $0x780] sm:$0xff]
    %v2614 = vld [vmem:[#allocation5 + $0x788] sm:$0xff]
    %v2615 = vld [vmem:[#allocation5 + $0x790] sm:$0xff]
    %v2616 = vld [vmem:[#allocation5 + $0x798] sm:$0xff]
    %v2617 = vld [vmem:[#allocation5 + $0x7a0] sm:$0xff]
    %v2618 = vld [vmem:[#allocation5 + $0x7a8] sm:$0xff]
    %v2619 = vld [vmem:[#allocation5 + $0x7b0] sm:$0xff]
    %v2620 = vld [vmem:[#allocation5 + $0x7b8] sm:$0xff]
    %v2621 = vld [vmem:[#allocation5 + $0x7c0] sm:$0xff]
    %v2622 = vld [vmem:[#allocation5 + $0x7c8] sm:$0xff]
    %v2623 = vld [vmem:[#allocation5 + $0x7d0] sm:$0xff]
    %v2624 = vld [vmem:[#allocation5 + $0x7d8] sm:$0xff]
    %v2625 = vld [vmem:[#allocation5 + $0x7e0] sm:$0xff]
    %v2626 = vld [vmem:[#allocation5 + $0x7e8] sm:$0xff]
    %v2627 = vld [vmem:[#allocation5 + $0x7f0] sm:$0xff]
    %v2628 = vld [vmem:[#allocation5 + $0x7f8] sm:$0xff]
    %2629 = vmatpush.msra.mxu0 %v2493
    %2630 = vmatpush.msra.mxu0 %v2485
    %2631 = vmatpush.msra.mxu0 %v2477
    %2632 = vmatpush.msra.mxu0 %v2469
    %2633 = vmatpush.msra.mxu0 %v2461
    %2634 = vmatpush.msra.mxu0 %v2453
    %2635 = vmatpush.msra.mxu0 %v2445
    %2636 = vmatpush.msra.mxu0 %v2437
    %2637 = vmatpush.msra.mxu0 %v2429
    %2638 = vmatpush.msra.mxu0 %v2421
    %2639 = vmatpush.msra.mxu0 %v2413
    %2640 = vmatpush.msra.mxu0 %v2405
    %2641 = vmatpush.msra.mxu0 %v2397
    %2642 = vmatpush.msra.mxu0 %v2389
    %2643 = vmatpush.msra.mxu0 %v2381
    %2644 = vmatpush.msra.mxu0 %v2373
    %2645 = vmatmul.f32.gmra.mxu0 %v2363
    %v2646 = vpop.f32.mrf.mxu0
    %v2647 = vadd.f32 0.0, %v2646
    %2648 = vmatmul.f32.gmra.mxu0 %v2365
    %v2649 = vpop.f32.mrf.mxu0
    %v2650 = vadd.f32 0.0, %v2649
    %2651 = vmatmul.f32.gmra.mxu0 %v2367
    %v2652 = vpop.f32.mrf.mxu0
    %v2653 = vadd.f32 0.0, %v2652
    %2654 = vmatmul.f32.gmra.mxu0 %v2369
    %v2655 = vpop.f32.mrf.mxu0
    %v2656 = vadd.f32 0.0, %v2655
    %2657 = vdwg.mxu0
    %2658 = vmatpush.msra.mxu0 %v2621
    %2659 = vmatpush.msra.mxu0 %v2613
    %2660 = vmatpush.msra.mxu0 %v2605
    %2661 = vmatpush.msra.mxu0 %v2597
    %2662 = vmatpush.msra.mxu0 %v2589
    %2663 = vmatpush.msra.mxu0 %v2581
    %2664 = vmatpush.msra.mxu0 %v2573
    %2665 = vmatpush.msra.mxu0 %v2565
    %2666 = vmatpush.msra.mxu0 %v2557
    %2667 = vmatpush.msra.mxu0 %v2549
    %2668 = vmatpush.msra.mxu0 %v2541
    %2669 = vmatpush.msra.mxu0 %v2533
    %2670 = vmatpush.msra.mxu0 %v2525
    %2671 = vmatpush.msra.mxu0 %v2517
    %2672 = vmatpush.msra.mxu0 %v2509
    %2673 = vmatpush.msra.mxu0 %v2501
    %2674 = vmatmul.f32.gmra.mxu0 %v2364
    %v2675 = vpop.f32.mrf.mxu0
    %v2676 = vadd.f32 %v2647, %v2675
    %2677 = vmatmul.f32.gmra.mxu0 %v2366
    %v2678 = vpop.f32.mrf.mxu0
    %v2679 = vadd.f32 %v2650, %v2678
    %2680 = vmatmul.f32.gmra.mxu0 %v2368
    %v2681 = vpop.f32.mrf.mxu0
    %v2682 = vadd.f32 %v2653, %v2681
    %2683 = vmatmul.f32.gmra.mxu0 %v2370
    %v2684 = vpop.f32.mrf.mxu0
    %v2685 = vadd.f32 %v2656, %v2684
    %2686 = vdwg.mxu0
    %2687 = vmatpush.msra.mxu0 %v2494
    %2688 = vmatpush.msra.mxu0 %v2486
    %2689 = vmatpush.msra.mxu0 %v2478
    %2690 = vmatpush.msra.mxu0 %v2470
    %2691 = vmatpush.msra.mxu0 %v2462
    %2692 = vmatpush.msra.mxu0 %v2454
    %2693 = vmatpush.msra.mxu0 %v2446
    %2694 = vmatpush.msra.mxu0 %v2438
    %2695 = vmatpush.msra.mxu0 %v2430
    %2696 = vmatpush.msra.mxu0 %v2422
    %2697 = vmatpush.msra.mxu0 %v2414
    %2698 = vmatpush.msra.mxu0 %v2406
    %2699 = vmatpush.msra.mxu0 %v2398
    %2700 = vmatpush.msra.mxu0 %v2390
    %2701 = vmatpush.msra.mxu0 %v2382
    %2702 = vmatpush.msra.mxu0 %v2374
    %2703 = vmatmul.f32.gmra.mxu0 %v2363
    %v2704 = vpop.f32.mrf.mxu0
    %v2705 = vadd.f32 0.0, %v2704
    %2706 = vmatmul.f32.gmra.mxu0 %v2365
    %v2707 = vpop.f32.mrf.mxu0
    %v2708 = vadd.f32 0.0, %v2707
    %2709 = vmatmul.f32.gmra.mxu0 %v2367
    %v2710 = vpop.f32.mrf.mxu0
    %v2711 = vadd.f32 0.0, %v2710
    %2712 = vmatmul.f32.gmra.mxu0 %v2369
    %v2713 = vpop.f32.mrf.mxu0
    %v2714 = vadd.f32 0.0, %v2713
    %2715 = vdwg.mxu0
    %2716 = vmatpush.msra.mxu0 %v2622
    %2717 = vmatpush.msra.mxu0 %v2614
    %2718 = vmatpush.msra.mxu0 %v2606
    %2719 = vmatpush.msra.mxu0 %v2598
    %2720 = vmatpush.msra.mxu0 %v2590
    %2721 = vmatpush.msra.mxu0 %v2582
    %2722 = vmatpush.msra.mxu0 %v2574
    %2723 = vmatpush.msra.mxu0 %v2566
    %2724 = vmatpush.msra.mxu0 %v2558
    %2725 = vmatpush.msra.mxu0 %v2550
    %2726 = vmatpush.msra.mxu0 %v2542
    %2727 = vmatpush.msra.mxu0 %v2534
    %2728 = vmatpush.msra.mxu0 %v2526
    %2729 = vmatpush.msra.mxu0 %v2518
    %2730 = vmatpush.msra.mxu0 %v2510
    %2731 = vmatpush.msra.mxu0 %v2502
    %2732 = vmatmul.f32.gmra.mxu0 %v2364
    %v2733 = vpop.f32.mrf.mxu0
    %v2734 = vadd.f32 %v2705, %v2733
    %2735 = vmatmul.f32.gmra.mxu0 %v2366
    %v2736 = vpop.f32.mrf.mxu0
    %v2737 = vadd.f32 %v2708, %v2736
    %2738 = vmatmul.f32.gmra.mxu0 %v2368
    %v2739 = vpop.f32.mrf.mxu0
    %v2740 = vadd.f32 %v2711, %v2739
    %2741 = vmatmul.f32.gmra.mxu0 %v2370
    %v2742 = vpop.f32.mrf.mxu0
    %v2743 = vadd.f32 %v2714, %v2742
    %2744 = vdwg.mxu0
    %2745 = vmatpush.msra.mxu0 %v2495
    %2746 = vmatpush.msra.mxu0 %v2487
    %2747 = vmatpush.msra.mxu0 %v2479
    %2748 = vmatpush.msra.mxu0 %v2471
    %2749 = vmatpush.msra.mxu0 %v2463
    %2750 = vmatpush.msra.mxu0 %v2455
    %2751 = vmatpush.msra.mxu0 %v2447
    %2752 = vmatpush.msra.mxu0 %v2439
    %2753 = vmatpush.msra.mxu0 %v2431
    %2754 = vmatpush.msra.mxu0 %v2423
    %2755 = vmatpush.msra.mxu0 %v2415
    %2756 = vmatpush.msra.mxu0 %v2407
    %2757 = vmatpush.msra.mxu0 %v2399
    %2758 = vmatpush.msra.mxu0 %v2391
    %2759 = vmatpush.msra.mxu0 %v2383
    %2760 = vmatpush.msra.mxu0 %v2375
    %2761 = vmatmul.f32.gmra.mxu0 %v2363
    %v2762 = vpop.f32.mrf.mxu0
    %v2763 = vadd.f32 0.0, %v2762
    %2764 = vmatmul.f32.gmra.mxu0 %v2365
    %v2765 = vpop.f32.mrf.mxu0
    %v2766 = vadd.f32 0.0, %v2765
    %2767 = vmatmul.f32.gmra.mxu0 %v2367
    %v2768 = vpop.f32.mrf.mxu0
    %v2769 = vadd.f32 0.0, %v2768
    %2770 = vmatmul.f32.gmra.mxu0 %v2369
    %v2771 = vpop.f32.mrf.mxu0
    %v2772 = vadd.f32 0.0, %v2771
    %2773 = vdwg.mxu0
    %2774 = vmatpush.msra.mxu0 %v2623
    %2775 = vmatpush.msra.mxu0 %v2615
    %2776 = vmatpush.msra.mxu0 %v2607
    %2777 = vmatpush.msra.mxu0 %v2599
    %2778 = vmatpush.msra.mxu0 %v2591
    %2779 = vmatpush.msra.mxu0 %v2583
    %2780 = vmatpush.msra.mxu0 %v2575
    %2781 = vmatpush.msra.mxu0 %v2567
    %2782 = vmatpush.msra.mxu0 %v2559
    %2783 = vmatpush.msra.mxu0 %v2551
    %2784 = vmatpush.msra.mxu0 %v2543
    %2785 = vmatpush.msra.mxu0 %v2535
    %2786 = vmatpush.msra.mxu0 %v2527
    %2787 = vmatpush.msra.mxu0 %v2519
    %2788 = vmatpush.msra.mxu0 %v2511
    %2789 = vmatpush.msra.mxu0 %v2503
    %2790 = vmatmul.f32.gmra.mxu0 %v2364
    %v2791 = vpop.f32.mrf.mxu0
    %v2792 = vadd.f32 %v2763, %v2791
    %2793 = vmatmul.f32.gmra.mxu0 %v2366
    %v2794 = vpop.f32.mrf.mxu0
    %v2795 = vadd.f32 %v2766, %v2794
    %2796 = vmatmul.f32.gmra.mxu0 %v2368
    %v2797 = vpop.f32.mrf.mxu0
    %v2798 = vadd.f32 %v2769, %v2797
    %2799 = vmatmul.f32.gmra.mxu0 %v2370
    %v2800 = vpop.f32.mrf.mxu0
    %v2801 = vadd.f32 %v2772, %v2800
    %2802 = vdwg.mxu0
    %2803 = vmatpush.msra.mxu0 %v2496
    %2804 = vmatpush.msra.mxu0 %v2488
    %2805 = vmatpush.msra.mxu0 %v2480
    %2806 = vmatpush.msra.mxu0 %v2472
    %2807 = vmatpush.msra.mxu0 %v2464
    %2808 = vmatpush.msra.mxu0 %v2456
    %2809 = vmatpush.msra.mxu0 %v2448
    %2810 = vmatpush.msra.mxu0 %v2440
    %2811 = vmatpush.msra.mxu0 %v2432
    %2812 = vmatpush.msra.mxu0 %v2424
    %2813 = vmatpush.msra.mxu0 %v2416
    %2814 = vmatpush.msra.mxu0 %v2408
    %2815 = vmatpush.msra.mxu0 %v2400
    %2816 = vmatpush.msra.mxu0 %v2392
    %2817 = vmatpush.msra.mxu0 %v2384
    %2818 = vmatpush.msra.mxu0 %v2376
    %2819 = vmatmul.f32.gmra.mxu0 %v2363
    %v2820 = vpop.f32.mrf.mxu0
    %v2821 = vadd.f32 0.0, %v2820
    %2822 = vmatmul.f32.gmra.mxu0 %v2365
    %v2823 = vpop.f32.mrf.mxu0
    %v2824 = vadd.f32 0.0, %v2823
    %2825 = vmatmul.f32.gmra.mxu0 %v2367
    %v2826 = vpop.f32.mrf.mxu0
    %v2827 = vadd.f32 0.0, %v2826
    %2828 = vmatmul.f32.gmra.mxu0 %v2369
    %v2829 = vpop.f32.mrf.mxu0
    %v2830 = vadd.f32 0.0, %v2829
    %2831 = vdwg.mxu0
    %2832 = vmatpush.msra.mxu0 %v2624
    %2833 = vmatpush.msra.mxu0 %v2616
    %2834 = vmatpush.msra.mxu0 %v2608
    %2835 = vmatpush.msra.mxu0 %v2600
    %2836 = vmatpush.msra.mxu0 %v2592
    %2837 = vmatpush.msra.mxu0 %v2584
    %2838 = vmatpush.msra.mxu0 %v2576
    %2839 = vmatpush.msra.mxu0 %v2568
    %2840 = vmatpush.msra.mxu0 %v2560
    %2841 = vmatpush.msra.mxu0 %v2552
    %2842 = vmatpush.msra.mxu0 %v2544
    %2843 = vmatpush.msra.mxu0 %v2536
    %2844 = vmatpush.msra.mxu0 %v2528
    %2845 = vmatpush.msra.mxu0 %v2520
    %2846 = vmatpush.msra.mxu0 %v2512
    %2847 = vmatpush.msra.mxu0 %v2504
    %2848 = vmatmul.f32.gmra.mxu0 %v2364
    %v2849 = vpop.f32.mrf.mxu0
    %v2850 = vadd.f32 %v2821, %v2849
    %2851 = vmatmul.f32.gmra.mxu0 %v2366
    %v2852 = vpop.f32.mrf.mxu0
    %v2853 = vadd.f32 %v2824, %v2852
    %2854 = vmatmul.f32.gmra.mxu0 %v2368
    %v2855 = vpop.f32.mrf.mxu0
    %v2856 = vadd.f32 %v2827, %v2855
    %2857 = vmatmul.f32.gmra.mxu0 %v2370
    %v2858 = vpop.f32.mrf.mxu0
    %v2859 = vadd.f32 %v2830, %v2858
    %2860 = vdwg.mxu0
    %2861 = vmatpush.msra.mxu0 %v2497
    %2862 = vmatpush.msra.mxu0 %v2489
    %2863 = vmatpush.msra.mxu0 %v2481
    %2864 = vmatpush.msra.mxu0 %v2473
    %2865 = vmatpush.msra.mxu0 %v2465
    %2866 = vmatpush.msra.mxu0 %v2457
    %2867 = vmatpush.msra.mxu0 %v2449
    %2868 = vmatpush.msra.mxu0 %v2441
    %2869 = vmatpush.msra.mxu0 %v2433
    %2870 = vmatpush.msra.mxu0 %v2425
    %2871 = vmatpush.msra.mxu0 %v2417
    %2872 = vmatpush.msra.mxu0 %v2409
    %2873 = vmatpush.msra.mxu0 %v2401
    %2874 = vmatpush.msra.mxu0 %v2393
    %2875 = vmatpush.msra.mxu0 %v2385
    %2876 = vmatpush.msra.mxu0 %v2377
    %2877 = vmatmul.f32.gmra.mxu0 %v2363
    %v2878 = vpop.f32.mrf.mxu0
    %v2879 = vadd.f32 0.0, %v2878
    %2880 = vmatmul.f32.gmra.mxu0 %v2365
    %v2881 = vpop.f32.mrf.mxu0
    %v2882 = vadd.f32 0.0, %v2881
    %2883 = vmatmul.f32.gmra.mxu0 %v2367
    %v2884 = vpop.f32.mrf.mxu0
    %v2885 = vadd.f32 0.0, %v2884
    %2886 = vmatmul.f32.gmra.mxu0 %v2369
    %v2887 = vpop.f32.mrf.mxu0
    %v2888 = vadd.f32 0.0, %v2887
    %2889 = vdwg.mxu0
    %2890 = vmatpush.msra.mxu0 %v2625
    %2891 = vmatpush.msra.mxu0 %v2617
    %2892 = vmatpush.msra.mxu0 %v2609
    %2893 = vmatpush.msra.mxu0 %v2601
    %2894 = vmatpush.msra.mxu0 %v2593
    %2895 = vmatpush.msra.mxu0 %v2585
    %2896 = vmatpush.msra.mxu0 %v2577
    %2897 = vmatpush.msra.mxu0 %v2569
    %2898 = vmatpush.msra.mxu0 %v2561
    %2899 = vmatpush.msra.mxu0 %v2553
    %2900 = vmatpush.msra.mxu0 %v2545
    %2901 = vmatpush.msra.mxu0 %v2537
    %2902 = vmatpush.msra.mxu0 %v2529
    %2903 = vmatpush.msra.mxu0 %v2521
    %2904 = vmatpush.msra.mxu0 %v2513
    %2905 = vmatpush.msra.mxu0 %v2505
    %2906 = vmatmul.f32.gmra.mxu0 %v2364
    %v2907 = vpop.f32.mrf.mxu0
    %v2908 = vadd.f32 %v2879, %v2907
    %2909 = vmatmul.f32.gmra.mxu0 %v2366
    %v2910 = vpop.f32.mrf.mxu0
    %v2911 = vadd.f32 %v2882, %v2910
    %2912 = vmatmul.f32.gmra.mxu0 %v2368
    %v2913 = vpop.f32.mrf.mxu0
    %v2914 = vadd.f32 %v2885, %v2913
    %2915 = vmatmul.f32.gmra.mxu0 %v2370
    %v2916 = vpop.f32.mrf.mxu0
    %v2917 = vadd.f32 %v2888, %v2916
    %2918 = vdwg.mxu0
    %2919 = vmatpush.msra.mxu0 %v2498
    %2920 = vmatpush.msra.mxu0 %v2490
    %2921 = vmatpush.msra.mxu0 %v2482
    %2922 = vmatpush.msra.mxu0 %v2474
    %2923 = vmatpush.msra.mxu0 %v2466
    %2924 = vmatpush.msra.mxu0 %v2458
    %2925 = vmatpush.msra.mxu0 %v2450
    %2926 = vmatpush.msra.mxu0 %v2442
    %2927 = vmatpush.msra.mxu0 %v2434
    %2928 = vmatpush.msra.mxu0 %v2426
    %2929 = vmatpush.msra.mxu0 %v2418
    %2930 = vmatpush.msra.mxu0 %v2410
    %2931 = vmatpush.msra.mxu0 %v2402
    %2932 = vmatpush.msra.mxu0 %v2394
    %2933 = vmatpush.msra.mxu0 %v2386
    %2934 = vmatpush.msra.mxu0 %v2378
    %2935 = vmatmul.f32.gmra.mxu0 %v2363
    %v2936 = vpop.f32.mrf.mxu0
    %v2937 = vadd.f32 0.0, %v2936
    %2938 = vmatmul.f32.gmra.mxu0 %v2365
    %v2939 = vpop.f32.mrf.mxu0
    %v2940 = vadd.f32 0.0, %v2939
    %2941 = vmatmul.f32.gmra.mxu0 %v2367
    %v2942 = vpop.f32.mrf.mxu0
    %v2943 = vadd.f32 0.0, %v2942
    %2944 = vmatmul.f32.gmra.mxu0 %v2369
    %v2945 = vpop.f32.mrf.mxu0
    %v2946 = vadd.f32 0.0, %v2945
    %2947 = vdwg.mxu0
    %2948 = vmatpush.msra.mxu0 %v2626
    %2949 = vmatpush.msra.mxu0 %v2618
    %2950 = vmatpush.msra.mxu0 %v2610
    %2951 = vmatpush.msra.mxu0 %v2602
    %2952 = vmatpush.msra.mxu0 %v2594
    %2953 = vmatpush.msra.mxu0 %v2586
    %2954 = vmatpush.msra.mxu0 %v2578
    %2955 = vmatpush.msra.mxu0 %v2570
    %2956 = vmatpush.msra.mxu0 %v2562
    %2957 = vmatpush.msra.mxu0 %v2554
    %2958 = vmatpush.msra.mxu0 %v2546
    %2959 = vmatpush.msra.mxu0 %v2538
    %2960 = vmatpush.msra.mxu0 %v2530
    %2961 = vmatpush.msra.mxu0 %v2522
    %2962 = vmatpush.msra.mxu0 %v2514
    %2963 = vmatpush.msra.mxu0 %v2506
    %2964 = vmatmul.f32.gmra.mxu0 %v2364
    %v2965 = vpop.f32.mrf.mxu0
    %v2966 = vadd.f32 %v2937, %v2965
    %2967 = vmatmul.f32.gmra.mxu0 %v2366
    %v2968 = vpop.f32.mrf.mxu0
    %v2969 = vadd.f32 %v2940, %v2968
    %2970 = vmatmul.f32.gmra.mxu0 %v2368
    %v2971 = vpop.f32.mrf.mxu0
    %v2972 = vadd.f32 %v2943, %v2971
    %2973 = vmatmul.f32.gmra.mxu0 %v2370
    %v2974 = vpop.f32.mrf.mxu0
    %v2975 = vadd.f32 %v2946, %v2974
    %2976 = vdwg.mxu0
    %2977 = vmatpush.msra.mxu0 %v2499
    %2978 = vmatpush.msra.mxu0 %v2491
    %2979 = vmatpush.msra.mxu0 %v2483
    %2980 = vmatpush.msra.mxu0 %v2475
    %2981 = vmatpush.msra.mxu0 %v2467
    %2982 = vmatpush.msra.mxu0 %v2459
    %2983 = vmatpush.msra.mxu0 %v2451
    %2984 = vmatpush.msra.mxu0 %v2443
    %2985 = vmatpush.msra.mxu0 %v2435
    %2986 = vmatpush.msra.mxu0 %v2427
    %2987 = vmatpush.msra.mxu0 %v2419
    %2988 = vmatpush.msra.mxu0 %v2411
    %2989 = vmatpush.msra.mxu0 %v2403
    %2990 = vmatpush.msra.mxu0 %v2395
    %2991 = vmatpush.msra.mxu0 %v2387
    %2992 = vmatpush.msra.mxu0 %v2379
    %2993 = vmatmul.f32.gmra.mxu0 %v2363
    %v2994 = vpop.f32.mrf.mxu0
    %v2995 = vadd.f32 0.0, %v2994
    %2996 = vmatmul.f32.gmra.mxu0 %v2365
    %v2997 = vpop.f32.mrf.mxu0
    %v2998 = vadd.f32 0.0, %v2997
    %2999 = vmatmul.f32.gmra.mxu0 %v2367
    %v3000 = vpop.f32.mrf.mxu0
    %v3001 = vadd.f32 0.0, %v3000
    %3002 = vmatmul.f32.gmra.mxu0 %v2369
    %v3003 = vpop.f32.mrf.mxu0
    %v3004 = vadd.f32 0.0, %v3003
    %3005 = vdwg.mxu0
    %3006 = vmatpush.msra.mxu0 %v2627
    %3007 = vmatpush.msra.mxu0 %v2619
    %3008 = vmatpush.msra.mxu0 %v2611
    %3009 = vmatpush.msra.mxu0 %v2603
    %3010 = vmatpush.msra.mxu0 %v2595
    %3011 = vmatpush.msra.mxu0 %v2587
    %3012 = vmatpush.msra.mxu0 %v2579
    %3013 = vmatpush.msra.mxu0 %v2571
    %3014 = vmatpush.msra.mxu0 %v2563
    %3015 = vmatpush.msra.mxu0 %v2555
    %3016 = vmatpush.msra.mxu0 %v2547
    %3017 = vmatpush.msra.mxu0 %v2539
    %3018 = vmatpush.msra.mxu0 %v2531
    %3019 = vmatpush.msra.mxu0 %v2523
    %3020 = vmatpush.msra.mxu0 %v2515
    %3021 = vmatpush.msra.mxu0 %v2507
    %3022 = vmatmul.f32.gmra.mxu0 %v2364
    %v3023 = vpop.f32.mrf.mxu0
    %v3024 = vadd.f32 %v2995, %v3023
    %3025 = vmatmul.f32.gmra.mxu0 %v2366
    %v3026 = vpop.f32.mrf.mxu0
    %v3027 = vadd.f32 %v2998, %v3026
    %3028 = vmatmul.f32.gmra.mxu0 %v2368
    %v3029 = vpop.f32.mrf.mxu0
    %v3030 = vadd.f32 %v3001, %v3029
    %3031 = vmatmul.f32.gmra.mxu0 %v2370
    %v3032 = vpop.f32.mrf.mxu0
    %v3033 = vadd.f32 %v3004, %v3032
    %3034 = vdwg.mxu0
    %3035 = vmatpush.msra.mxu0 %v2500
    %3036 = vmatpush.msra.mxu0 %v2492
    %3037 = vmatpush.msra.mxu0 %v2484
    %3038 = vmatpush.msra.mxu0 %v2476
    %3039 = vmatpush.msra.mxu0 %v2468
    %3040 = vmatpush.msra.mxu0 %v2460
    %3041 = vmatpush.msra.mxu0 %v2452
    %3042 = vmatpush.msra.mxu0 %v2444
    %3043 = vmatpush.msra.mxu0 %v2436
    %3044 = vmatpush.msra.mxu0 %v2428
    %3045 = vmatpush.msra.mxu0 %v2420
    %3046 = vmatpush.msra.mxu0 %v2412
    %3047 = vmatpush.msra.mxu0 %v2404
    %3048 = vmatpush.msra.mxu0 %v2396
    %3049 = vmatpush.msra.mxu0 %v2388
    %3050 = vmatpush.msra.mxu0 %v2380
    %3051 = vmatmul.f32.gmra.mxu0 %v2363
    %v3052 = vpop.f32.mrf.mxu0
    %v3053 = vadd.f32 0.0, %v3052
    %3054 = vmatmul.f32.gmra.mxu0 %v2365
    %v3055 = vpop.f32.mrf.mxu0
    %v3056 = vadd.f32 0.0, %v3055
    %3057 = vmatmul.f32.gmra.mxu0 %v2367
    %v3058 = vpop.f32.mrf.mxu0
    %v3059 = vadd.f32 0.0, %v3058
    %3060 = vmatmul.f32.gmra.mxu0 %v2369
    %v3061 = vpop.f32.mrf.mxu0
    %v3062 = vadd.f32 0.0, %v3061
    %3063 = vdwg.mxu0
    %3064 = vmatpush.msra.mxu0 %v2628
    %3065 = vmatpush.msra.mxu0 %v2620
    %3066 = vmatpush.msra.mxu0 %v2612
    %3067 = vmatpush.msra.mxu0 %v2604
    %3068 = vmatpush.msra.mxu0 %v2596
    %3069 = vmatpush.msra.mxu0 %v2588
    %3070 = vmatpush.msra.mxu0 %v2580
    %3071 = vmatpush.msra.mxu0 %v2572
    %3072 = vmatpush.msra.mxu0 %v2564
    %3073 = vmatpush.msra.mxu0 %v2556
    %3074 = vmatpush.msra.mxu0 %v2548
    %3075 = vmatpush.msra.mxu0 %v2540
    %3076 = vmatpush.msra.mxu0 %v2532
    %3077 = vmatpush.msra.mxu0 %v2524
    %3078 = vmatpush.msra.mxu0 %v2516
    %3079 = vmatpush.msra.mxu0 %v2508
    %3080 = vmatmul.f32.gmra.mxu0 %v2364
    %v3081 = vpop.f32.mrf.mxu0
    %v3082 = vadd.f32 %v3053, %v3081
    %3083 = vmatmul.f32.gmra.mxu0 %v2366
    %v3084 = vpop.f32.mrf.mxu0
    %v3085 = vadd.f32 %v3056, %v3084
    %3086 = vmatmul.f32.gmra.mxu0 %v2368
    %v3087 = vpop.f32.mrf.mxu0
    %v3088 = vadd.f32 %v3059, %v3087
    %3089 = vmatmul.f32.gmra.mxu0 %v2370
    %v3090 = vpop.f32.mrf.mxu0
    %v3091 = vadd.f32 %v3062, %v3090
    %3092 = vdwg.mxu0
    %3093 = vst [vmem:[#allocation2] sm:$0xff] %v2676
    %3094 = vst [vmem:[#allocation2 + $0x8] sm:$0xff] %v2734
    %3095 = vst [vmem:[#allocation2 + $0x10] sm:$0xff] %v2679
    %3096 = vst [vmem:[#allocation2 + $0x18] sm:$0xff] %v2737
    %3097 = vst [vmem:[#allocation2 + $0x20] sm:$0xff] %v2682
    %3098 = vst [vmem:[#allocation2 + $0x28] sm:$0xff] %v2740
    %3099 = vst [vmem:[#allocation2 + $0x30] sm:$0xff] %v2685
    %3100 = vst [vmem:[#allocation2 + $0x38] sm:$0xff] %v2743
    %3101 = vst [vmem:[#allocation2 + $0x40] sm:$0xff] %v2792
    %3102 = vst [vmem:[#allocation2 + $0x48] sm:$0xff] %v2850
    %3103 = vst [vmem:[#allocation2 + $0x50] sm:$0xff] %v2795
    %3104 = vst [vmem:[#allocation2 + $0x58] sm:$0xff] %v2853
    %3105 = vst [vmem:[#allocation2 + $0x60] sm:$0xff] %v2798
    %3106 = vst [vmem:[#allocation2 + $0x68] sm:$0xff] %v2856
    %3107 = vst [vmem:[#allocation2 + $0x70] sm:$0xff] %v2801
    %3108 = vst [vmem:[#allocation2 + $0x78] sm:$0xff] %v2859
    %3109 = vst [vmem:[#allocation2 + $0x80] sm:$0xff] %v2908
    %3110 = vst [vmem:[#allocation2 + $0x88] sm:$0xff] %v2966
    %3111 = vst [vmem:[#allocation2 + $0x90] sm:$0xff] %v2911
    %3112 = vst [vmem:[#allocation2 + $0x98] sm:$0xff] %v2969
    %3113 = vst [vmem:[#allocation2 + $0xa0] sm:$0xff] %v2914
    %3114 = vst [vmem:[#allocation2 + $0xa8] sm:$0xff] %v2972
    %3115 = vst [vmem:[#allocation2 + $0xb0] sm:$0xff] %v2917
    %3116 = vst [vmem:[#allocation2 + $0xb8] sm:$0xff] %v2975
    %3117 = vst [vmem:[#allocation2 + $0xc0] sm:$0xff] %v3024
    %3118 = vst [vmem:[#allocation2 + $0xc8] sm:$0xff] %v3082
    %3119 = vst [vmem:[#allocation2 + $0xd0] sm:$0xff] %v3027
    %3120 = vst [vmem:[#allocation2 + $0xd8] sm:$0xff] %v3085
    %3121 = vst [vmem:[#allocation2 + $0xe0] sm:$0xff] %v3030
    %3122 = vst [vmem:[#allocation2 + $0xe8] sm:$0xff] %v3088
    %3123 = vst [vmem:[#allocation2 + $0xf0] sm:$0xff] %v3033
    %3124 = vst [vmem:[#allocation2 + $0xf8] sm:$0xff] %v3091
    %v3125 = vld [vmem:[#allocation16] sm:$0xf]
    %v3126 = vld [vmem:[#allocation16 + $0x4] sm:$0xf]
    %v3127 = vld [vmem:[#allocation16 + $0x8] sm:$0xf]
    %v3128 = vld [vmem:[#allocation16 + $0xc] sm:$0xf]
    %v3129 = vld [vmem:[#allocation16 + $0x10] sm:$0xf]
    %v3130 = vld [vmem:[#allocation16 + $0x14] sm:$0xf]
    %v3131 = vld [vmem:[#allocation16 + $0x18] sm:$0xf]
    %v3132 = vld [vmem:[#allocation16 + $0x1c] sm:$0xf]
    %v3133 = vunpack.c.l.bf16 %v3125
    %v3134 = vunpack.c.l.bf16 %v3126
    %v3135 = vunpack.c.l.bf16 %v3127
    %v3136 = vunpack.c.l.bf16 %v3128
    %v3137 = vunpack.c.l.bf16 %v3129
    %v3138 = vunpack.c.l.bf16 %v3130
    %v3139 = vunpack.c.l.bf16 %v3131
    %v3140 = vunpack.c.l.bf16 %v3132
    %v3141 = vld [vmem:[#allocation2] sm:$0xff]
    %v3142 = vld [vmem:[#allocation2 + $0x8] sm:$0xff]
    %v3143 = vld [vmem:[#allocation2 + $0x10] sm:$0xff]
    %v3144 = vld [vmem:[#allocation2 + $0x18] sm:$0xff]
    %v3145 = vld [vmem:[#allocation2 + $0x20] sm:$0xff]
    %v3146 = vld [vmem:[#allocation2 + $0x28] sm:$0xff]
    %v3147 = vld [vmem:[#allocation2 + $0x30] sm:$0xff]
    %v3148 = vld [vmem:[#allocation2 + $0x38] sm:$0xff]
    %v3149 = vld [vmem:[#allocation2 + $0x40] sm:$0xff]
    %v3150 = vld [vmem:[#allocation2 + $0x48] sm:$0xff]
    %v3151 = vld [vmem:[#allocation2 + $0x50] sm:$0xff]
    %v3152 = vld [vmem:[#allocation2 + $0x58] sm:$0xff]
    %v3153 = vld [vmem:[#allocation2 + $0x60] sm:$0xff]
    %v3154 = vld [vmem:[#allocation2 + $0x68] sm:$0xff]
    %v3155 = vld [vmem:[#allocation2 + $0x70] sm:$0xff]
    %v3156 = vld [vmem:[#allocation2 + $0x78] sm:$0xff]
    %v3157 = vld [vmem:[#allocation2 + $0x80] sm:$0xff]
    %v3158 = vld [vmem:[#allocation2 + $0x88] sm:$0xff]
    %v3159 = vld [vmem:[#allocation2 + $0x90] sm:$0xff]
    %v3160 = vld [vmem:[#allocation2 + $0x98] sm:$0xff]
    %v3161 = vld [vmem:[#allocation2 + $0xa0] sm:$0xff]
    %v3162 = vld [vmem:[#allocation2 + $0xa8] sm:$0xff]
    %v3163 = vld [vmem:[#allocation2 + $0xb0] sm:$0xff]
    %v3164 = vld [vmem:[#allocation2 + $0xb8] sm:$0xff]
    %v3165 = vld [vmem:[#allocation2 + $0xc0] sm:$0xff]
    %v3166 = vld [vmem:[#allocation2 + $0xc8] sm:$0xff]
    %v3167 = vld [vmem:[#allocation2 + $0xd0] sm:$0xff]
    %v3168 = vld [vmem:[#allocation2 + $0xd8] sm:$0xff]
    %v3169 = vld [vmem:[#allocation2 + $0xe0] sm:$0xff]
    %v3170 = vld [vmem:[#allocation2 + $0xe8] sm:$0xff]
    %v3171 = vld [vmem:[#allocation2 + $0xf0] sm:$0xff]
    %v3172 = vld [vmem:[#allocation2 + $0xf8] sm:$0xff]
    %3173 = vmatpush.msra.mxu0 %v3171
    %3174 = vmatpush.msra.mxu0 %v3169
    %3175 = vmatpush.msra.mxu0 %v3167
    %3176 = vmatpush.msra.mxu0 %v3165
    %3177 = vmatpush.msra.mxu0 %v3163
    %3178 = vmatpush.msra.mxu0 %v3161
    %3179 = vmatpush.msra.mxu0 %v3159
    %3180 = vmatpush.msra.mxu0 %v3157
    %3181 = vmatpush.msra.mxu0 %v3155
    %3182 = vmatpush.msra.mxu0 %v3153
    %3183 = vmatpush.msra.mxu0 %v3151
    %3184 = vmatpush.msra.mxu0 %v3149
    %3185 = vmatpush.msra.mxu0 %v3147
    %3186 = vmatpush.msra.mxu0 %v3145
    %3187 = vmatpush.msra.mxu0 %v3143
    %3188 = vmatpush.msra.mxu0 %v3141
    %3189 = vmatmul.f32.gmra.mxu0 %v3133
    %v3190 = vpop.f32.mrf.mxu0
    %v3191 = vadd.f32 0.0, %v3190
    %3192 = vmatmul.f32.gmra.mxu0 %v3134
    %v3193 = vpop.f32.mrf.mxu0
    %v3194 = vadd.f32 0.0, %v3193
    %3195 = vmatmul.f32.gmra.mxu0 %v3135
    %v3196 = vpop.f32.mrf.mxu0
    %v3197 = vadd.f32 0.0, %v3196
    %3198 = vmatmul.f32.gmra.mxu0 %v3136
    %v3199 = vpop.f32.mrf.mxu0
    %v3200 = vadd.f32 0.0, %v3199
    %3201 = vmatmul.f32.gmra.mxu0 %v3137
    %v3202 = vpop.f32.mrf.mxu0
    %v3203 = vadd.f32 0.0, %v3202
    %3204 = vmatmul.f32.gmra.mxu0 %v3138
    %v3205 = vpop.f32.mrf.mxu0
    %v3206 = vadd.f32 0.0, %v3205
    %3207 = vmatmul.f32.gmra.mxu0 %v3139
    %v3208 = vpop.f32.mrf.mxu0
    %v3209 = vadd.f32 0.0, %v3208
    %3210 = vmatmul.f32.gmra.mxu0 %v3140
    %v3211 = vpop.f32.mrf.mxu0
    %v3212 = vadd.f32 0.0, %v3211
    %3213 = vdwg.mxu0
    %3214 = vmatpush.msra.mxu0 %v3172
    %3215 = vmatpush.msra.mxu0 %v3170
    %3216 = vmatpush.msra.mxu0 %v3168
    %3217 = vmatpush.msra.mxu0 %v3166
    %3218 = vmatpush.msra.mxu0 %v3164
    %3219 = vmatpush.msra.mxu0 %v3162
    %3220 = vmatpush.msra.mxu0 %v3160
    %3221 = vmatpush.msra.mxu0 %v3158
    %3222 = vmatpush.msra.mxu0 %v3156
    %3223 = vmatpush.msra.mxu0 %v3154
    %3224 = vmatpush.msra.mxu0 %v3152
    %3225 = vmatpush.msra.mxu0 %v3150
    %3226 = vmatpush.msra.mxu0 %v3148
    %3227 = vmatpush.msra.mxu0 %v3146
    %3228 = vmatpush.msra.mxu0 %v3144
    %3229 = vmatpush.msra.mxu0 %v3142
    %3230 = vmatmul.f32.gmra.mxu0 %v3133
    %v3231 = vpop.f32.mrf.mxu0
    %v3232 = vadd.f32 0.0, %v3231
    %3233 = vmatmul.f32.gmra.mxu0 %v3134
    %v3234 = vpop.f32.mrf.mxu0
    %v3235 = vadd.f32 0.0, %v3234
    %3236 = vmatmul.f32.gmra.mxu0 %v3135
    %v3237 = vpop.f32.mrf.mxu0
    %v3238 = vadd.f32 0.0, %v3237
    %3239 = vmatmul.f32.gmra.mxu0 %v3136
    %v3240 = vpop.f32.mrf.mxu0
    %v3241 = vadd.f32 0.0, %v3240
    %3242 = vmatmul.f32.gmra.mxu0 %v3137
    %v3243 = vpop.f32.mrf.mxu0
    %v3244 = vadd.f32 0.0, %v3243
    %3245 = vmatmul.f32.gmra.mxu0 %v3138
    %v3246 = vpop.f32.mrf.mxu0
    %v3247 = vadd.f32 0.0, %v3246
    %3248 = vmatmul.f32.gmra.mxu0 %v3139
    %v3249 = vpop.f32.mrf.mxu0
    %v3250 = vadd.f32 0.0, %v3249
    %3251 = vmatmul.f32.gmra.mxu0 %v3140
    %v3252 = vpop.f32.mrf.mxu0
    %v3253 = vadd.f32 0.0, %v3252
    %3254 = vdwg.mxu0
    %v3255 = vadd.f32 %v3191, %v3194
    %v3256 = vadd.f32 %v3255, %v3197
    %v3257 = vadd.f32 %v3256, %v3200
    %v3258 = vadd.f32 %v3257, %v3203
    %v3259 = vadd.f32 %v3258, %v3206
    %v3260 = vadd.f32 %v3259, %v3209
    %v3261 = vadd.f32 %v3260, %v3212
    %v3262 = vrot.slane %v3261, 4
    %v3263 = vadd.f32 %v3261, %v3262
    %v3264 = vrot.slane %v3263, 2
    %v3265 = vadd.f32 %v3263, %v3264
    %v3266 = vrot.slane %v3265, 1
    %v3267 = vadd.f32 %v3265, %v3266
    %v3268 = vadd.f32 %v3232, %v3235
    %v3269 = vadd.f32 %v3268, %v3238
    %v3270 = vadd.f32 %v3269, %v3241
    %v3271 = vadd.f32 %v3270, %v3244
    %v3272 = vadd.f32 %v3271, %v3247
    %v3273 = vadd.f32 %v3272, %v3250
    %v3274 = vadd.f32 %v3273, %v3253
    %v3275 = vrot.slane %v3274, 4
    %v3276 = vadd.f32 %v3274, %v3275
    %v3277 = vrot.slane %v3276, 2
    %v3278 = vadd.f32 %v3276, %v3277
    %v3279 = vrot.slane %v3278, 1
    %v3280 = vadd.f32 %v3278, %v3279
    %v3281 = vmul.f32 %v3191, %v3191
    %v3282 = vmul.f32 %v3232, %v3232
    %v3283 = vmul.f32 %v3194, %v3194
    %v3284 = vmul.f32 %v3235, %v3235
    %v3285 = vmul.f32 %v3197, %v3197
    %v3286 = vmul.f32 %v3238, %v3238
    %v3287 = vmul.f32 %v3200, %v3200
    %v3288 = vmul.f32 %v3241, %v3241
    %v3289 = vmul.f32 %v3203, %v3203
    %v3290 = vmul.f32 %v3244, %v3244
    %v3291 = vmul.f32 %v3206, %v3206
    %v3292 = vmul.f32 %v3247, %v3247
    %v3293 = vmul.f32 %v3209, %v3209
    %v3294 = vmul.f32 %v3250, %v3250
    %v3295 = vmul.f32 %v3212, %v3212
    %v3296 = vmul.f32 %v3253, %v3253
    %v3297 = vadd.f32 %v3281, %v3283
    %v3298 = vadd.f32 %v3297, %v3285
    %v3299 = vadd.f32 %v3298, %v3287
    %v3300 = vadd.f32 %v3299, %v3289
    %v3301 = vadd.f32 %v3300, %v3291
    %v3302 = vadd.f32 %v3301, %v3293
    %v3303 = vadd.f32 %v3302, %v3295
    %v3304 = vrot.slane %v3303, 4
    %v3305 = vadd.f32 %v3303, %v3304
    %v3306 = vrot.slane %v3305, 2
    %v3307 = vadd.f32 %v3305, %v3306
    %v3308 = vrot.slane %v3307, 1
    %v3309 = vadd.f32 %v3307, %v3308
    %v3310 = vadd.f32 %v3282, %v3284
    %v3311 = vadd.f32 %v3310, %v3286
    %v3312 = vadd.f32 %v3311, %v3288
    %v3313 = vadd.f32 %v3312, %v3290
    %v3314 = vadd.f32 %v3313, %v3292
    %v3315 = vadd.f32 %v3314, %v3294
    %v3316 = vadd.f32 %v3315, %v3296
    %v3317 = vrot.slane %v3316, 4
    %v3318 = vadd.f32 %v3316, %v3317
    %v3319 = vrot.slane %v3318, 2
    %v3320 = vadd.f32 %v3318, %v3319
    %v3321 = vrot.slane %v3320, 1
    %v3322 = vadd.f32 %v3320, %v3321
    %v3323 = vsel %vm606, %v3267, %v3309
    %v3324 = vsel %vm606, %v3280, %v3322
    %3325 = vrot.lane.b32.xlu0 %v3323, 8
    %v3326 = vpop.permute.xlu0 %3325
    %3327 = vrot.lane.b32.xlu0 %v3324, 8
    %v3328 = vpop.permute.xlu0 %3327
    %vm3329 = vcmp.lt.s32.totalorder %v614, 8
    %v3330 = vsel %vm3329, %v3326, %v3328
    %v3331 = vsel %vm3329, %v3328, %v3326
    %v3332 = vadd.f32 %v3323, %v3331
    %v3333 = vadd.f32 %v3324, %v3330
    %3334 = vrot.lane.b32.xlu0 %v3332, 16
    %v3335 = vpop.permute.xlu0 %3334
    %3336 = vrot.lane.b32.xlu0 %v3333, 16
    %v3337 = vpop.permute.xlu0 %3336
    %v3338 = vsel %vm2247, %v3335, %v3337
    %v3339 = vsel %vm2247, %v3337, %v3335
    %v3340 = vadd.f32 %v3332, %v3339
    %v3341 = vadd.f32 %v3333, %v3338
    %3342 = vrot.lane.b32.xlu0 %v3340, 32
    %v3343 = vpop.permute.xlu0 %3342
    %3344 = vrot.lane.b32.xlu0 %v3341, 32
    %v3345 = vpop.permute.xlu0 %3344
    %v3346 = vsel %vm1372, %v3343, %v3345
    %v3347 = vsel %vm1372, %v3345, %v3343
    %v3348 = vadd.f32 %v3340, %v3347
    %v3349 = vadd.f32 %v3341, %v3346
    %3350 = vrot.lane.b32.xlu0 %v3348, 64
    %v3351 = vpop.permute.xlu0 %3350
    %3352 = vrot.lane.b32.xlu0 %v3349, 64
    %v3353 = vpop.permute.xlu0 %3352
    %v3354 = vsel %vm615, %v3351, %v3353
    %v3355 = vsel %vm615, %v3353, %v3351
    %v3356 = vadd.f32 %v3348, %v3355
    %v3357 = vadd.f32 %v3349, %v3354
    %v3358 = vadd.f32 %v3356, %v3357
    %v3359 = vmul.f32 %v3358, 0.00048828125
    %v3360 = vmul.f32 %v3359, %v3359
    %v3362 = vrot.slane %v3360, 7
    %v3364 = vsub.f32 %v3359, %v3362
    %v3365 = vmax.f32 %v3364, 0.0
    %v3366 = vld [vmem:[%s9] ss:$2 sm:$0x3]
    %v3367 = vadd.f32 %v3365, 1e-05
    %v3368 = vrsqrt.pop %v3367
    %v3369 = vmul.f32 %v3368, %v3367
    %v3370 = vmul.f32 %v3369, %v3368
    %v3371 = vmul.f32 0.5, %v3370
    %v3372 = vsub.f32 1.5, %v3371
    %v3373 = vmul.f32 %v3368, %v3372
    %vm3374 = vweird.f32 %v3367
    %vm3375 = vweird.f32 %v3368
    %vm3376 = vmor %vm3374, %vm3375
    %v3377 = vsel %vm3376, %v3368, %v3373
    %3379 = vst [vmem:[#allocation1] sm:$0xff] %v3377
    %3380 = vst [vmem:[#allocation1 + $0x9] sm:$0xff] %v3377
    %s3381 = scalar_lea.vmem [#allocation1], 1
    %v3382 = vld [vmem:[%s3381] ss:$9 sm:$0xff]
    %v3384 = vmul.f32 %v3366, %v3382
    %s3385 = scalar_lea.vmem %s9, 1
    %v3386 = vld [vmem:[%s3385] ss:$2 sm:$0x3]
    %v3388 = vperm.slane %v3384, 0
    %v3389 = vperm.slane %v3384, 1
    %v3392 = vmul.f32 %v3359, %v3388
    %v3393 = vmul.f32 %v3359, %v3389
    %v3396 = vrot.slane %v3393, 7
    %v3397 = vsel %vm606, %v3392, %v3396
    %v3399 = vsub.f32 %v3386, %v3397
    %v3400 = vmul.f32 %v3191, %v3388
    %v3401 = vmul.f32 %v3232, %v3389
    %v3402 = vmul.f32 %v3194, %v3388
    %v3403 = vmul.f32 %v3235, %v3389
    %v3404 = vmul.f32 %v3197, %v3388
    %v3405 = vmul.f32 %v3238, %v3389
    %v3406 = vmul.f32 %v3200, %v3388
    %v3407 = vmul.f32 %v3241, %v3389
    %v3408 = vmul.f32 %v3203, %v3388
    %v3409 = vmul.f32 %v3244, %v3389
    %v3410 = vmul.f32 %v3206, %v3388
    %v3411 = vmul.f32 %v3247, %v3389
    %v3412 = vmul.f32 %v3209, %v3388
    %v3413 = vmul.f32 %v3250, %v3389
    %v3414 = vmul.f32 %v3212, %v3388
    %v3415 = vmul.f32 %v3253, %v3389
    %v3417 = vperm.slane %v3399, 0
    %v3418 = vperm.slane %v3399, 1
    %v3421 = vadd.f32 %v3400, %v3417
    %v3422 = vadd.f32 %v3401, %v3418
    %v3423 = vadd.f32 %v3402, %v3417
    %v3424 = vadd.f32 %v3403, %v3418
    %v3425 = vadd.f32 %v3404, %v3417
    %v3426 = vadd.f32 %v3405, %v3418
    %v3427 = vadd.f32 %v3406, %v3417
    %v3428 = vadd.f32 %v3407, %v3418
    %v3429 = vadd.f32 %v3408, %v3417
    %v3430 = vadd.f32 %v3409, %v3418
    %v3431 = vadd.f32 %v3410, %v3417
    %v3432 = vadd.f32 %v3411, %v3418
    %v3433 = vadd.f32 %v3412, %v3417
    %v3434 = vadd.f32 %v3413, %v3418
    %v3435 = vadd.f32 %v3414, %v3417
    %v3436 = vadd.f32 %v3415, %v3418
    %vm3437 = vcmp.gt.f32.partialorder %v3421, 0.0
    %vm3438 = vcmp.gt.f32.partialorder %v3422, 0.0
    %vm3439 = vcmp.gt.f32.partialorder %v3423, 0.0
    %vm3440 = vcmp.gt.f32.partialorder %v3424, 0.0
    %vm3441 = vcmp.gt.f32.partialorder %v3425, 0.0
    %vm3442 = vcmp.gt.f32.partialorder %v3426, 0.0
    %vm3443 = vcmp.gt.f32.partialorder %v3427, 0.0
    %vm3444 = vcmp.gt.f32.partialorder %v3428, 0.0
    %vm3445 = vcmp.gt.f32.partialorder %v3429, 0.0
    %vm3446 = vcmp.gt.f32.partialorder %v3430, 0.0
    %vm3447 = vcmp.gt.f32.partialorder %v3431, 0.0
    %vm3448 = vcmp.gt.f32.partialorder %v3432, 0.0
    %vm3449 = vcmp.gt.f32.partialorder %v3433, 0.0
    %vm3450 = vcmp.gt.f32.partialorder %v3434, 0.0
    %vm3451 = vcmp.gt.f32.partialorder %v3435, 0.0
    %vm3452 = vcmp.gt.f32.partialorder %v3436, 0.0
    %v3453 = vmul.f32 %v3421, 1.442695
    %v3454 = vpow.pop %v3453
    %v3455 = vmul.f32 %v3422, 1.442695
    %v3456 = vpow.pop %v3455
    %v3457 = vmul.f32 %v3423, 1.442695
    %v3458 = vpow.pop %v3457
    %v3459 = vmul.f32 %v3424, 1.442695
    %v3460 = vpow.pop %v3459
    %v3461 = vmul.f32 %v3425, 1.442695
    %v3462 = vpow.pop %v3461
    %v3463 = vmul.f32 %v3426, 1.442695
    %v3464 = vpow.pop %v3463
    %v3465 = vmul.f32 %v3427, 1.442695
    %v3466 = vpow.pop %v3465
    %v3467 = vmul.f32 %v3428, 1.442695
    %v3468 = vpow.pop %v3467
    %v3469 = vmul.f32 %v3429, 1.442695
    %v3470 = vpow.pop %v3469
    %v3471 = vmul.f32 %v3430, 1.442695
    %v3472 = vpow.pop %v3471
    %v3473 = vmul.f32 %v3431, 1.442695
    %v3474 = vpow.pop %v3473
    %v3475 = vmul.f32 %v3432, 1.442695
    %v3476 = vpow.pop %v3475
    %v3477 = vmul.f32 %v3433, 1.442695
    %v3478 = vpow.pop %v3477
    %v3479 = vmul.f32 %v3434, 1.442695
    %v3480 = vpow.pop %v3479
    %v3481 = vmul.f32 %v3435, 1.442695
    %v3482 = vpow.pop %v3481
    %v3483 = vmul.f32 %v3436, 1.442695
    %v3484 = vpow.pop %v3483
    %v3485 = vsub.f32 %v3454, 1.0
    %v3486 = vsub.f32 %v3456, 1.0
    %v3487 = vsub.f32 %v3458, 1.0
    %v3488 = vsub.f32 %v3460, 1.0
    %v3489 = vsub.f32 %v3462, 1.0
    %v3490 = vsub.f32 %v3464, 1.0
    %v3491 = vsub.f32 %v3466, 1.0
    %v3492 = vsub.f32 %v3468, 1.0
    %v3493 = vsub.f32 %v3470, 1.0
    %v3494 = vsub.f32 %v3472, 1.0
    %v3495 = vsub.f32 %v3474, 1.0
    %v3496 = vsub.f32 %v3476, 1.0
    %v3497 = vsub.f32 %v3478, 1.0
    %v3498 = vsub.f32 %v3480, 1.0
    %v3499 = vsub.f32 %v3482, 1.0
    %v3500 = vsub.f32 %v3484, 1.0
    %v3501 = vsel %vm3437, %v3421, %v3485
    %v3502 = vsel %vm3438, %v3422, %v3486
    %v3503 = vsel %vm3439, %v3423, %v3487
    %v3504 = vsel %vm3440, %v3424, %v3488
    %v3505 = vsel %vm3441, %v3425, %v3489
    %v3506 = vsel %vm3442, %v3426, %v3490
    %v3507 = vsel %vm3443, %v3427, %v3491
    %v3508 = vsel %vm3444, %v3428, %v3492
    %v3509 = vsel %vm3445, %v3429, %v3493
    %v3510 = vsel %vm3446, %v3430, %v3494
    %v3511 = vsel %vm3447, %v3431, %v3495
    %v3512 = vsel %vm3448, %v3432, %v3496
    %v3513 = vsel %vm3449, %v3433, %v3497
    %v3514 = vsel %vm3450, %v3434, %v3498
    %v3515 = vsel %vm3451, %v3435, %v3499
    %v3516 = vsel %vm3452, %v3436, %v3500
    %s3517 = smul.u32 %s681, 5
    %s3518 = sshll.u32 %s3517, 4
    %3519 = dma.done %s172, %s3518
    %v3520 = vld [vmem:[#allocation6] sm:$0xff]
    %v3521 = vld [vmem:[#allocation6 + $0x8] sm:$0xff]
    %v3522 = vld [vmem:[#allocation6 + $0x10] sm:$0xff]
    %v3523 = vld [vmem:[#allocation6 + $0x18] sm:$0xff]
    %v3524 = vld [vmem:[#allocation6 + $0x20] sm:$0xff]
    %v3525 = vld [vmem:[#allocation6 + $0x28] sm:$0xff]
    %v3526 = vld [vmem:[#allocation6 + $0x30] sm:$0xff]
    %v3527 = vld [vmem:[#allocation6 + $0x38] sm:$0xff]
    %v3528 = vld [vmem:[#allocation6 + $0x40] sm:$0xff]
    %v3529 = vld [vmem:[#allocation6 + $0x48] sm:$0xff]
    %v3530 = vld [vmem:[#allocation6 + $0x50] sm:$0xff]
    %v3531 = vld [vmem:[#allocation6 + $0x58] sm:$0xff]
    %v3532 = vld [vmem:[#allocation6 + $0x60] sm:$0xff]
    %v3533 = vld [vmem:[#allocation6 + $0x68] sm:$0xff]
    %v3534 = vld [vmem:[#allocation6 + $0x70] sm:$0xff]
    %v3535 = vld [vmem:[#allocation6 + $0x78] sm:$0xff]
    %v3536 = vld [vmem:[#allocation6 + $0x80] sm:$0xff]
    %v3537 = vld [vmem:[#allocation6 + $0x88] sm:$0xff]
    %v3538 = vld [vmem:[#allocation6 + $0x90] sm:$0xff]
    %v3539 = vld [vmem:[#allocation6 + $0x98] sm:$0xff]
    %v3540 = vld [vmem:[#allocation6 + $0xa0] sm:$0xff]
    %v3541 = vld [vmem:[#allocation6 + $0xa8] sm:$0xff]
    %v3542 = vld [vmem:[#allocation6 + $0xb0] sm:$0xff]
    %v3543 = vld [vmem:[#allocation6 + $0xb8] sm:$0xff]
    %v3544 = vld [vmem:[#allocation6 + $0xc0] sm:$0xff]
    %v3545 = vld [vmem:[#allocation6 + $0xc8] sm:$0xff]
    %v3546 = vld [vmem:[#allocation6 + $0xd0] sm:$0xff]
    %v3547 = vld [vmem:[#allocation6 + $0xd8] sm:$0xff]
    %v3548 = vld [vmem:[#allocation6 + $0xe0] sm:$0xff]
    %v3549 = vld [vmem:[#allocation6 + $0xe8] sm:$0xff]
    %v3550 = vld [vmem:[#allocation6 + $0xf0] sm:$0xff]
    %v3551 = vld [vmem:[#allocation6 + $0xf8] sm:$0xff]
    %v3552 = vld [vmem:[#allocation6 + $0x100] sm:$0xff]
    %v3553 = vld [vmem:[#allocation6 + $0x108] sm:$0xff]
    %v3554 = vld [vmem:[#allocation6 + $0x110] sm:$0xff]
    %v3555 = vld [vmem:[#allocation6 + $0x118] sm:$0xff]
    %v3556 = vld [vmem:[#allocation6 + $0x120] sm:$0xff]
    %v3557 = vld [vmem:[#allocation6 + $0x128] sm:$0xff]
    %v3558 = vld [vmem:[#allocation6 + $0x130] sm:$0xff]
    %v3559 = vld [vmem:[#allocation6 + $0x138] sm:$0xff]
    %v3560 = vld [vmem:[#allocation6 + $0x140] sm:$0xff]
    %v3561 = vld [vmem:[#allocation6 + $0x148] sm:$0xff]
    %v3562 = vld [vmem:[#allocation6 + $0x150] sm:$0xff]
    %v3563 = vld [vmem:[#allocation6 + $0x158] sm:$0xff]
    %v3564 = vld [vmem:[#allocation6 + $0x160] sm:$0xff]
    %v3565 = vld [vmem:[#allocation6 + $0x168] sm:$0xff]
    %v3566 = vld [vmem:[#allocation6 + $0x170] sm:$0xff]
    %v3567 = vld [vmem:[#allocation6 + $0x178] sm:$0xff]
    %v3568 = vld [vmem:[#allocation6 + $0x180] sm:$0xff]
    %v3569 = vld [vmem:[#allocation6 + $0x188] sm:$0xff]
    %v3570 = vld [vmem:[#allocation6 + $0x190] sm:$0xff]
    %v3571 = vld [vmem:[#allocation6 + $0x198] sm:$0xff]
    %v3572 = vld [vmem:[#allocation6 + $0x1a0] sm:$0xff]
    %v3573 = vld [vmem:[#allocation6 + $0x1a8] sm:$0xff]
    %v3574 = vld [vmem:[#allocation6 + $0x1b0] sm:$0xff]
    %v3575 = vld [vmem:[#allocation6 + $0x1b8] sm:$0xff]
    %v3576 = vld [vmem:[#allocation6 + $0x1c0] sm:$0xff]
    %v3577 = vld [vmem:[#allocation6 + $0x1c8] sm:$0xff]
    %v3578 = vld [vmem:[#allocation6 + $0x1d0] sm:$0xff]
    %v3579 = vld [vmem:[#allocation6 + $0x1d8] sm:$0xff]
    %v3580 = vld [vmem:[#allocation6 + $0x1e0] sm:$0xff]
    %v3581 = vld [vmem:[#allocation6 + $0x1e8] sm:$0xff]
    %v3582 = vld [vmem:[#allocation6 + $0x1f0] sm:$0xff]
    %v3583 = vld [vmem:[#allocation6 + $0x1f8] sm:$0xff]
    %v3584 = vld [vmem:[#allocation6 + $0x200] sm:$0xff]
    %v3585 = vld [vmem:[#allocation6 + $0x208] sm:$0xff]
    %v3586 = vld [vmem:[#allocation6 + $0x210] sm:$0xff]
    %v3587 = vld [vmem:[#allocation6 + $0x218] sm:$0xff]
    %v3588 = vld [vmem:[#allocation6 + $0x220] sm:$0xff]
    %v3589 = vld [vmem:[#allocation6 + $0x228] sm:$0xff]
    %v3590 = vld [vmem:[#allocation6 + $0x230] sm:$0xff]
    %v3591 = vld [vmem:[#allocation6 + $0x238] sm:$0xff]
    %v3592 = vld [vmem:[#allocation6 + $0x240] sm:$0xff]
    %v3593 = vld [vmem:[#allocation6 + $0x248] sm:$0xff]
    %v3594 = vld [vmem:[#allocation6 + $0x250] sm:$0xff]
    %v3595 = vld [vmem:[#allocation6 + $0x258] sm:$0xff]
    %v3596 = vld [vmem:[#allocation6 + $0x260] sm:$0xff]
    %v3597 = vld [vmem:[#allocation6 + $0x268] sm:$0xff]
    %v3598 = vld [vmem:[#allocation6 + $0x270] sm:$0xff]
    %v3599 = vld [vmem:[#allocation6 + $0x278] sm:$0xff]
    %v3600 = vld [vmem:[#allocation6 + $0x280] sm:$0xff]
    %v3601 = vld [vmem:[#allocation6 + $0x288] sm:$0xff]
    %v3602 = vld [vmem:[#allocation6 + $0x290] sm:$0xff]
    %v3603 = vld [vmem:[#allocation6 + $0x298] sm:$0xff]
    %v3604 = vld [vmem:[#allocation6 + $0x2a0] sm:$0xff]
    %v3605 = vld [vmem:[#allocation6 + $0x2a8] sm:$0xff]
    %v3606 = vld [vmem:[#allocation6 + $0x2b0] sm:$0xff]
    %v3607 = vld [vmem:[#allocation6 + $0x2b8] sm:$0xff]
    %v3608 = vld [vmem:[#allocation6 + $0x2c0] sm:$0xff]
    %v3609 = vld [vmem:[#allocation6 + $0x2c8] sm:$0xff]
    %v3610 = vld [vmem:[#allocation6 + $0x2d0] sm:$0xff]
    %v3611 = vld [vmem:[#allocation6 + $0x2d8] sm:$0xff]
    %v3612 = vld [vmem:[#allocation6 + $0x2e0] sm:$0xff]
    %v3613 = vld [vmem:[#allocation6 + $0x2e8] sm:$0xff]
    %v3614 = vld [vmem:[#allocation6 + $0x2f0] sm:$0xff]
    %v3615 = vld [vmem:[#allocation6 + $0x2f8] sm:$0xff]
    %v3616 = vld [vmem:[#allocation6 + $0x300] sm:$0xff]
    %v3617 = vld [vmem:[#allocation6 + $0x308] sm:$0xff]
    %v3618 = vld [vmem:[#allocation6 + $0x310] sm:$0xff]
    %v3619 = vld [vmem:[#allocation6 + $0x318] sm:$0xff]
    %v3620 = vld [vmem:[#allocation6 + $0x320] sm:$0xff]
    %v3621 = vld [vmem:[#allocation6 + $0x328] sm:$0xff]
    %v3622 = vld [vmem:[#allocation6 + $0x330] sm:$0xff]
    %v3623 = vld [vmem:[#allocation6 + $0x338] sm:$0xff]
    %v3624 = vld [vmem:[#allocation6 + $0x340] sm:$0xff]
    %v3625 = vld [vmem:[#allocation6 + $0x348] sm:$0xff]
    %v3626 = vld [vmem:[#allocation6 + $0x350] sm:$0xff]
    %v3627 = vld [vmem:[#allocation6 + $0x358] sm:$0xff]
    %v3628 = vld [vmem:[#allocation6 + $0x360] sm:$0xff]
    %v3629 = vld [vmem:[#allocation6 + $0x368] sm:$0xff]
    %v3630 = vld [vmem:[#allocation6 + $0x370] sm:$0xff]
    %v3631 = vld [vmem:[#allocation6 + $0x378] sm:$0xff]
    %v3632 = vld [vmem:[#allocation6 + $0x380] sm:$0xff]
    %v3633 = vld [vmem:[#allocation6 + $0x388] sm:$0xff]
    %v3634 = vld [vmem:[#allocation6 + $0x390] sm:$0xff]
    %v3635 = vld [vmem:[#allocation6 + $0x398] sm:$0xff]
    %v3636 = vld [vmem:[#allocation6 + $0x3a0] sm:$0xff]
    %v3637 = vld [vmem:[#allocation6 + $0x3a8] sm:$0xff]
    %v3638 = vld [vmem:[#allocation6 + $0x3b0] sm:$0xff]
    %v3639 = vld [vmem:[#allocation6 + $0x3b8] sm:$0xff]
    %v3640 = vld [vmem:[#allocation6 + $0x3c0] sm:$0xff]
    %v3641 = vld [vmem:[#allocation6 + $0x3c8] sm:$0xff]
    %v3642 = vld [vmem:[#allocation6 + $0x3d0] sm:$0xff]
    %v3643 = vld [vmem:[#allocation6 + $0x3d8] sm:$0xff]
    %v3644 = vld [vmem:[#allocation6 + $0x3e0] sm:$0xff]
    %v3645 = vld [vmem:[#allocation6 + $0x3e8] sm:$0xff]
    %v3646 = vld [vmem:[#allocation6 + $0x3f0] sm:$0xff]
    %v3647 = vld [vmem:[#allocation6 + $0x3f8] sm:$0xff]
    %v3648 = vld [vmem:[#allocation6 + $0x400] sm:$0xff]
    %v3649 = vld [vmem:[#allocation6 + $0x408] sm:$0xff]
    %v3650 = vld [vmem:[#allocation6 + $0x410] sm:$0xff]
    %v3651 = vld [vmem:[#allocation6 + $0x418] sm:$0xff]
    %v3652 = vld [vmem:[#allocation6 + $0x420] sm:$0xff]
    %v3653 = vld [vmem:[#allocation6 + $0x428] sm:$0xff]
    %v3654 = vld [vmem:[#allocation6 + $0x430] sm:$0xff]
    %v3655 = vld [vmem:[#allocation6 + $0x438] sm:$0xff]
    %v3656 = vld [vmem:[#allocation6 + $0x440] sm:$0xff]
    %v3657 = vld [vmem:[#allocation6 + $0x448] sm:$0xff]
    %v3658 = vld [vmem:[#allocation6 + $0x450] sm:$0xff]
    %v3659 = vld [vmem:[#allocation6 + $0x458] sm:$0xff]
    %v3660 = vld [vmem:[#allocation6 + $0x460] sm:$0xff]
    %v3661 = vld [vmem:[#allocation6 + $0x468] sm:$0xff]
    %v3662 = vld [vmem:[#allocation6 + $0x470] sm:$0xff]
    %v3663 = vld [vmem:[#allocation6 + $0x478] sm:$0xff]
    %v3664 = vld [vmem:[#allocation6 + $0x480] sm:$0xff]
    %v3665 = vld [vmem:[#allocation6 + $0x488] sm:$0xff]
    %v3666 = vld [vmem:[#allocation6 + $0x490] sm:$0xff]
    %v3667 = vld [vmem:[#allocation6 + $0x498] sm:$0xff]
    %v3668 = vld [vmem:[#allocation6 + $0x4a0] sm:$0xff]
    %v3669 = vld [vmem:[#allocation6 + $0x4a8] sm:$0xff]
    %v3670 = vld [vmem:[#allocation6 + $0x4b0] sm:$0xff]
    %v3671 = vld [vmem:[#allocation6 + $0x4b8] sm:$0xff]
    %v3672 = vld [vmem:[#allocation6 + $0x4c0] sm:$0xff]
    %v3673 = vld [vmem:[#allocation6 + $0x4c8] sm:$0xff]
    %v3674 = vld [vmem:[#allocation6 + $0x4d0] sm:$0xff]
    %v3675 = vld [vmem:[#allocation6 + $0x4d8] sm:$0xff]
    %v3676 = vld [vmem:[#allocation6 + $0x4e0] sm:$0xff]
    %v3677 = vld [vmem:[#allocation6 + $0x4e8] sm:$0xff]
    %v3678 = vld [vmem:[#allocation6 + $0x4f0] sm:$0xff]
    %v3679 = vld [vmem:[#allocation6 + $0x4f8] sm:$0xff]
    %3680 = vmatpush.msra.mxu0 %v3595
    %3681 = vmatpush.msra.mxu0 %v3590
    %3682 = vmatpush.msra.mxu0 %v3585
    %3683 = vmatpush.msra.mxu0 %v3580
    %3684 = vmatpush.msra.mxu0 %v3575
    %3685 = vmatpush.msra.mxu0 %v3570
    %3686 = vmatpush.msra.mxu0 %v3565
    %3687 = vmatpush.msra.mxu0 %v3560
    %3688 = vmatpush.msra.mxu0 %v3555
    %3689 = vmatpush.msra.mxu0 %v3550
    %3690 = vmatpush.msra.mxu0 %v3545
    %3691 = vmatpush.msra.mxu0 %v3540
    %3692 = vmatpush.msra.mxu0 %v3535
    %3693 = vmatpush.msra.mxu0 %v3530
    %3694 = vmatpush.msra.mxu0 %v3525
    %3695 = vmatpush.msra.mxu0 %v3520
    %3696 = vmatmul.f32.gmra.mxu0 %v3501
    %v3697 = vpop.f32.mrf.mxu0
    %v3698 = vadd.f32 0.0, %v3697
    %3699 = vmatmul.f32.gmra.mxu0 %v3503
    %v3700 = vpop.f32.mrf.mxu0
    %v3701 = vadd.f32 0.0, %v3700
    %3702 = vmatmul.f32.gmra.mxu0 %v3505
    %v3703 = vpop.f32.mrf.mxu0
    %v3704 = vadd.f32 0.0, %v3703
    %3705 = vmatmul.f32.gmra.mxu0 %v3507
    %v3706 = vpop.f32.mrf.mxu0
    %v3707 = vadd.f32 0.0, %v3706
    %3708 = vmatmul.f32.gmra.mxu0 %v3509
    %v3709 = vpop.f32.mrf.mxu0
    %v3710 = vadd.f32 0.0, %v3709
    %3711 = vmatmul.f32.gmra.mxu0 %v3511
    %v3712 = vpop.f32.mrf.mxu0
    %v3713 = vadd.f32 0.0, %v3712
    %3714 = vmatmul.f32.gmra.mxu0 %v3513
    %v3715 = vpop.f32.mrf.mxu0
    %v3716 = vadd.f32 0.0, %v3715
    %3717 = vmatmul.f32.gmra.mxu0 %v3515
    %v3718 = vpop.f32.mrf.mxu0
    %v3719 = vadd.f32 0.0, %v3718
    %3720 = vdwg.mxu0
    %3721 = vmatpush.msra.mxu0 %v3675
    %3722 = vmatpush.msra.mxu0 %v3670
    %3723 = vmatpush.msra.mxu0 %v3665
    %3724 = vmatpush.msra.mxu0 %v3660
    %3725 = vmatpush.msra.mxu0 %v3655
    %3726 = vmatpush.msra.mxu0 %v3650
    %3727 = vmatpush.msra.mxu0 %v3645
    %3728 = vmatpush.msra.mxu0 %v3640
    %3729 = vmatpush.msra.mxu0 %v3635
    %3730 = vmatpush.msra.mxu0 %v3630
    %3731 = vmatpush.msra.mxu0 %v3625
    %3732 = vmatpush.msra.mxu0 %v3620
    %3733 = vmatpush.msra.mxu0 %v3615
    %3734 = vmatpush.msra.mxu0 %v3610
    %3735 = vmatpush.msra.mxu0 %v3605
    %3736 = vmatpush.msra.mxu0 %v3600
    %3737 = vmatmul.f32.gmra.mxu0 %v3502
    %v3738 = vpop.f32.mrf.mxu0
    %v3739 = vadd.f32 %v3698, %v3738
    %3740 = vmatmul.f32.gmra.mxu0 %v3504
    %v3741 = vpop.f32.mrf.mxu0
    %v3742 = vadd.f32 %v3701, %v3741
    %3743 = vmatmul.f32.gmra.mxu0 %v3506
    %v3744 = vpop.f32.mrf.mxu0
    %v3745 = vadd.f32 %v3704, %v3744
    %3746 = vmatmul.f32.gmra.mxu0 %v3508
    %v3747 = vpop.f32.mrf.mxu0
    %v3748 = vadd.f32 %v3707, %v3747
    %3749 = vmatmul.f32.gmra.mxu0 %v3510
    %v3750 = vpop.f32.mrf.mxu0
    %v3751 = vadd.f32 %v3710, %v3750
    %3752 = vmatmul.f32.gmra.mxu0 %v3512
    %v3753 = vpop.f32.mrf.mxu0
    %v3754 = vadd.f32 %v3713, %v3753
    %3755 = vmatmul.f32.gmra.mxu0 %v3514
    %v3756 = vpop.f32.mrf.mxu0
    %v3757 = vadd.f32 %v3716, %v3756
    %3758 = vmatmul.f32.gmra.mxu0 %v3516
    %v3759 = vpop.f32.mrf.mxu0
    %v3760 = vadd.f32 %v3719, %v3759
    %3761 = vdwg.mxu0
    %3762 = vmatpush.msra.mxu0 %v3596
    %3763 = vmatpush.msra.mxu0 %v3591
    %3764 = vmatpush.msra.mxu0 %v3586
    %3765 = vmatpush.msra.mxu0 %v3581
    %3766 = vmatpush.msra.mxu0 %v3576
    %3767 = vmatpush.msra.mxu0 %v3571
    %3768 = vmatpush.msra.mxu0 %v3566
    %3769 = vmatpush.msra.mxu0 %v3561
    %3770 = vmatpush.msra.mxu0 %v3556
    %3771 = vmatpush.msra.mxu0 %v3551
    %3772 = vmatpush.msra.mxu0 %v3546
    %3773 = vmatpush.msra.mxu0 %v3541
    %3774 = vmatpush.msra.mxu0 %v3536
    %3775 = vmatpush.msra.mxu0 %v3531
    %3776 = vmatpush.msra.mxu0 %v3526
    %3777 = vmatpush.msra.mxu0 %v3521
    %3778 = vmatmul.f32.gmra.mxu0 %v3501
    %v3779 = vpop.f32.mrf.mxu0
    %v3780 = vadd.f32 0.0, %v3779
    %3781 = vmatmul.f32.gmra.mxu0 %v3503
    %v3782 = vpop.f32.mrf.mxu0
    %v3783 = vadd.f32 0.0, %v3782
    %3784 = vmatmul.f32.gmra.mxu0 %v3505
    %v3785 = vpop.f32.mrf.mxu0
    %v3786 = vadd.f32 0.0, %v3785
    %3787 = vmatmul.f32.gmra.mxu0 %v3507
    %v3788 = vpop.f32.mrf.mxu0
    %v3789 = vadd.f32 0.0, %v3788
    %3790 = vmatmul.f32.gmra.mxu0 %v3509
    %v3791 = vpop.f32.mrf.mxu0
    %v3792 = vadd.f32 0.0, %v3791
    %3793 = vmatmul.f32.gmra.mxu0 %v3511
    %v3794 = vpop.f32.mrf.mxu0
    %v3795 = vadd.f32 0.0, %v3794
    %3796 = vmatmul.f32.gmra.mxu0 %v3513
    %v3797 = vpop.f32.mrf.mxu0
    %v3798 = vadd.f32 0.0, %v3797
    %3799 = vmatmul.f32.gmra.mxu0 %v3515
    %v3800 = vpop.f32.mrf.mxu0
    %v3801 = vadd.f32 0.0, %v3800
    %3802 = vdwg.mxu0
    %3803 = vmatpush.msra.mxu0 %v3676
    %3804 = vmatpush.msra.mxu0 %v3671
    %3805 = vmatpush.msra.mxu0 %v3666
    %3806 = vmatpush.msra.mxu0 %v3661
    %3807 = vmatpush.msra.mxu0 %v3656
    %3808 = vmatpush.msra.mxu0 %v3651
    %3809 = vmatpush.msra.mxu0 %v3646
    %3810 = vmatpush.msra.mxu0 %v3641
    %3811 = vmatpush.msra.mxu0 %v3636
    %3812 = vmatpush.msra.mxu0 %v3631
    %3813 = vmatpush.msra.mxu0 %v3626
    %3814 = vmatpush.msra.mxu0 %v3621
    %3815 = vmatpush.msra.mxu0 %v3616
    %3816 = vmatpush.msra.mxu0 %v3611
    %3817 = vmatpush.msra.mxu0 %v3606
    %3818 = vmatpush.msra.mxu0 %v3601
    %3819 = vmatmul.f32.gmra.mxu0 %v3502
    %v3820 = vpop.f32.mrf.mxu0
    %v3821 = vadd.f32 %v3780, %v3820
    %3822 = vmatmul.f32.gmra.mxu0 %v3504
    %v3823 = vpop.f32.mrf.mxu0
    %v3824 = vadd.f32 %v3783, %v3823
    %3825 = vmatmul.f32.gmra.mxu0 %v3506
    %v3826 = vpop.f32.mrf.mxu0
    %v3827 = vadd.f32 %v3786, %v3826
    %3828 = vmatmul.f32.gmra.mxu0 %v3508
    %v3829 = vpop.f32.mrf.mxu0
    %v3830 = vadd.f32 %v3789, %v3829
    %3831 = vmatmul.f32.gmra.mxu0 %v3510
    %v3832 = vpop.f32.mrf.mxu0
    %v3833 = vadd.f32 %v3792, %v3832
    %3834 = vmatmul.f32.gmra.mxu0 %v3512
    %v3835 = vpop.f32.mrf.mxu0
    %v3836 = vadd.f32 %v3795, %v3835
    %3837 = vmatmul.f32.gmra.mxu0 %v3514
    %v3838 = vpop.f32.mrf.mxu0
    %v3839 = vadd.f32 %v3798, %v3838
    %3840 = vmatmul.f32.gmra.mxu0 %v3516
    %v3841 = vpop.f32.mrf.mxu0
    %v3842 = vadd.f32 %v3801, %v3841
    %3843 = vdwg.mxu0
    %3844 = vmatpush.msra.mxu0 %v3597
    %3845 = vmatpush.msra.mxu0 %v3592
    %3846 = vmatpush.msra.mxu0 %v3587
    %3847 = vmatpush.msra.mxu0 %v3582
    %3848 = vmatpush.msra.mxu0 %v3577
    %3849 = vmatpush.msra.mxu0 %v3572
    %3850 = vmatpush.msra.mxu0 %v3567
    %3851 = vmatpush.msra.mxu0 %v3562
    %3852 = vmatpush.msra.mxu0 %v3557
    %3853 = vmatpush.msra.mxu0 %v3552
    %3854 = vmatpush.msra.mxu0 %v3547
    %3855 = vmatpush.msra.mxu0 %v3542
    %3856 = vmatpush.msra.mxu0 %v3537
    %3857 = vmatpush.msra.mxu0 %v3532
    %3858 = vmatpush.msra.mxu0 %v3527
    %3859 = vmatpush.msra.mxu0 %v3522
    %3860 = vmatmul.f32.gmra.mxu0 %v3501
    %v3861 = vpop.f32.mrf.mxu0
    %v3862 = vadd.f32 0.0, %v3861
    %3863 = vmatmul.f32.gmra.mxu0 %v3503
    %v3864 = vpop.f32.mrf.mxu0
    %v3865 = vadd.f32 0.0, %v3864
    %3866 = vmatmul.f32.gmra.mxu0 %v3505
    %v3867 = vpop.f32.mrf.mxu0
    %v3868 = vadd.f32 0.0, %v3867
    %3869 = vmatmul.f32.gmra.mxu0 %v3507
    %v3870 = vpop.f32.mrf.mxu0
    %v3871 = vadd.f32 0.0, %v3870
    %3872 = vmatmul.f32.gmra.mxu0 %v3509
    %v3873 = vpop.f32.mrf.mxu0
    %v3874 = vadd.f32 0.0, %v3873
    %3875 = vmatmul.f32.gmra.mxu0 %v3511
    %v3876 = vpop.f32.mrf.mxu0
    %v3877 = vadd.f32 0.0, %v3876
    %3878 = vmatmul.f32.gmra.mxu0 %v3513
    %v3879 = vpop.f32.mrf.mxu0
    %v3880 = vadd.f32 0.0, %v3879
    %3881 = vmatmul.f32.gmra.mxu0 %v3515
    %v3882 = vpop.f32.mrf.mxu0
    %v3883 = vadd.f32 0.0, %v3882
    %3884 = vdwg.mxu0
    %3885 = vmatpush.msra.mxu0 %v3677
    %3886 = vmatpush.msra.mxu0 %v3672
    %3887 = vmatpush.msra.mxu0 %v3667
    %3888 = vmatpush.msra.mxu0 %v3662
    %3889 = vmatpush.msra.mxu0 %v3657
    %3890 = vmatpush.msra.mxu0 %v3652
    %3891 = vmatpush.msra.mxu0 %v3647
    %3892 = vmatpush.msra.mxu0 %v3642
    %3893 = vmatpush.msra.mxu0 %v3637
    %3894 = vmatpush.msra.mxu0 %v3632
    %3895 = vmatpush.msra.mxu0 %v3627
    %3896 = vmatpush.msra.mxu0 %v3622
    %3897 = vmatpush.msra.mxu0 %v3617
    %3898 = vmatpush.msra.mxu0 %v3612
    %3899 = vmatpush.msra.mxu0 %v3607
    %3900 = vmatpush.msra.mxu0 %v3602
    %3901 = vmatmul.f32.gmra.mxu0 %v3502
    %v3902 = vpop.f32.mrf.mxu0
    %v3903 = vadd.f32 %v3862, %v3902
    %3904 = vmatmul.f32.gmra.mxu0 %v3504
    %v3905 = vpop.f32.mrf.mxu0
    %v3906 = vadd.f32 %v3865, %v3905
    %3907 = vmatmul.f32.gmra.mxu0 %v3506
    %v3908 = vpop.f32.mrf.mxu0
    %v3909 = vadd.f32 %v3868, %v3908
    %3910 = vmatmul.f32.gmra.mxu0 %v3508
    %v3911 = vpop.f32.mrf.mxu0
    %v3912 = vadd.f32 %v3871, %v3911
    %3913 = vmatmul.f32.gmra.mxu0 %v3510
    %v3914 = vpop.f32.mrf.mxu0
    %v3915 = vadd.f32 %v3874, %v3914
    %3916 = vmatmul.f32.gmra.mxu0 %v3512
    %v3917 = vpop.f32.mrf.mxu0
    %v3918 = vadd.f32 %v3877, %v3917
    %3919 = vmatmul.f32.gmra.mxu0 %v3514
    %v3920 = vpop.f32.mrf.mxu0
    %v3921 = vadd.f32 %v3880, %v3920
    %3922 = vmatmul.f32.gmra.mxu0 %v3516
    %v3923 = vpop.f32.mrf.mxu0
    %v3924 = vadd.f32 %v3883, %v3923
    %3925 = vdwg.mxu0
    %3926 = vmatpush.msra.mxu0 %v3598
    %3927 = vmatpush.msra.mxu0 %v3593
    %3928 = vmatpush.msra.mxu0 %v3588
    %3929 = vmatpush.msra.mxu0 %v3583
    %3930 = vmatpush.msra.mxu0 %v3578
    %3931 = vmatpush.msra.mxu0 %v3573
    %3932 = vmatpush.msra.mxu0 %v3568
    %3933 = vmatpush.msra.mxu0 %v3563
    %3934 = vmatpush.msra.mxu0 %v3558
    %3935 = vmatpush.msra.mxu0 %v3553
    %3936 = vmatpush.msra.mxu0 %v3548
    %3937 = vmatpush.msra.mxu0 %v3543
    %3938 = vmatpush.msra.mxu0 %v3538
    %3939 = vmatpush.msra.mxu0 %v3533
    %3940 = vmatpush.msra.mxu0 %v3528
    %3941 = vmatpush.msra.mxu0 %v3523
    %3942 = vmatmul.f32.gmra.mxu0 %v3501
    %v3943 = vpop.f32.mrf.mxu0
    %v3944 = vadd.f32 0.0, %v3943
    %3945 = vmatmul.f32.gmra.mxu0 %v3503
    %v3946 = vpop.f32.mrf.mxu0
    %v3947 = vadd.f32 0.0, %v3946
    %3948 = vmatmul.f32.gmra.mxu0 %v3505
    %v3949 = vpop.f32.mrf.mxu0
    %v3950 = vadd.f32 0.0, %v3949
    %3951 = vmatmul.f32.gmra.mxu0 %v3507
    %v3952 = vpop.f32.mrf.mxu0
    %v3953 = vadd.f32 0.0, %v3952
    %3954 = vmatmul.f32.gmra.mxu0 %v3509
    %v3955 = vpop.f32.mrf.mxu0
    %v3956 = vadd.f32 0.0, %v3955
    %3957 = vmatmul.f32.gmra.mxu0 %v3511
    %v3958 = vpop.f32.mrf.mxu0
    %v3959 = vadd.f32 0.0, %v3958
    %3960 = vmatmul.f32.gmra.mxu0 %v3513
    %v3961 = vpop.f32.mrf.mxu0
    %v3962 = vadd.f32 0.0, %v3961
    %3963 = vmatmul.f32.gmra.mxu0 %v3515
    %v3964 = vpop.f32.mrf.mxu0
    %v3965 = vadd.f32 0.0, %v3964
    %3966 = vdwg.mxu0
    %3967 = vmatpush.msra.mxu0 %v3678
    %3968 = vmatpush.msra.mxu0 %v3673
    %3969 = vmatpush.msra.mxu0 %v3668
    %3970 = vmatpush.msra.mxu0 %v3663
    %3971 = vmatpush.msra.mxu0 %v3658
    %3972 = vmatpush.msra.mxu0 %v3653
    %3973 = vmatpush.msra.mxu0 %v3648
    %3974 = vmatpush.msra.mxu0 %v3643
    %3975 = vmatpush.msra.mxu0 %v3638
    %3976 = vmatpush.msra.mxu0 %v3633
    %3977 = vmatpush.msra.mxu0 %v3628
    %3978 = vmatpush.msra.mxu0 %v3623
    %3979 = vmatpush.msra.mxu0 %v3618
    %3980 = vmatpush.msra.mxu0 %v3613
    %3981 = vmatpush.msra.mxu0 %v3608
    %3982 = vmatpush.msra.mxu0 %v3603
    %3983 = vmatmul.f32.gmra.mxu0 %v3502
    %v3984 = vpop.f32.mrf.mxu0
    %v3985 = vadd.f32 %v3944, %v3984
    %3986 = vmatmul.f32.gmra.mxu0 %v3504
    %v3987 = vpop.f32.mrf.mxu0
    %v3988 = vadd.f32 %v3947, %v3987
    %3989 = vmatmul.f32.gmra.mxu0 %v3506
    %v3990 = vpop.f32.mrf.mxu0
    %v3991 = vadd.f32 %v3950, %v3990
    %3992 = vmatmul.f32.gmra.mxu0 %v3508
    %v3993 = vpop.f32.mrf.mxu0
    %v3994 = vadd.f32 %v3953, %v3993
    %3995 = vmatmul.f32.gmra.mxu0 %v3510
    %v3996 = vpop.f32.mrf.mxu0
    %v3997 = vadd.f32 %v3956, %v3996
    %3998 = vmatmul.f32.gmra.mxu0 %v3512
    %v3999 = vpop.f32.mrf.mxu0
    %v4000 = vadd.f32 %v3959, %v3999
    %4001 = vmatmul.f32.gmra.mxu0 %v3514
    %v4002 = vpop.f32.mrf.mxu0
    %v4003 = vadd.f32 %v3962, %v4002
    %4004 = vmatmul.f32.gmra.mxu0 %v3516
    %v4005 = vpop.f32.mrf.mxu0
    %v4006 = vadd.f32 %v3965, %v4005
    %4007 = vdwg.mxu0
    %4008 = vmatpush.msra.mxu0 %v3599
    %4009 = vmatpush.msra.mxu0 %v3594
    %4010 = vmatpush.msra.mxu0 %v3589
    %4011 = vmatpush.msra.mxu0 %v3584
    %4012 = vmatpush.msra.mxu0 %v3579
    %4013 = vmatpush.msra.mxu0 %v3574
    %4014 = vmatpush.msra.mxu0 %v3569
    %4015 = vmatpush.msra.mxu0 %v3564
    %4016 = vmatpush.msra.mxu0 %v3559
    %4017 = vmatpush.msra.mxu0 %v3554
    %4018 = vmatpush.msra.mxu0 %v3549
    %4019 = vmatpush.msra.mxu0 %v3544
    %4020 = vmatpush.msra.mxu0 %v3539
    %4021 = vmatpush.msra.mxu0 %v3534
    %4022 = vmatpush.msra.mxu0 %v3529
    %4023 = vmatpush.msra.mxu0 %v3524
    %4024 = vmatmul.f32.gmra.mxu0 %v3501
    %v4025 = vpop.f32.mrf.mxu0
    %v4026 = vadd.f32 0.0, %v4025
    %4027 = vmatmul.f32.gmra.mxu0 %v3503
    %v4028 = vpop.f32.mrf.mxu0
    %v4029 = vadd.f32 0.0, %v4028
    %4030 = vmatmul.f32.gmra.mxu0 %v3505
    %v4031 = vpop.f32.mrf.mxu0
    %v4032 = vadd.f32 0.0, %v4031
    %4033 = vmatmul.f32.gmra.mxu0 %v3507
    %v4034 = vpop.f32.mrf.mxu0
    %v4035 = vadd.f32 0.0, %v4034
    %4036 = vmatmul.f32.gmra.mxu0 %v3509
    %v4037 = vpop.f32.mrf.mxu0
    %v4038 = vadd.f32 0.0, %v4037
    %4039 = vmatmul.f32.gmra.mxu0 %v3511
    %v4040 = vpop.f32.mrf.mxu0
    %v4041 = vadd.f32 0.0, %v4040
    %4042 = vmatmul.f32.gmra.mxu0 %v3513
    %v4043 = vpop.f32.mrf.mxu0
    %v4044 = vadd.f32 0.0, %v4043
    %4045 = vmatmul.f32.gmra.mxu0 %v3515
    %v4046 = vpop.f32.mrf.mxu0
    %v4047 = vadd.f32 0.0, %v4046
    %4048 = vdwg.mxu0
    %4049 = vmatpush.msra.mxu0 %v3679
    %4050 = vmatpush.msra.mxu0 %v3674
    %4051 = vmatpush.msra.mxu0 %v3669
    %4052 = vmatpush.msra.mxu0 %v3664
    %4053 = vmatpush.msra.mxu0 %v3659
    %4054 = vmatpush.msra.mxu0 %v3654
    %4055 = vmatpush.msra.mxu0 %v3649
    %4056 = vmatpush.msra.mxu0 %v3644
    %4057 = vmatpush.msra.mxu0 %v3639
    %4058 = vmatpush.msra.mxu0 %v3634
    %4059 = vmatpush.msra.mxu0 %v3629
    %4060 = vmatpush.msra.mxu0 %v3624
    %4061 = vmatpush.msra.mxu0 %v3619
    %4062 = vmatpush.msra.mxu0 %v3614
    %4063 = vmatpush.msra.mxu0 %v3609
    %4064 = vmatpush.msra.mxu0 %v3604
    %4065 = vmatmul.f32.gmra.mxu0 %v3502
    %v4066 = vpop.f32.mrf.mxu0
    %v4067 = vadd.f32 %v4026, %v4066
    %4068 = vmatmul.f32.gmra.mxu0 %v3504
    %v4069 = vpop.f32.mrf.mxu0
    %v4070 = vadd.f32 %v4029, %v4069
    %4071 = vmatmul.f32.gmra.mxu0 %v3506
    %v4072 = vpop.f32.mrf.mxu0
    %v4073 = vadd.f32 %v4032, %v4072
    %4074 = vmatmul.f32.gmra.mxu0 %v3508
    %v4075 = vpop.f32.mrf.mxu0
    %v4076 = vadd.f32 %v4035, %v4075
    %4077 = vmatmul.f32.gmra.mxu0 %v3510
    %v4078 = vpop.f32.mrf.mxu0
    %v4079 = vadd.f32 %v4038, %v4078
    %4080 = vmatmul.f32.gmra.mxu0 %v3512
    %v4081 = vpop.f32.mrf.mxu0
    %v4082 = vadd.f32 %v4041, %v4081
    %4083 = vmatmul.f32.gmra.mxu0 %v3514
    %v4084 = vpop.f32.mrf.mxu0
    %v4085 = vadd.f32 %v4044, %v4084
    %4086 = vmatmul.f32.gmra.mxu0 %v3516
    %v4087 = vpop.f32.mrf.mxu0
    %v4088 = vadd.f32 %v4047, %v4087
    %4089 = vdwg.mxu0
    %4090 = vst [vmem:[#allocation2] sm:$0xff] %v3739
    %4091 = vst [vmem:[#allocation2 + $0x10] sm:$0xff] %v3742
    %4092 = vst [vmem:[#allocation2 + $0x20] sm:$0xff] %v3745
    %4093 = vst [vmem:[#allocation2 + $0x30] sm:$0xff] %v3748
    %4094 = vst [vmem:[#allocation2 + $0x40] sm:$0xff] %v3751
    %4095 = vst [vmem:[#allocation2 + $0x50] sm:$0xff] %v3754
    %4096 = vst [vmem:[#allocation2 + $0x60] sm:$0xff] %v3757
    %4097 = vst [vmem:[#allocation2 + $0x70] sm:$0xff] %v3760
    %4098 = vst [vmem:[#allocation2 + $0x80] sm:$0xff] %v3821
    %4099 = vst [vmem:[#allocation2 + $0x90] sm:$0xff] %v3824
    %4100 = vst [vmem:[#allocation2 + $0xa0] sm:$0xff] %v3827
    %4101 = vst [vmem:[#allocation2 + $0xb0] sm:$0xff] %v3830
    %4102 = vst [vmem:[#allocation2 + $0xc0] sm:$0xff] %v3833
    %4103 = vst [vmem:[#allocation2 + $0xd0] sm:$0xff] %v3836
    %4104 = vst [vmem:[#allocation2 + $0xe0] sm:$0xff] %v3839
    %4105 = vst [vmem:[#allocation2 + $0xf0] sm:$0xff] %v3842
    %4106 = vst [vmem:[#allocation2 + $0x100] sm:$0xff] %v3903
    %4107 = vst [vmem:[#allocation2 + $0x110] sm:$0xff] %v3906
    %4108 = vst [vmem:[#allocation2 + $0x120] sm:$0xff] %v3909
    %4109 = vst [vmem:[#allocation2 + $0x130] sm:$0xff] %v3912
    %4110 = vst [vmem:[#allocation2 + $0x140] sm:$0xff] %v3915
    %4111 = vst [vmem:[#allocation2 + $0x150] sm:$0xff] %v3918
    %4112 = vst [vmem:[#allocation2 + $0x160] sm:$0xff] %v3921
    %4113 = vst [vmem:[#allocation2 + $0x170] sm:$0xff] %v3924
    %4114 = vst [vmem:[#allocation2 + $0x180] sm:$0xff] %v3985
    %4115 = vst [vmem:[#allocation2 + $0x190] sm:$0xff] %v3988
    %4116 = vst [vmem:[#allocation2 + $0x1a0] sm:$0xff] %v3991
    %4117 = vst [vmem:[#allocation2 + $0x1b0] sm:$0xff] %v3994
    %4118 = vst [vmem:[#allocation2 + $0x1c0] sm:$0xff] %v3997
    %4119 = vst [vmem:[#allocation2 + $0x1d0] sm:$0xff] %v4000
    %4120 = vst [vmem:[#allocation2 + $0x1e0] sm:$0xff] %v4003
    %4121 = vst [vmem:[#allocation2 + $0x1f0] sm:$0xff] %v4006
    %4122 = vst [vmem:[#allocation2 + $0x200] sm:$0xff] %v4067
    %4123 = vst [vmem:[#allocation2 + $0x210] sm:$0xff] %v4070
    %4124 = vst [vmem:[#allocation2 + $0x220] sm:$0xff] %v4073
    %4125 = vst [vmem:[#allocation2 + $0x230] sm:$0xff] %v4076
    %4126 = vst [vmem:[#allocation2 + $0x240] sm:$0xff] %v4079
    %4127 = vst [vmem:[#allocation2 + $0x250] sm:$0xff] %v4082
    %4128 = vst [vmem:[#allocation2 + $0x260] sm:$0xff] %v4085
    %4129 = vst [vmem:[#allocation2 + $0x270] sm:$0xff] %v4088
    %v4130 = vld [vmem:[#allocation17] sm:$0xff]
    %v4131 = vld [vmem:[#allocation17 + $0x8] sm:$0xf]
    %v4132 = vld [vmem:[#allocation17 + $0xc] sm:$0xff]
    %v4133 = vld [vmem:[#allocation17 + $0x14] sm:$0xf]
    %v4134 = vld [vmem:[#allocation17 + $0x18] sm:$0xff]
    %v4135 = vld [vmem:[#allocation17 + $0x20] sm:$0xf]
    %v4136 = vld [vmem:[#allocation17 + $0x24] sm:$0xff]
    %v4137 = vld [vmem:[#allocation17 + $0x2c] sm:$0xf]
    %v4138 = vld [vmem:[#allocation17 + $0x30] sm:$0xff]
    %v4139 = vld [vmem:[#allocation17 + $0x38] sm:$0xf]
    %v4140 = vld [vmem:[#allocation17 + $0x3c] sm:$0xff]
    %v4141 = vld [vmem:[#allocation17 + $0x44] sm:$0xf]
    %v4142 = vld [vmem:[#allocation17 + $0x48] sm:$0xff]
    %v4143 = vld [vmem:[#allocation17 + $0x50] sm:$0xf]
    %v4144 = vunpack.c.l.bf16 %v4130
    %v4145 = vunpack.c.h.bf16 %v4130
    %v4146 = vunpack.c.l.bf16 %v4131
    %v4147 = vunpack.c.l.bf16 %v4132
    %v4148 = vunpack.c.h.bf16 %v4132
    %v4149 = vunpack.c.l.bf16 %v4133
    %v4150 = vunpack.c.l.bf16 %v4134
    %v4151 = vunpack.c.h.bf16 %v4134
    %v4152 = vunpack.c.l.bf16 %v4135
    %v4153 = vunpack.c.l.bf16 %v4136
    %v4154 = vunpack.c.h.bf16 %v4136
    %v4155 = vunpack.c.l.bf16 %v4137
    %v4156 = vunpack.c.l.bf16 %v4138
    %v4157 = vunpack.c.h.bf16 %v4138
    %v4158 = vunpack.c.l.bf16 %v4139
    %v4159 = vunpack.c.l.bf16 %v4140
    %v4160 = vunpack.c.h.bf16 %v4140
    %v4161 = vunpack.c.l.bf16 %v4141
    %v4162 = vunpack.c.l.bf16 %v4142
    %v4163 = vunpack.c.h.bf16 %v4142
    %v4164 = vunpack.c.l.bf16 %v4143
    %v4165 = vld [vmem:[#allocation2] sm:$0xff]
    %v4166 = vld [vmem:[#allocation2 + $0x10] sm:$0xff]
    %v4167 = vld [vmem:[#allocation2 + $0x20] sm:$0xff]
    %v4168 = vld [vmem:[#allocation2 + $0x30] sm:$0xff]
    %v4169 = vld [vmem:[#allocation2 + $0x40] sm:$0xff]
    %v4170 = vld [vmem:[#allocation2 + $0x50] sm:$0xff]
    %v4171 = vld [vmem:[#allocation2 + $0x60] sm:$0xff]
    %v4172 = vld [vmem:[#allocation2 + $0x70] sm:$0xff]
    %v4173 = vld [vmem:[#allocation2 + $0x80] sm:$0xff]
    %v4174 = vld [vmem:[#allocation2 + $0x90] sm:$0xff]
    %v4175 = vld [vmem:[#allocation2 + $0xa0] sm:$0xff]
    %v4176 = vld [vmem:[#allocation2 + $0xb0] sm:$0xff]
    %v4177 = vld [vmem:[#allocation2 + $0xc0] sm:$0xff]
    %v4178 = vld [vmem:[#allocation2 + $0xd0] sm:$0xff]
    %v4179 = vld [vmem:[#allocation2 + $0xe0] sm:$0xff]
    %v4180 = vld [vmem:[#allocation2 + $0xf0] sm:$0xff]
    %v4181 = vld [vmem:[#allocation2 + $0x100] sm:$0xff]
    %v4182 = vld [vmem:[#allocation2 + $0x110] sm:$0xff]
    %v4183 = vld [vmem:[#allocation2 + $0x120] sm:$0xff]
    %v4184 = vld [vmem:[#allocation2 + $0x130] sm:$0xff]
    %v4185 = vld [vmem:[#allocation2 + $0x140] sm:$0xff]
    %v4186 = vld [vmem:[#allocation2 + $0x150] sm:$0xff]
    %v4187 = vld [vmem:[#allocation2 + $0x160] sm:$0xff]
    %v4188 = vld [vmem:[#allocation2 + $0x170] sm:$0xff]
    %v4189 = vld [vmem:[#allocation2 + $0x180] sm:$0xff]
    %v4190 = vld [vmem:[#allocation2 + $0x190] sm:$0xff]
    %v4191 = vld [vmem:[#allocation2 + $0x1a0] sm:$0xff]
    %v4192 = vld [vmem:[#allocation2 + $0x1b0] sm:$0xff]
    %v4193 = vld [vmem:[#allocation2 + $0x1c0] sm:$0xff]
    %v4194 = vld [vmem:[#allocation2 + $0x1d0] sm:$0xff]
    %v4195 = vld [vmem:[#allocation2 + $0x1e0] sm:$0xff]
    %v4196 = vld [vmem:[#allocation2 + $0x1f0] sm:$0xff]
    %v4197 = vld [vmem:[#allocation2 + $0x200] sm:$0xff]
    %v4198 = vld [vmem:[#allocation2 + $0x210] sm:$0xff]
    %v4199 = vld [vmem:[#allocation2 + $0x220] sm:$0xff]
    %v4200 = vld [vmem:[#allocation2 + $0x230] sm:$0xff]
    %v4201 = vld [vmem:[#allocation2 + $0x240] sm:$0xff]
    %v4202 = vld [vmem:[#allocation2 + $0x250] sm:$0xff]
    %v4203 = vld [vmem:[#allocation2 + $0x260] sm:$0xff]
    %v4204 = vld [vmem:[#allocation2 + $0x270] sm:$0xff]
    %v4206 = vsel %vm2126, %v4146, 0
    %v4209 = vsel %vm2126, %v4149, 0
    %v4212 = vsel %vm2126, %v4152, 0
    %v4215 = vsel %vm2126, %v4155, 0
    %v4218 = vsel %vm2126, %v4158, 0
    %v4221 = vsel %vm2126, %v4161, 0
    %v4224 = vsel %vm2126, %v4164, 0
    %4226 = vmatpush.msra.mxu0 %v4180
    %4227 = vmatpush.msra.mxu0 %v4179
    %4228 = vmatpush.msra.mxu0 %v4178
    %4229 = vmatpush.msra.mxu0 %v4177
    %4230 = vmatpush.msra.mxu0 %v4176
    %4231 = vmatpush.msra.mxu0 %v4175
    %4232 = vmatpush.msra.mxu0 %v4174
    %4233 = vmatpush.msra.mxu0 %v4173
    %4234 = vmatpush.msra.mxu0 %v4172
    %4235 = vmatpush.msra.mxu0 %v4171
    %4236 = vmatpush.msra.mxu0 %v4170
    %4237 = vmatpush.msra.mxu0 %v4169
    %4238 = vmatpush.msra.mxu0 %v4168
    %4239 = vmatpush.msra.mxu0 %v4167
    %4240 = vmatpush.msra.mxu0 %v4166
    %4241 = vmatpush.msra.mxu0 %v4165
    %4242 = vmatmul.f32.gmra.mxu0 %v4144
    %v4243 = vpop.f32.mrf.mxu0
    %v4244 = vadd.f32 0.0, %v4243
    %4245 = vmatmul.f32.gmra.mxu0 %v4147
    %v4246 = vpop.f32.mrf.mxu0
    %v4247 = vadd.f32 0.0, %v4246
    %4248 = vmatmul.f32.gmra.mxu0 %v4150
    %v4249 = vpop.f32.mrf.mxu0
    %v4250 = vadd.f32 0.0, %v4249
    %4251 = vmatmul.f32.gmra.mxu0 %v4153
    %v4252 = vpop.f32.mrf.mxu0
    %v4253 = vadd.f32 0.0, %v4252
    %4254 = vmatmul.f32.gmra.mxu0 %v4156
    %v4255 = vpop.f32.mrf.mxu0
    %v4256 = vadd.f32 0.0, %v4255
    %4257 = vmatmul.f32.gmra.mxu0 %v4159
    %v4258 = vpop.f32.mrf.mxu0
    %v4259 = vadd.f32 0.0, %v4258
    %4260 = vmatmul.f32.gmra.mxu0 %v4162
    %v4261 = vpop.f32.mrf.mxu0
    %v4262 = vadd.f32 0.0, %v4261
    %4263 = vdwg.mxu0
    %4264 = vmatpush.msra.mxu0 %v4196
    %4265 = vmatpush.msra.mxu0 %v4195
    %4266 = vmatpush.msra.mxu0 %v4194
    %4267 = vmatpush.msra.mxu0 %v4193
    %4268 = vmatpush.msra.mxu0 %v4192
    %4269 = vmatpush.msra.mxu0 %v4191
    %4270 = vmatpush.msra.mxu0 %v4190
    %4271 = vmatpush.msra.mxu0 %v4189
    %4272 = vmatpush.msra.mxu0 %v4188
    %4273 = vmatpush.msra.mxu0 %v4187
    %4274 = vmatpush.msra.mxu0 %v4186
    %4275 = vmatpush.msra.mxu0 %v4185
    %4276 = vmatpush.msra.mxu0 %v4184
    %4277 = vmatpush.msra.mxu0 %v4183
    %4278 = vmatpush.msra.mxu0 %v4182
    %4279 = vmatpush.msra.mxu0 %v4181
    %4280 = vmatmul.f32.gmra.mxu0 %v4145
    %v4281 = vpop.f32.mrf.mxu0
    %v4282 = vadd.f32 %v4244, %v4281
    %4283 = vmatmul.f32.gmra.mxu0 %v4148
    %v4284 = vpop.f32.mrf.mxu0
    %v4285 = vadd.f32 %v4247, %v4284
    %4286 = vmatmul.f32.gmra.mxu0 %v4151
    %v4287 = vpop.f32.mrf.mxu0
    %v4288 = vadd.f32 %v4250, %v4287
    %4289 = vmatmul.f32.gmra.mxu0 %v4154
    %v4290 = vpop.f32.mrf.mxu0
    %v4291 = vadd.f32 %v4253, %v4290
    %4292 = vmatmul.f32.gmra.mxu0 %v4157
    %v4293 = vpop.f32.mrf.mxu0
    %v4294 = vadd.f32 %v4256, %v4293
    %4295 = vmatmul.f32.gmra.mxu0 %v4160
    %v4296 = vpop.f32.mrf.mxu0
    %v4297 = vadd.f32 %v4259, %v4296
    %4298 = vmatmul.f32.gmra.mxu0 %v4163
    %v4299 = vpop.f32.mrf.mxu0
    %v4300 = vadd.f32 %v4262, %v4299
    %4301 = vdwg.mxu0
    %4302 = vmatpush.msra.mxu0 0.0
    %4303 = vmatpush.msra.mxu0 0.0
    %4304 = vmatpush.msra.mxu0 0.0
    %4305 = vmatpush.msra.mxu0 0.0
    %4306 = vmatpush.msra.mxu0 0.0
    %4307 = vmatpush.msra.mxu0 0.0
    %4308 = vmatpush.msra.mxu0 0.0
    %4309 = vmatpush.msra.mxu0 0.0
    %4310 = vmatpush.msra.mxu0 %v4204
    %4311 = vmatpush.msra.mxu0 %v4203
    %4312 = vmatpush.msra.mxu0 %v4202
    %4313 = vmatpush.msra.mxu0 %v4201
    %4314 = vmatpush.msra.mxu0 %v4200
    %4315 = vmatpush.msra.mxu0 %v4199
    %4316 = vmatpush.msra.mxu0 %v4198
    %4317 = vmatpush.msra.mxu0 %v4197
    %4318 = vmatmul.f32.gmra.mxu0 %v4206
    %v4319 = vpop.f32.mrf.mxu0
    %v4320 = vadd.f32 %v4282, %v4319
    %4321 = vmatmul.f32.gmra.mxu0 %v4209
    %v4322 = vpop.f32.mrf.mxu0
    %v4323 = vadd.f32 %v4285, %v4322
    %4324 = vmatmul.f32.gmra.mxu0 %v4212
    %v4325 = vpop.f32.mrf.mxu0
    %v4326 = vadd.f32 %v4288, %v4325
    %4327 = vmatmul.f32.gmra.mxu0 %v4215
    %v4328 = vpop.f32.mrf.mxu0
    %v4329 = vadd.f32 %v4291, %v4328
    %4330 = vmatmul.f32.gmra.mxu0 %v4218
    %v4331 = vpop.f32.mrf.mxu0
    %v4332 = vadd.f32 %v4294, %v4331
    %4333 = vmatmul.f32.gmra.mxu0 %v4221
    %v4334 = vpop.f32.mrf.mxu0
    %v4335 = vadd.f32 %v4297, %v4334
    %4336 = vmatmul.f32.gmra.mxu0 %v4224
    %v4337 = vpop.f32.mrf.mxu0
    %v4338 = vadd.f32 %v4300, %v4337
    %4339 = vdwg.mxu0
    %v4340 = vtanh.pop %v4320
    %v4341 = vtanh.pop %v4323
    %v4342 = vtanh.pop %v4326
    %v4343 = vtanh.pop %v4329
    %v4344 = vtanh.pop %v4332
    %v4345 = vtanh.pop %v4335
    %v4346 = vtanh.pop %v4338
    %4347 = vst [vmem:[#allocation19] sm:$0xff] %v4340
    %4348 = vst [vmem:[#allocation19 + $0x8] sm:$0xff] %v4341
    %4349 = vst [vmem:[#allocation19 + $0x10] sm:$0xff] %v4342
    %4350 = vst [vmem:[#allocation19 + $0x18] sm:$0xff] %v4343
    %4351 = vst [vmem:[#allocation19 + $0x20] sm:$0xff] %v4344
    %4352 = vst [vmem:[#allocation19 + $0x28] sm:$0xff] %v4345
    %4353 = vst [vmem:[#allocation19 + $0x30] sm:$0xff] %v4346
    // Predicated region
    $region86: #{generator_forward.1} parent=1 // pred_check
      _
    $region87: #{generator_forward.1} parent=1 // pred_check_branch
      %4355 = sbr.rel (0) target = $region89
    $region88: #{generator_forward.1} parent=1 // pred_region
      %4357 = vsyncadd [#allocation10], 0
      %s4358 = sshll.u32 [#allocation19], 4
      %s4359 = int_to_ptr.vmem [resolvable:$true] %s4358
      %s4360 = sshll.u32 %s15, 4
      %s4361 = int_to_ptr.hbm [resolvable:$true] %s4360
      %4366 = dma.vmem_to_hbm [thread:$0]  %s4359, 896, %s4361, [#allocation10], 128, 128, 8
    $region89: #{generator_forward.1} parent=1 // pred_fallthru
      _
    // Predicated region
    $region90: #{generator_forward.1} parent=1 // pred_check
      _
    $region91: #{generator_forward.1} parent=1 // pred_check_branch
      %4368 = sbr.rel (0) target = $region93
    $region92: #{generator_forward.1} parent=1 // pred_region
      %4370 = dma.done [#allocation10], 896
    $region93: #{generator_forward.1} parent=1 // pred_fallthru
      _
    %4371 = vsyncpa [#allocation9], 1
    %4372 = vsyncpa [#allocation12], 1
    %4373 = vsyncpa [#allocation15], 1
    %4374 = vsyncpa [#allocation18], 1
    %4375 = vsyncpa [#allocation10], 1
  %4376 = vsyncmov [#allocation7]
  %s4377 = vpop.sfrf %4376
  %p4378 = scmp.eq.s32.totalorder %s4377, 0
  %p4379 = pneg %p4378
  %4381 = shalt.err (%p4379)
  %s4382 = scalar_lea.sflag [#allocation7], 1
  %4383 = vsyncmov %s4382
  %s4384 = vpop.sfrf %4383
  %p4385 = scmp.eq.s32.totalorder %s4384, 0
  %p4386 = pneg %p4385
  %4388 = shalt.err (%p4386)
  %s4389 = scalar_lea.sflag [#allocation7], 2
  %4390 = vsyncmov %s4389
  %s4391 = vpop.sfrf %4390
  %p4392 = scmp.eq.s32.totalorder %s4391, 0
  %p4393 = pneg %p4392
  %4395 = shalt.err (%p4393)
  %s4396 = scalar_lea.sflag [#allocation7], 3
  %4397 = vsyncmov %s4396
  %s4398 = vpop.sfrf %4397
  %p4399 = scmp.eq.s32.totalorder %s4398, 0
  %p4400 = pneg %p4399
  %4402 = shalt.err (%p4400)

</llo_original>
